<compile_context>
chip_gen: v6e
topology: v6e:2x2x1
jax: 0.10.0
libtpu: 0.0.40
codegen_flags: <defaults>
</compile_context>

<pallas_src>
import numpy as np

import jax
import jax.numpy as jnp
from jax.experimental import pallas as pl
from jax.experimental.pallas import tpu as pltpu

BN_EPS = 1e-5


# ------------------------------ Pallas kernel -------------------------------

def _make_net_kernel(block_meta, n_params):
    """One kernel for the whole network over a (tm, K) row tile of im2col patches.

    block_meta: tuple of ("identity",) or ("skip", cmid) describing each ConvResBlock.
    Param ref order (all 2D, bf16 weights / f32 biases & affines):
        conv_in:  W0f, b0f
        per identity block: W1f, b1f, W2f, b2f, s_in, t_in
        per conv-skip block: Wcat(=[W1f|Wsf]), bcat, W2f, b2f
        conv_out: Wo_pad, bo_pad      (lane-padded to a multiple of 128)
    """
    def kernel(*refs):
        x_ref = refs[0]
        o_ref = refs[1 + n_params]
        it = iter(refs[1:1 + n_params])

        def mm(a, w_ref):
            return jnp.dot(a.astype(jnp.bfloat16), w_ref[...],
                           preferred_element_type=jnp.float32)

        # masked conv_in (im2col matmul) + folded norm_in + ReLU
        w0 = next(it); b0 = next(it)
        h = jnp.maximum(mm(x_ref[...], w0) + b0[...], 0.0)

        # residual blocks (BN folded into weights)
        for meta in block_meta:
            if meta[0] == "skip":
                cmid = meta[1]
                wcat = next(it); bcat = next(it)
                w2 = next(it); b2 = next(it)
                z = mm(h, wcat) + bcat[...]          # one wide matmul: [conv_in | conv_skip]
                hh = jnp.maximum(z[:, :cmid], 0.0)
                sk = z[:, cmid:]
                h = jnp.maximum(mm(hh, w2) + b2[...] + sk, 0.0)
            else:
                w1 = next(it); b1 = next(it)
                w2 = next(it); b2 = next(it)
                s_in = next(it); t_in = next(it)
                hh = jnp.maximum(mm(h, w1) + b1[...], 0.0)
                sk = h * s_in[...] + t_in[...]       # identity skip on normalized input
                h = jnp.maximum(mm(hh, w2) + b2[...] + sk, 0.0)

        # final 1x1 conv_out, lane-padded -> dense 128-lane stores
        wo = next(it); bo = next(it)
        o_ref[...] = (mm(h, wo) + bo[...]).astype(o_ref.dtype)

    return kernel


# ----------------------------- host-side helpers -----------------------------

def bn_scale_shift(bn):
    s = bn["gamma"] / jnp.sqrt(bn["var"] + BN_EPS)
    t = bn["beta"] - bn["mean"] * s
    return s, t


def im2col_taps(x_nhwc, k, pad, taps):
    """im2col restricted to the unmasked taps: (M, T*Cin)."""
    N, H, W, C = x_nhwc.shape
    xp = jnp.pad(x_nhwc, ((0, 0), (pad, pad), (pad, pad), (0, 0)))
    Ho = H + 2 * pad - k + 1
    Wo = W + 2 * pad - k + 1
    cols = jnp.stack([xp[:, i:i + Ho, j:j + Wo, :] for (i, j) in taps], axis=3)
    return cols.reshape(N * Ho * Wo, len(taps) * C), (N, Ho, Wo)


def _fold_network(params, mask_np, taps, cin, n_out_pad):
    """Fold eval-mode BN into the matmul weights; return flat param list + block meta."""
    flat = []
    meta = []

    # masked conv_in + norm_in
    w0, b0 = params["conv_in"]
    w_taps = jnp.stack([w0[:, :, i, j] * float(mask_np[i, j]) for (i, j) in taps], axis=0)
    w_col = jnp.transpose(w_taps, (0, 2, 1)).reshape(len(taps) * cin, -1)   # (T*Cin, C0)
    s0, t0 = bn_scale_shift(params["norm_in"])
    flat += [(w_col * s0[None, :]).astype(jnp.bfloat16),
             (b0 * s0 + t0).reshape(1, -1)]

    for blk in params["blocks"]:
        s_in, t_in = bn_scale_shift(blk["norm_in"])
        s_out, t_out = bn_scale_shift(blk["norm_out"])
        w1, b1 = blk["conv_in"]
        W1 = w1[:, :, 0, 0].T                      # (Cin_b, Cmid)
        w2, b2 = blk["conv_out"]
        W2 = w2[:, :, 0, 0].T                      # (Cmid, Cout_b)
        W1f = s_in[:, None] * W1
        b1f = t_in @ W1 + b1
        W2f = s_out[:, None] * W2
        b2f = t_out @ W2 + b2

        if blk["conv_skip"] is None:
            meta.append(("identity",))
            flat += [W1f.astype(jnp.bfloat16), b1f.reshape(1, -1),
                     W2f.astype(jnp.bfloat16), b2f.reshape(1, -1),
                     s_in.reshape(1, -1), t_in.reshape(1, -1)]
        else:
            ws, bs = blk["conv_skip"]
            Ws = ws[:, :, 0, 0].T
            Wsf = s_in[:, None] * Ws
            bsf = t_in @ Ws + bs
            cmid = W1.shape[1]
            meta.append(("skip", cmid))
            flat += [jnp.concatenate([W1f, Wsf], axis=1).astype(jnp.bfloat16),
                     jnp.concatenate([b1f, bsf], axis=0).reshape(1, -1),
                     W2f.astype(jnp.bfloat16), b2f.reshape(1, -1)]

    # final conv_out, padded to n_out_pad lanes
    wo, bo = params["conv_out"]
    Wo = wo[:, :, 0, 0].T                          # (C_last, Cout)
    c_last, cout = Wo.shape
    Wo_pad = jnp.zeros((c_last, n_out_pad), jnp.float32).at[:, :cout].set(Wo)
    bo_pad = jnp.zeros((n_out_pad,), jnp.float32).at[:cout].set(bo)
    flat += [Wo_pad.astype(jnp.bfloat16), bo_pad.reshape(1, -1)]
    return flat, tuple(meta)


def _num_tensorcores():
    """Best-effort TensorCore-per-chip count (v7x/v4/v5p=2, v5e/v6e=1)."""
    try:
        kind = jax.devices()[0].device_kind.lower()
    except Exception:
        return 1
    for s in ("v5 lite", "v5e", "v5litepod", "v6e", "v6 lite"):
        if s in kind:
            return 1
    for s in ("v7", "v4", "v5p", "v5"):
        if s in kind:
            return 2
    return 1


def _pick_tm(M, num_cores, target=1024):
    """Largest multiple-of-8 divisor of M (<= target); on dual-TC chips keep >=2 grid
    steps per core, on single-TC chips let the tile grow toward M."""
    if M % 8 != 0:
        return M                                   # full-array block fallback
    min_grid = 2 * num_cores if num_cores >= 2 else 1
    limit = min(target, M)
    if M >= min_grid * 8:
        limit = min(limit, M // min_grid)
    best = 8
    for d in range(8, limit + 1, 8):
        if M % d == 0:
            best = d
    return best


def _vmem_limit_bytes(tm, k_in, n_out_pad, flat_params):
    tile = 2 * tm * (k_in * 2 + n_out_pad * 4)     # double-buffered bf16-in / f32-out tiles
    wts = sum(int(np.prod(p.shape)) * p.dtype.itemsize for p in flat_params)
    need = int(1.5 * (tile + wts)) + (8 << 20)     # headroom for compiler scratch
    return int(min(max(need, 32 << 20), 64 << 20))


def _run_fused_net(patches_bf16, flat_params, block_meta, n_out_pad, tm, vmem_limit):
    M, K = patches_bf16.shape
    kernel = _make_net_kernel(block_meta, len(flat_params))
    in_specs = [pl.BlockSpec((tm, K), lambda i: (i, 0))]
    in_specs += [pl.BlockSpec(p.shape, lambda i: (0, 0)) for p in flat_params]
    return pl.pallas_call(
        kernel,
        out_shape=jax.ShapeDtypeStruct((M, n_out_pad), jnp.float32),
        grid=(M // tm,),
        in_specs=in_specs,
        out_specs=pl.BlockSpec((tm, n_out_pad), lambda i: (i, 0)),
        compiler_params=pltpu.CompilerParams(
            dimension_semantics=("parallel",),
            vmem_limit_bytes=vmem_limit),
    )(patches_bf16, *flat_params)


# ------------------------------ forward wrapper ------------------------------

def patch_mlp_forward(x_nchw, params, patch_size, padding, input_mask, tm_target=1024):
    N, Cin, H, W = x_nchw.shape
    x = jnp.transpose(x_nchw, (0, 2, 3, 1))        # NHWC

    if input_mask is None:
        mask_np = np.ones((patch_size, patch_size), np.float32)
    else:
        mask_np = np.asarray(input_mask)
    taps = [(i, j) for i in range(patch_size) for j in range(patch_size)
            if float(mask_np[i, j]) != 0.0]

    # TODO(synk): fold the masked im2col gather into the kernel (halo'd row tiles);
    # for now it is materialized host-side in bf16 to halve its HBM footprint.
    patches, (Nb, Ho, Wo) = im2col_taps(x, patch_size, padding, taps)
    patches = patches.astype(jnp.bfloat16)
    M, K = patches.shape

    cout = params["conv_out"][0].shape[0]
    n_out_pad = ((cout + 127) // 128) * 128        # lane-dense output stores

    flat, meta = _fold_network(params, mask_np, taps, Cin, n_out_pad)

    tm = _pick_tm(M, _num_tensorcores(), tm_target)
    vmem_limit = _vmem_limit_bytes(tm, K, n_out_pad, flat)

    out = _run_fused_net(patches, flat, meta, n_out_pad, tm, vmem_limit)
    out = out[:, :cout].reshape(N, Ho, Wo, cout)
    return jnp.transpose(out, (0, 3, 1, 2))        # back to NCHW


# ---------------------- deterministic parameter init ------------------------

def init_conv(key, cout, cin, k):
    wk, bk = jax.random.split(key)
    bound = 1.0 / (cin * k * k) ** 0.5
    w = jax.random.uniform(wk, (cout, cin, k, k), jnp.float32, -bound, bound)
    b = jax.random.uniform(bk, (cout,), jnp.float32, -bound, bound)
    return w, b


def init_bn(key, c):
    k1, k2, k3, k4 = jax.random.split(key, 4)
    return {
        "gamma": 1.0 + 0.1 * jax.random.normal(k1, (c,), jnp.float32),
        "beta": 0.1 * jax.random.normal(k2, (c,), jnp.float32),
        "mean": 0.1 * jax.random.normal(k3, (c,), jnp.float32),
        "var": 0.5 + jnp.abs(jax.random.normal(k4, (c,), jnp.float32)) * 0.5,
    }


def init_params(key, in_channels, out_channels, patch_size, layer_units):
    keys = iter(jax.random.split(key, 64))
    params = {}
    in_units = layer_units[0]
    params["conv_in"] = init_conv(next(keys), in_units, in_channels, patch_size)
    params["norm_in"] = init_bn(next(keys), in_units)
    blocks = []
    for units in layer_units[1:]:
        blocks.append({
            "norm_in": init_bn(next(keys), in_units),
            "conv_in": init_conv(next(keys), units, in_units, 1),
            "norm_out": init_bn(next(keys), units),
            "conv_out": init_conv(next(keys), units, units, 1),
            "conv_skip": None if units == in_units else init_conv(next(keys), units, in_units, 1),
        })
        in_units = units
    params["blocks"] = blocks
    params["conv_out"] = init_conv(next(keys), out_channels, in_units, 1)
    return params


# --------------------------- pure-JAX reference ------------------------------

def ref_forward(x_nchw, params, patch_size, padding, input_mask):
    def conv2d(x, w, b, pad):
        y = jax.lax.conv_general_dilated(
            x, w, (1, 1), [(pad, pad), (pad, pad)],
            dimension_numbers=("NCHW", "OIHW", "NCHW"))
        return y + b[None, :, None, None]

    def bn(x, p):
        s = p["gamma"] / jnp.sqrt(p["var"] + BN_EPS)
        t = p["beta"] - p["mean"] * s
        return x * s[None, :, None, None] + t[None, :, None, None]

    relu = lambda v: jnp.maximum(v, 0.0)
    w0, b0 = params["conv_in"]
    h = relu(bn(conv2d(x_nchw, w0 * input_mask[None, None], b0, padding), params["norm_in"]))
    for blk in params["blocks"]:
        xn = bn(h, blk["norm_in"])
        hh = relu(conv2d(xn, *blk["conv_in"], 0))
        hh = bn(hh, blk["norm_out"])
        hh = conv2d(hh, *blk["conv_out"], 0)
        skip = xn if blk["conv_skip"] is None else conv2d(xn, *blk["conv_skip"], 0)
        h = relu(hh + skip)
    wo, bo = params["conv_out"]
    return conv2d(h, wo, bo, 0)


# ----------------------------------- main ------------------------------------

if __name__ == "__main__":
    in_channels, out_channels = 4, 3
    patch_size, padding = 3, 1
    layer_units = [32, 32, 48]   # block1: 32->32 (identity skip), block2: 32->48 (conv skip)
    batch, H, W = 2, 16, 16

    key = jax.random.PRNGKey(0)
    kx, kp = jax.random.split(key)
    x = jax.random.normal(kx, (batch, in_channels, H, W), jnp.float32)
    input_mask = jnp.array([[1, 0, 1], [0, 1, 0], [1, 0, 1]], jnp.float32)
    params = init_params(kp, in_channels, out_channels, patch_size, layer_units)

    out = jax.block_until_ready(patch_mlp_forward(x, params, patch_size, padding, input_mask))

    ref = jax.block_until_ready(ref_forward(x, params, patch_size, padding, input_mask))
    assert out.shape == ref.shape, (out.shape, ref.shape)
    # bf16 matmul chain (f32 accumulation) vs f32 reference -> relaxed tolerance
    assert jnp.allclose(out, ref, rtol=5e-2, atol=5e-2), float(jnp.max(jnp.abs(out - ref)))

    print("KERNEL_OK")
</pallas_src>

<mosaic_0001>
module attributes {stable_mosaic.version = 11 : i64} {
  func.func @kernel(%arg0: i32, %arg1: memref<512x20xbf16, #tpu.memory_space<vmem>>, %arg2: memref<20x32xbf16, #tpu.memory_space<vmem>>, %arg3: memref<1x32xf32, #tpu.memory_space<vmem>>, %arg4: memref<32x32xbf16, #tpu.memory_space<vmem>>, %arg5: memref<1x32xf32, #tpu.memory_space<vmem>>, %arg6: memref<32x32xbf16, #tpu.memory_space<vmem>>, %arg7: memref<1x32xf32, #tpu.memory_space<vmem>>, %arg8: memref<1x32xf32, #tpu.memory_space<vmem>>, %arg9: memref<1x32xf32, #tpu.memory_space<vmem>>, %arg10: memref<32x96xbf16, #tpu.memory_space<vmem>>, %arg11: memref<1x96xf32, #tpu.memory_space<vmem>>, %arg12: memref<48x48xbf16, #tpu.memory_space<vmem>>, %arg13: memref<1x48xf32, #tpu.memory_space<vmem>>, %arg14: memref<48x128xbf16, #tpu.memory_space<vmem>>, %arg15: memref<1x128xf32, #tpu.memory_space<vmem>>, %arg16: memref<512x128xf32, #tpu.memory_space<vmem>>) attributes {dimension_semantics = [#tpu.dimension_semantics<parallel>], iteration_bounds = array<i64: 1>, scalar_prefetch = 0 : i64, scratch_operands = 0 : i64, tpu.core_type = #tpu.core_type<tc>, window_params = [{transform_indices = @transform_0, window_bounds = array<i64: 512, 20>}, {pipeline_mode = #tpu.pipeline_mode<synchronous>, transform_indices = @transform_1, window_bounds = array<i64: 20, 32>}, {pipeline_mode = #tpu.pipeline_mode<synchronous>, transform_indices = @transform_2, window_bounds = array<i64: 1, 32>}, {pipeline_mode = #tpu.pipeline_mode<synchronous>, transform_indices = @transform_3, window_bounds = array<i64: 32, 32>}, {pipeline_mode = #tpu.pipeline_mode<synchronous>, transform_indices = @transform_4, window_bounds = array<i64: 1, 32>}, {pipeline_mode = #tpu.pipeline_mode<synchronous>, transform_indices = @transform_5, window_bounds = array<i64: 32, 32>}, {pipeline_mode = #tpu.pipeline_mode<synchronous>, transform_indices = @transform_6, window_bounds = array<i64: 1, 32>}, {pipeline_mode = #tpu.pipeline_mode<synchronous>, transform_indices = @transform_7, window_bounds = array<i64: 1, 32>}, {pipeline_mode = #tpu.pipeline_mode<synchronous>, transform_indices = @transform_8, window_bounds = array<i64: 1, 32>}, {pipeline_mode = #tpu.pipeline_mode<synchronous>, transform_indices = @transform_9, window_bounds = array<i64: 32, 96>}, {pipeline_mode = #tpu.pipeline_mode<synchronous>, transform_indices = @transform_10, window_bounds = array<i64: 1, 96>}, {pipeline_mode = #tpu.pipeline_mode<synchronous>, transform_indices = @transform_11, window_bounds = array<i64: 48, 48>}, {pipeline_mode = #tpu.pipeline_mode<synchronous>, transform_indices = @transform_12, window_bounds = array<i64: 1, 48>}, {pipeline_mode = #tpu.pipeline_mode<synchronous>, transform_indices = @transform_13, window_bounds = array<i64: 48, 128>}, {pipeline_mode = #tpu.pipeline_mode<synchronous>, transform_indices = @transform_14, window_bounds = array<i64: 1, 128>}, {transform_indices = @transform_15, window_bounds = array<i64: 512, 128>}]} {
    %c0 = arith.constant 0 : index
    %c0_0 = arith.constant 0 : index
    %0 = vector.load %arg1[%c0, %c0_0] : memref<512x20xbf16, #tpu.memory_space<vmem>>, vector<512x20xbf16>
    %c0_1 = arith.constant 0 : index
    %c0_2 = arith.constant 0 : index
    %1 = vector.load %arg2[%c0_1, %c0_2] : memref<20x32xbf16, #tpu.memory_space<vmem>>, vector<20x32xbf16>
    %cst = arith.constant dense<0.000000e+00> : vector<512x32xf32>
    %2 = tpu.matmul %0, %1, %cst {dimension_numbers = #tpu.dot_dimension_numbers<[1], [0], [0], [1], [0, 0, 1, 1], [], []>} : vector<512x20xbf16>, vector<20x32xbf16>, vector<512x32xf32> -> vector<512x32xf32>
    %c0_3 = arith.constant 0 : index
    %c0_4 = arith.constant 0 : index
    %3 = vector.load %arg3[%c0_3, %c0_4] : memref<1x32xf32, #tpu.memory_space<vmem>>, vector<1x32xf32>
    %4 = vector.broadcast %3 : vector<1x32xf32> to vector<512x32xf32>
    %5 = arith.addf %2, %4 : vector<512x32xf32>
    %cst_5 = arith.constant 0.000000e+00 : f32
    %6 = vector.broadcast %cst_5 : f32 to vector<512x32xf32>
    %7 = arith.maximumf %5, %6 : vector<512x32xf32>
    %8 = arith.truncf %7 : vector<512x32xf32> to vector<512x32xbf16>
    %c0_6 = arith.constant 0 : index
    %c0_7 = arith.constant 0 : index
    %9 = vector.load %arg4[%c0_6, %c0_7] : memref<32x32xbf16, #tpu.memory_space<vmem>>, vector<32x32xbf16>
    %cst_8 = arith.constant dense<0.000000e+00> : vector<512x32xf32>
    %10 = tpu.matmul %8, %9, %cst_8 {dimension_numbers = #tpu.dot_dimension_numbers<[1], [0], [0], [1], [0, 0, 1, 1], [], []>} : vector<512x32xbf16>, vector<32x32xbf16>, vector<512x32xf32> -> vector<512x32xf32>
    %c0_9 = arith.constant 0 : index
    %c0_10 = arith.constant 0 : index
    %11 = vector.load %arg5[%c0_9, %c0_10] : memref<1x32xf32, #tpu.memory_space<vmem>>, vector<1x32xf32>
    %12 = vector.broadcast %11 : vector<1x32xf32> to vector<512x32xf32>
    %13 = arith.addf %10, %12 : vector<512x32xf32>
    %cst_11 = arith.constant 0.000000e+00 : f32
    %14 = vector.broadcast %cst_11 : f32 to vector<512x32xf32>
    %15 = arith.maximumf %13, %14 : vector<512x32xf32>
    %c0_12 = arith.constant 0 : index
    %c0_13 = arith.constant 0 : index
    %16 = vector.load %arg8[%c0_12, %c0_13] : memref<1x32xf32, #tpu.memory_space<vmem>>, vector<1x32xf32>
    %17 = vector.broadcast %16 : vector<1x32xf32> to vector<512x32xf32>
    %18 = arith.mulf %7, %17 : vector<512x32xf32>
    %c0_14 = arith.constant 0 : index
    %c0_15 = arith.constant 0 : index
    %19 = vector.load %arg9[%c0_14, %c0_15] : memref<1x32xf32, #tpu.memory_space<vmem>>, vector<1x32xf32>
    %20 = vector.broadcast %19 : vector<1x32xf32> to vector<512x32xf32>
    %21 = arith.addf %18, %20 : vector<512x32xf32>
    %22 = arith.truncf %15 : vector<512x32xf32> to vector<512x32xbf16>
    %c0_16 = arith.constant 0 : index
    %c0_17 = arith.constant 0 : index
    %23 = vector.load %arg6[%c0_16, %c0_17] : memref<32x32xbf16, #tpu.memory_space<vmem>>, vector<32x32xbf16>
    %cst_18 = arith.constant dense<0.000000e+00> : vector<512x32xf32>
    %24 = tpu.matmul %22, %23, %cst_18 {dimension_numbers = #tpu.dot_dimension_numbers<[1], [0], [0], [1], [0, 0, 1, 1], [], []>} : vector<512x32xbf16>, vector<32x32xbf16>, vector<512x32xf32> -> vector<512x32xf32>
    %c0_19 = arith.constant 0 : index
    %c0_20 = arith.constant 0 : index
    %25 = vector.load %arg7[%c0_19, %c0_20] : memref<1x32xf32, #tpu.memory_space<vmem>>, vector<1x32xf32>
    %26 = vector.broadcast %25 : vector<1x32xf32> to vector<512x32xf32>
    %27 = arith.addf %24, %26 : vector<512x32xf32>
    %28 = arith.addf %27, %21 : vector<512x32xf32>
    %cst_21 = arith.constant 0.000000e+00 : f32
    %29 = vector.broadcast %cst_21 : f32 to vector<512x32xf32>
    %30 = arith.maximumf %28, %29 : vector<512x32xf32>
    %31 = arith.truncf %30 : vector<512x32xf32> to vector<512x32xbf16>
    %c0_22 = arith.constant 0 : index
    %c0_23 = arith.constant 0 : index
    %32 = vector.load %arg10[%c0_22, %c0_23] : memref<32x96xbf16, #tpu.memory_space<vmem>>, vector<32x96xbf16>
    %cst_24 = arith.constant dense<0.000000e+00> : vector<512x96xf32>
    %33 = tpu.matmul %31, %32, %cst_24 {dimension_numbers = #tpu.dot_dimension_numbers<[1], [0], [0], [1], [0, 0, 1, 1], [], []>} : vector<512x32xbf16>, vector<32x96xbf16>, vector<512x96xf32> -> vector<512x96xf32>
    %c0_25 = arith.constant 0 : index
    %c0_26 = arith.constant 0 : index
    %34 = vector.load %arg11[%c0_25, %c0_26] : memref<1x96xf32, #tpu.memory_space<vmem>>, vector<1x96xf32>
    %35 = vector.broadcast %34 : vector<1x96xf32> to vector<512x96xf32>
    %36 = arith.addf %33, %35 : vector<512x96xf32>
    %37 = vector.extract_strided_slice %36 {offsets = [0, 0], sizes = [512, 48], strides = [1, 1]} : vector<512x96xf32> to vector<512x48xf32>
    %cst_27 = arith.constant 0.000000e+00 : f32
    %38 = vector.broadcast %cst_27 : f32 to vector<512x48xf32>
    %39 = arith.maximumf %37, %38 : vector<512x48xf32>
    %40 = vector.extract_strided_slice %36 {offsets = [0, 48], sizes = [512, 48], strides = [1, 1]} : vector<512x96xf32> to vector<512x48xf32>
    %41 = arith.truncf %39 : vector<512x48xf32> to vector<512x48xbf16>
    %c0_28 = arith.constant 0 : index
    %c0_29 = arith.constant 0 : index
    %42 = vector.load %arg12[%c0_28, %c0_29] : memref<48x48xbf16, #tpu.memory_space<vmem>>, vector<48x48xbf16>
    %cst_30 = arith.constant dense<0.000000e+00> : vector<512x48xf32>
    %43 = tpu.matmul %41, %42, %cst_30 {dimension_numbers = #tpu.dot_dimension_numbers<[1], [0], [0], [1], [0, 0, 1, 1], [], []>} : vector<512x48xbf16>, vector<48x48xbf16>, vector<512x48xf32> -> vector<512x48xf32>
    %c0_31 = arith.constant 0 : index
    %c0_32 = arith.constant 0 : index
    %44 = vector.load %arg13[%c0_31, %c0_32] : memref<1x48xf32, #tpu.memory_space<vmem>>, vector<1x48xf32>
    %45 = vector.broadcast %44 : vector<1x48xf32> to vector<512x48xf32>
    %46 = arith.addf %43, %45 : vector<512x48xf32>
    %47 = arith.addf %46, %40 : vector<512x48xf32>
    %cst_33 = arith.constant 0.000000e+00 : f32
    %48 = vector.broadcast %cst_33 : f32 to vector<512x48xf32>
    %49 = arith.maximumf %47, %48 : vector<512x48xf32>
    %50 = arith.truncf %49 : vector<512x48xf32> to vector<512x48xbf16>
    %c0_34 = arith.constant 0 : index
    %c0_35 = arith.constant 0 : index
    %51 = vector.load %arg14[%c0_34, %c0_35] : memref<48x128xbf16, #tpu.memory_space<vmem>>, vector<48x128xbf16>
    %cst_36 = arith.constant dense<0.000000e+00> : vector<512x128xf32>
    %52 = tpu.matmul %50, %51, %cst_36 {dimension_numbers = #tpu.dot_dimension_numbers<[1], [0], [0], [1], [0, 0, 1, 1], [], []>} : vector<512x48xbf16>, vector<48x128xbf16>, vector<512x128xf32> -> vector<512x128xf32>
    %c0_37 = arith.constant 0 : index
    %c0_38 = arith.constant 0 : index
    %53 = vector.load %arg15[%c0_37, %c0_38] : memref<1x128xf32, #tpu.memory_space<vmem>>, vector<1x128xf32>
    %54 = vector.broadcast %53 : vector<1x128xf32> to vector<512x128xf32>
    %55 = arith.addf %52, %54 : vector<512x128xf32>
    %c0_39 = arith.constant 0 : index
    %c0_40 = arith.constant 0 : index
    %56 = vector.load %arg16[%c0_39, %c0_40] : memref<512x128xf32, #tpu.memory_space<vmem>>, vector<512x128xf32>
    tpu.vector_store %arg16[%c0_39, %c0_40], %55 {strides = array<i32>} : memref<512x128xf32, #tpu.memory_space<vmem>>, vector<512x128xf32>,
    return
  }
  func.func @transform_0(%arg0: i32) -> (i32, i32) {
    %c0_i32 = arith.constant 0 : i32
    %c0_i32_0 = arith.constant 0 : i32
    return %arg0, %c0_i32 : i32, i32
  }
  func.func @transform_1(%arg0: i32) -> (i32, i32) {
    %c0_i32 = arith.constant 0 : i32
    %c0_i32_0 = arith.constant 0 : i32
    %c0_i32_1 = arith.constant 0 : i32
    return %c0_i32, %c0_i32_0 : i32, i32
  }
  func.func @transform_2(%arg0: i32) -> (i32, i32) {
    %c0_i32 = arith.constant 0 : i32
    %c0_i32_0 = arith.constant 0 : i32
    %c0_i32_1 = arith.constant 0 : i32
    return %c0_i32, %c0_i32_0 : i32, i32
  }
  func.func @transform_3(%arg0: i32) -> (i32, i32) {
    %c0_i32 = arith.constant 0 : i32
    %c0_i32_0 = arith.constant 0 : i32
    %c0_i32_1 = arith.constant 0 : i32
    return %c0_i32, %c0_i32_0 : i32, i32
  }
  func.func @transform_4(%arg0: i32) -> (i32, i32) {
    %c0_i32 = arith.constant 0 : i32
    %c0_i32_0 = arith.constant 0 : i32
    %c0_i32_1 = arith.constant 0 : i32
    return %c0_i32, %c0_i32_0 : i32, i32
  }
  func.func @transform_5(%arg0: i32) -> (i32, i32) {
    %c0_i32 = arith.constant 0 : i32
    %c0_i32_0 = arith.constant 0 : i32
    %c0_i32_1 = arith.constant 0 : i32
    return %c0_i32, %c0_i32_0 : i32, i32
  }
  func.func @transform_6(%arg0: i32) -> (i32, i32) {
    %c0_i32 = arith.constant 0 : i32
    %c0_i32_0 = arith.constant 0 : i32
    %c0_i32_1 = arith.constant 0 : i32
    return %c0_i32, %c0_i32_0 : i32, i32
  }
  func.func @transform_7(%arg0: i32) -> (i32, i32) {
    %c0_i32 = arith.constant 0 : i32
    %c0_i32_0 = arith.constant 0 : i32
    %c0_i32_1 = arith.constant 0 : i32
    return %c0_i32, %c0_i32_0 : i32, i32
  }
  func.func @transform_8(%arg0: i32) -> (i32, i32) {
    %c0_i32 = arith.constant 0 : i32
    %c0_i32_0 = arith.constant 0 : i32
    %c0_i32_1 = arith.constant 0 : i32
    return %c0_i32, %c0_i32_0 : i32, i32
  }
  func.func @transform_9(%arg0: i32) -> (i32, i32) {
    %c0_i32 = arith.constant 0 : i32
    %c0_i32_0 = arith.constant 0 : i32
    %c0_i32_1 = arith.constant 0 : i32
    return %c0_i32, %c0_i32_0 : i32, i32
  }
  func.func @transform_10(%arg0: i32) -> (i32, i32) {
    %c0_i32 = arith.constant 0 : i32
    %c0_i32_0 = arith.constant 0 : i32
    %c0_i32_1 = arith.constant 0 : i32
    return %c0_i32, %c0_i32_0 : i32, i32
  }
  func.func @transform_11(%arg0: i32) -> (i32, i32) {
    %c0_i32 = arith.constant 0 : i32
    %c0_i32_0 = arith.constant 0 : i32
    %c0_i32_1 = arith.constant 0 : i32
    return %c0_i32, %c0_i32_0 : i32, i32
  }
  func.func @transform_12(%arg0: i32) -> (i32, i32) {
    %c0_i32 = arith.constant 0 : i32
    %c0_i32_0 = arith.constant 0 : i32
    %c0_i32_1 = arith.constant 0 : i32
    return %c0_i32, %c0_i32_0 : i32, i32
  }
  func.func @transform_13(%arg0: i32) -> (i32, i32) {
    %c0_i32 = arith.constant 0 : i32
    %c0_i32_0 = arith.constant 0 : i32
    %c0_i32_1 = arith.constant 0 : i32
    return %c0_i32, %c0_i32_0 : i32, i32
  }
  func.func @transform_14(%arg0: i32) -> (i32, i32) {
    %c0_i32 = arith.constant 0 : i32
    %c0_i32_0 = arith.constant 0 : i32
    %c0_i32_1 = arith.constant 0 : i32
    return %c0_i32, %c0_i32_0 : i32, i32
  }
  func.func @transform_15(%arg0: i32) -> (i32, i32) {
    %c0_i32 = arith.constant 0 : i32
    %c0_i32_0 = arith.constant 0 : i32
    return %arg0, %c0_i32 : i32, i32
  }
}

</mosaic_0001>

<llo_original>
// kernel: tpu_custom_call.1
$region0: #{tpu_custom_call.1}
  #allocation0 [shape = 'u32[]', space=smem, size = 0x4, offset = 0x4, fixed_abs, tag = 'smem constant byte address 0x4 - core index']
  #allocation1 [shape = 'u32[144,128]{1,0:T(1,128)}', space=vmem, size = 0x12000, scoped, tag = 'internal scratch']
  %s0 = inlined_call_operand.vmem [shape: bf16[512,20], index: 0, kind: input, shape index: {}]
  %s1 = inlined_call_operand.vmem [shape: bf16[20,32], index: 1, kind: input, shape index: {}]
  %s2 = inlined_call_operand.vmem [shape: f32[1,32], index: 2, kind: input, shape index: {}]
  %s3 = inlined_call_operand.vmem [shape: bf16[32,32], index: 3, kind: input, shape index: {}]
  %s4 = inlined_call_operand.vmem [shape: f32[1,32], index: 4, kind: input, shape index: {}]
  %s5 = inlined_call_operand.vmem [shape: bf16[32,32], index: 5, kind: input, shape index: {}]
  %s6 = inlined_call_operand.vmem [shape: f32[1,32], index: 6, kind: input, shape index: {}]
  %s7 = inlined_call_operand.vmem [shape: f32[1,32], index: 7, kind: input, shape index: {}]
  %s8 = inlined_call_operand.vmem [shape: f32[1,32], index: 8, kind: input, shape index: {}]
  %s9 = inlined_call_operand.vmem [shape: bf16[32,96], index: 9, kind: input, shape index: {}]
  %s10 = inlined_call_operand.vmem [shape: f32[1,96], index: 10, kind: input, shape index: {}]
  %s11 = inlined_call_operand.vmem [shape: bf16[48,48], index: 11, kind: input, shape index: {}]
  %s12 = inlined_call_operand.vmem [shape: f32[1,48], index: 12, kind: input, shape index: {}]
  %s13 = inlined_call_operand.vmem [shape: bf16[48,128], index: 13, kind: input, shape index: {}]
  %s14 = inlined_call_operand.vmem [shape: f32[1,128], index: 14, kind: input, shape index: {}]
  %s15 = inlined_call_operand.hbm [shape: f32[512,128], index: 15, kind: output, shape index: {}]
  %s16 = sld [smem:[#allocation0]]
  $region70: #{tpu_custom_call.1} parent=0
    _
  %s18 = ssub.s32 1, %s16
  %s19 = scalar_select 0, %s18, %s16
  $region1: #{tpu_custom_call.1} parent=0
    #allocation2 [shape = 'u8[262144]{0}', space=vmem, size = 0x40000, scoped, tag = 'output window, operand 0, single buffered']
    #allocation3 [shape = 's32[1]{0}', space=sflag, size = 0x4, scoped, tag = 'scoped memory for tpu_custom_call.1']
    %20 = vsyncpa [#allocation3], 0
    // Predicated region
    $region2: #{tpu_custom_call.1} parent=1 // pred_check
      _
    $region3: #{tpu_custom_call.1} parent=1 // pred_check_branch
      %22 = sbr.rel (0) target = $region5
    $region4: #{tpu_custom_call.1} parent=1 // pred_region
      _
    $region5: #{tpu_custom_call.1} parent=1 // pred_fallthru
      _
    // Predicated region
    $region6: #{tpu_custom_call.1} parent=1 // pred_check
      _
    $region7: #{tpu_custom_call.1} parent=1 // pred_check_branch
      %24 = sbr.rel (0) target = $region9
    $region8: #{tpu_custom_call.1} parent=1 // pred_region
      _
    $region9: #{tpu_custom_call.1} parent=1 // pred_fallthru
      _
    // Predicated region
    $region10: #{tpu_custom_call.1} parent=1 // pred_check
      _
    $region11: #{tpu_custom_call.1} parent=1 // pred_check_branch
      %26 = sbr.rel (0) target = $region13
    $region12: #{tpu_custom_call.1} parent=1 // pred_region
      _
    $region13: #{tpu_custom_call.1} parent=1 // pred_fallthru
      _
    // Predicated region
    $region14: #{tpu_custom_call.1} parent=1 // pred_check
      _
    $region15: #{tpu_custom_call.1} parent=1 // pred_check_branch
      %28 = sbr.rel (0) target = $region17
    $region16: #{tpu_custom_call.1} parent=1 // pred_region
      _
    $region17: #{tpu_custom_call.1} parent=1 // pred_fallthru
      _
    // Predicated region
    $region18: #{tpu_custom_call.1} parent=1 // pred_check
      _
    $region19: #{tpu_custom_call.1} parent=1 // pred_check_branch
      %30 = sbr.rel (0) target = $region21
    $region20: #{tpu_custom_call.1} parent=1 // pred_region
      _
    $region21: #{tpu_custom_call.1} parent=1 // pred_fallthru
      _
    // Predicated region
    $region22: #{tpu_custom_call.1} parent=1 // pred_check
      _
    $region23: #{tpu_custom_call.1} parent=1 // pred_check_branch
      %32 = sbr.rel (0) target = $region25
    $region24: #{tpu_custom_call.1} parent=1 // pred_region
      _
    $region25: #{tpu_custom_call.1} parent=1 // pred_fallthru
      _
    // Predicated region
    $region26: #{tpu_custom_call.1} parent=1 // pred_check
      _
    $region27: #{tpu_custom_call.1} parent=1 // pred_check_branch
      %34 = sbr.rel (0) target = $region29
    $region28: #{tpu_custom_call.1} parent=1 // pred_region
      _
    $region29: #{tpu_custom_call.1} parent=1 // pred_fallthru
      _
    // Predicated region
    $region30: #{tpu_custom_call.1} parent=1 // pred_check
      _
    $region31: #{tpu_custom_call.1} parent=1 // pred_check_branch
      %36 = sbr.rel (0) target = $region33
    $region32: #{tpu_custom_call.1} parent=1 // pred_region
      _
    $region33: #{tpu_custom_call.1} parent=1 // pred_fallthru
      _
    // Predicated region
    $region34: #{tpu_custom_call.1} parent=1 // pred_check
      _
    $region35: #{tpu_custom_call.1} parent=1 // pred_check_branch
      %38 = sbr.rel (0) target = $region37
    $region36: #{tpu_custom_call.1} parent=1 // pred_region
      _
    $region37: #{tpu_custom_call.1} parent=1 // pred_fallthru
      _
    // Predicated region
    $region38: #{tpu_custom_call.1} parent=1 // pred_check
      _
    $region39: #{tpu_custom_call.1} parent=1 // pred_check_branch
      %40 = sbr.rel (0) target = $region41
    $region40: #{tpu_custom_call.1} parent=1 // pred_region
      _
    $region41: #{tpu_custom_call.1} parent=1 // pred_fallthru
      _
    // Predicated region
    $region42: #{tpu_custom_call.1} parent=1 // pred_check
      _
    $region43: #{tpu_custom_call.1} parent=1 // pred_check_branch
      %42 = sbr.rel (0) target = $region45
    $region44: #{tpu_custom_call.1} parent=1 // pred_region
      _
    $region45: #{tpu_custom_call.1} parent=1 // pred_fallthru
      _
    // Predicated region
    $region46: #{tpu_custom_call.1} parent=1 // pred_check
      _
    $region47: #{tpu_custom_call.1} parent=1 // pred_check_branch
      %44 = sbr.rel (0) target = $region49
    $region48: #{tpu_custom_call.1} parent=1 // pred_region
      _
    $region49: #{tpu_custom_call.1} parent=1 // pred_fallthru
      _
    // Predicated region
    $region50: #{tpu_custom_call.1} parent=1 // pred_check
      _
    $region51: #{tpu_custom_call.1} parent=1 // pred_check_branch
      %46 = sbr.rel (0) target = $region53
    $region52: #{tpu_custom_call.1} parent=1 // pred_region
      _
    $region53: #{tpu_custom_call.1} parent=1 // pred_fallthru
      _
    // Predicated region
    $region54: #{tpu_custom_call.1} parent=1 // pred_check
      _
    $region55: #{tpu_custom_call.1} parent=1 // pred_check_branch
      %48 = sbr.rel (0) target = $region57
    $region56: #{tpu_custom_call.1} parent=1 // pred_region
      _
    $region57: #{tpu_custom_call.1} parent=1 // pred_fallthru
      _
    // Predicated region
    $region58: #{tpu_custom_call.1} parent=1 // pred_check
      _
    $region59: #{tpu_custom_call.1} parent=1 // pred_check_branch
      %50 = sbr.rel (0) target = $region61
    $region60: #{tpu_custom_call.1} parent=1 // pred_region
      _
    $region61: #{tpu_custom_call.1} parent=1 // pred_fallthru
      _
    %v52 = vld [vmem:[%s0] sm:$0xf]
    %v53 = vld [vmem:[%s0 + $0x4] sm:$0xf]
    %v54 = vld [vmem:[%s0 + $0x8] sm:$0xf]
    %v55 = vld [vmem:[%s0 + $0xc] sm:$0xf]
    %v56 = vld [vmem:[%s0 + $0x10] sm:$0xf]
    %v57 = vld [vmem:[%s0 + $0x14] sm:$0xf]
    %v58 = vld [vmem:[%s0 + $0x18] sm:$0xf]
    %v59 = vld [vmem:[%s0 + $0x1c] sm:$0xf]
    %v60 = vld [vmem:[%s0 + $0x20] sm:$0xf]
    %v61 = vld [vmem:[%s0 + $0x24] sm:$0xf]
    %v62 = vld [vmem:[%s0 + $0x28] sm:$0xf]
    %v63 = vld [vmem:[%s0 + $0x2c] sm:$0xf]
    %v64 = vld [vmem:[%s0 + $0x30] sm:$0xf]
    %v65 = vld [vmem:[%s0 + $0x34] sm:$0xf]
    %v66 = vld [vmem:[%s0 + $0x38] sm:$0xf]
    %v67 = vld [vmem:[%s0 + $0x3c] sm:$0xf]
    %v68 = vld [vmem:[%s0 + $0x40] sm:$0xf]
    %v69 = vld [vmem:[%s0 + $0x44] sm:$0xf]
    %v70 = vld [vmem:[%s0 + $0x48] sm:$0xf]
    %v71 = vld [vmem:[%s0 + $0x4c] sm:$0xf]
    %v72 = vld [vmem:[%s0 + $0x50] sm:$0xf]
    %v73 = vld [vmem:[%s0 + $0x54] sm:$0xf]
    %v74 = vld [vmem:[%s0 + $0x58] sm:$0xf]
    %v75 = vld [vmem:[%s0 + $0x5c] sm:$0xf]
    %v76 = vld [vmem:[%s0 + $0x60] sm:$0xf]
    %v77 = vld [vmem:[%s0 + $0x64] sm:$0xf]
    %v78 = vld [vmem:[%s0 + $0x68] sm:$0xf]
    %v79 = vld [vmem:[%s0 + $0x6c] sm:$0xf]
    %v80 = vld [vmem:[%s0 + $0x70] sm:$0xf]
    %v81 = vld [vmem:[%s0 + $0x74] sm:$0xf]
    %v82 = vld [vmem:[%s0 + $0x78] sm:$0xf]
    %v83 = vld [vmem:[%s0 + $0x7c] sm:$0xf]
    %v84 = vld [vmem:[%s0 + $0x80] sm:$0xf]
    %v85 = vld [vmem:[%s0 + $0x84] sm:$0xf]
    %v86 = vld [vmem:[%s0 + $0x88] sm:$0xf]
    %v87 = vld [vmem:[%s0 + $0x8c] sm:$0xf]
    %v88 = vld [vmem:[%s0 + $0x90] sm:$0xf]
    %v89 = vld [vmem:[%s0 + $0x94] sm:$0xf]
    %v90 = vld [vmem:[%s0 + $0x98] sm:$0xf]
    %v91 = vld [vmem:[%s0 + $0x9c] sm:$0xf]
    %v92 = vld [vmem:[%s0 + $0xa0] sm:$0xf]
    %v93 = vld [vmem:[%s0 + $0xa4] sm:$0xf]
    %v94 = vld [vmem:[%s0 + $0xa8] sm:$0xf]
    %v95 = vld [vmem:[%s0 + $0xac] sm:$0xf]
    %v96 = vld [vmem:[%s0 + $0xb0] sm:$0xf]
    %v97 = vld [vmem:[%s0 + $0xb4] sm:$0xf]
    %v98 = vld [vmem:[%s0 + $0xb8] sm:$0xf]
    %v99 = vld [vmem:[%s0 + $0xbc] sm:$0xf]
    %v100 = vld [vmem:[%s0 + $0xc0] sm:$0xf]
    %v101 = vld [vmem:[%s0 + $0xc4] sm:$0xf]
    %v102 = vld [vmem:[%s0 + $0xc8] sm:$0xf]
    %v103 = vld [vmem:[%s0 + $0xcc] sm:$0xf]
    %v104 = vld [vmem:[%s0 + $0xd0] sm:$0xf]
    %v105 = vld [vmem:[%s0 + $0xd4] sm:$0xf]
    %v106 = vld [vmem:[%s0 + $0xd8] sm:$0xf]
    %v107 = vld [vmem:[%s0 + $0xdc] sm:$0xf]
    %v108 = vld [vmem:[%s0 + $0xe0] sm:$0xf]
    %v109 = vld [vmem:[%s0 + $0xe4] sm:$0xf]
    %v110 = vld [vmem:[%s0 + $0xe8] sm:$0xf]
    %v111 = vld [vmem:[%s0 + $0xec] sm:$0xf]
    %v112 = vld [vmem:[%s0 + $0xf0] sm:$0xf]
    %v113 = vld [vmem:[%s0 + $0xf4] sm:$0xf]
    %v114 = vld [vmem:[%s0 + $0xf8] sm:$0xf]
    %v115 = vld [vmem:[%s0 + $0xfc] sm:$0xf]
    %v116 = vld [vmem:[%s1] sm:$0xf]
    %v117 = vld [vmem:[%s1 + $0x4] sm:$0xf]
    %v118 = vld [vmem:[%s1 + $0x8] sm:$0x3]
    %v119 = vld [vmem:[%s2] sm:$0x1]
    %v121 = vlaneseq
    %v122 = vshrl.u32 %v121, 7
    %v123 = vsub.s32 0, %v122
    %v124 = vrot.slane %v119, %v123
    %v190 = vunpack.c.l.b16 %v52
    %v191 = vunpack.c.l.b16 %v53
    %v192 = vunpack.c.l.b16 %v54
    %v193 = vunpack.c.l.b16 %v55
    %v194 = vunpack.c.l.b16 %v56
    %v195 = vunpack.c.l.b16 %v57
    %v196 = vunpack.c.l.b16 %v58
    %v197 = vunpack.c.l.b16 %v59
    %v198 = vunpack.c.l.b16 %v60
    %v199 = vunpack.c.l.b16 %v61
    %v200 = vunpack.c.l.b16 %v62
    %v201 = vunpack.c.l.b16 %v63
    %v202 = vunpack.c.l.b16 %v64
    %v203 = vunpack.c.l.b16 %v65
    %v204 = vunpack.c.l.b16 %v66
    %v205 = vunpack.c.l.b16 %v67
    %v206 = vunpack.c.l.b16 %v68
    %v207 = vunpack.c.l.b16 %v69
    %v208 = vunpack.c.l.b16 %v70
    %v209 = vunpack.c.l.b16 %v71
    %v210 = vunpack.c.l.b16 %v72
    %v211 = vunpack.c.l.b16 %v73
    %v212 = vunpack.c.l.b16 %v74
    %v213 = vunpack.c.l.b16 %v75
    %v214 = vunpack.c.l.b16 %v76
    %v215 = vunpack.c.l.b16 %v77
    %v216 = vunpack.c.l.b16 %v78
    %v217 = vunpack.c.l.b16 %v79
    %v218 = vunpack.c.l.b16 %v80
    %v219 = vunpack.c.l.b16 %v81
    %v220 = vunpack.c.l.b16 %v82
    %v221 = vunpack.c.l.b16 %v83
    %v222 = vunpack.c.l.b16 %v84
    %v223 = vunpack.c.l.b16 %v85
    %v224 = vunpack.c.l.b16 %v86
    %v225 = vunpack.c.l.b16 %v87
    %v226 = vunpack.c.l.b16 %v88
    %v227 = vunpack.c.l.b16 %v89
    %v228 = vunpack.c.l.b16 %v90
    %v229 = vunpack.c.l.b16 %v91
    %v230 = vunpack.c.l.b16 %v92
    %v231 = vunpack.c.l.b16 %v93
    %v232 = vunpack.c.l.b16 %v94
    %v233 = vunpack.c.l.b16 %v95
    %v234 = vunpack.c.l.b16 %v96
    %v235 = vunpack.c.l.b16 %v97
    %v236 = vunpack.c.l.b16 %v98
    %v237 = vunpack.c.l.b16 %v99
    %v238 = vunpack.c.l.b16 %v100
    %v239 = vunpack.c.l.b16 %v101
    %v240 = vunpack.c.l.b16 %v102
    %v241 = vunpack.c.l.b16 %v103
    %v242 = vunpack.c.l.b16 %v104
    %v243 = vunpack.c.l.b16 %v105
    %v244 = vunpack.c.l.b16 %v106
    %v245 = vunpack.c.l.b16 %v107
    %v246 = vunpack.c.l.b16 %v108
    %v247 = vunpack.c.l.b16 %v109
    %v248 = vunpack.c.l.b16 %v110
    %v249 = vunpack.c.l.b16 %v111
    %v250 = vunpack.c.l.b16 %v112
    %v251 = vunpack.c.l.b16 %v113
    %v252 = vunpack.c.l.b16 %v114
    %v253 = vunpack.c.l.b16 %v115
    %v254 = vpack.c.b16 %v191, %v190
    %v255 = vpack.c.b16 %v193, %v192
    %v256 = vpack.c.b16 %v195, %v194
    %v257 = vpack.c.b16 %v197, %v196
    %v258 = vpack.c.b16 %v199, %v198
    %v259 = vpack.c.b16 %v201, %v200
    %v260 = vpack.c.b16 %v203, %v202
    %v261 = vpack.c.b16 %v205, %v204
    %v262 = vpack.c.b16 %v207, %v206
    %v263 = vpack.c.b16 %v209, %v208
    %v264 = vpack.c.b16 %v211, %v210
    %v265 = vpack.c.b16 %v213, %v212
    %v266 = vpack.c.b16 %v215, %v214
    %v267 = vpack.c.b16 %v217, %v216
    %v268 = vpack.c.b16 %v219, %v218
    %v269 = vpack.c.b16 %v221, %v220
    %v270 = vpack.c.b16 %v223, %v222
    %v271 = vpack.c.b16 %v225, %v224
    %v272 = vpack.c.b16 %v227, %v226
    %v273 = vpack.c.b16 %v229, %v228
    %v274 = vpack.c.b16 %v231, %v230
    %v275 = vpack.c.b16 %v233, %v232
    %v276 = vpack.c.b16 %v235, %v234
    %v277 = vpack.c.b16 %v237, %v236
    %v278 = vpack.c.b16 %v239, %v238
    %v279 = vpack.c.b16 %v241, %v240
    %v280 = vpack.c.b16 %v243, %v242
    %v281 = vpack.c.b16 %v245, %v244
    %v282 = vpack.c.b16 %v247, %v246
    %v283 = vpack.c.b16 %v249, %v248
    %v284 = vpack.c.b16 %v251, %v250
    %v285 = vpack.c.b16 %v253, %v252
    %v289 = vunpack.c.l.b16 %v116
    %v290 = vunpack.c.l.b16 %v117
    %v291 = vunpack.c.l.b16 %v118
    %v292 = vpack.c.b16 %v290, %v289
    %v293 = vpack.c.b16 %v291, %v291
    %vm295 = vcmask 162816
    %v297 = vsel %vm295, %v254, 0
    %v300 = vsel %vm295, %v255, 0
    %v303 = vsel %vm295, %v256, 0
    %v306 = vsel %vm295, %v257, 0
    %v309 = vsel %vm295, %v258, 0
    %v312 = vsel %vm295, %v259, 0
    %v315 = vsel %vm295, %v260, 0
    %v318 = vsel %vm295, %v261, 0
    %v321 = vsel %vm295, %v262, 0
    %v324 = vsel %vm295, %v263, 0
    %v327 = vsel %vm295, %v264, 0
    %v330 = vsel %vm295, %v265, 0
    %v333 = vsel %vm295, %v266, 0
    %v336 = vsel %vm295, %v267, 0
    %v339 = vsel %vm295, %v268, 0
    %v342 = vsel %vm295, %v269, 0
    %v345 = vsel %vm295, %v270, 0
    %v348 = vsel %vm295, %v271, 0
    %v351 = vsel %vm295, %v272, 0
    %v354 = vsel %vm295, %v273, 0
    %v357 = vsel %vm295, %v274, 0
    %v360 = vsel %vm295, %v275, 0
    %v363 = vsel %vm295, %v276, 0
    %v366 = vsel %vm295, %v277, 0
    %v369 = vsel %vm295, %v278, 0
    %v372 = vsel %vm295, %v279, 0
    %v375 = vsel %vm295, %v280, 0
    %v378 = vsel %vm295, %v281, 0
    %v381 = vsel %vm295, %v282, 0
    %v384 = vsel %vm295, %v283, 0
    %v387 = vsel %vm295, %v284, 0
    %v390 = vsel %vm295, %v285, 0
    %vm392 = vcmask 1041408
    %v394 = vsel %vm392, %v293, 0
    %396 = vmatprep.subr.bf16.mxu0 0
    %397 = vmatpush1.bf16.msra.mxu0 0
    %398 = vmatprep.subr.bf16.mxu0 0
    %399 = vmatpush1.bf16.msra.mxu0 0
    %400 = vmatprep.subr.bf16.mxu0 0
    %401 = vmatpush1.bf16.msra.mxu0 0
    %402 = vmatprep.subr.bf16.mxu0 0
    %403 = vmatpush1.bf16.msra.mxu0 0
    %404 = vmatprep.subr.bf16.mxu0 0
    %405 = vmatpush1.bf16.msra.mxu0 0
    %406 = vmatprep.subr.bf16.mxu0 0
    %407 = vmatpush1.bf16.msra.mxu0 0
    %408 = vmatprep.subr.bf16.mxu0 0
    %409 = vmatpush1.bf16.msra.mxu0 %v394
    %410 = vmatprep.subr.bf16.mxu0 0
    %411 = vmatpush1.bf16.msra.mxu0 %v292
    %412 = vmatprep.subr.bf16.mxu0 0
    %413 = vmatpush2.bf16.msra.mxu0 0
    %414 = vmatprep.subr.bf16.mxu0 0
    %415 = vmatpush2.bf16.msra.mxu0 0
    %416 = vmatprep.subr.bf16.mxu0 0
    %417 = vmatpush2.bf16.msra.mxu0 0
    %418 = vmatprep.subr.bf16.mxu0 0
    %419 = vmatpush2.bf16.msra.mxu0 0
    %420 = vmatprep.subr.bf16.mxu0 0
    %421 = vmatpush2.bf16.msra.mxu0 0
    %422 = vmatprep.subr.bf16.mxu0 0
    %423 = vmatpush2.bf16.msra.mxu0 0
    %424 = vmatprep.subr.bf16.mxu0 0
    %425 = vmatpush2.bf16.msra.mxu0 0
    %426 = vmatprep.subr.bf16.mxu0 0
    %427 = vmatpush2.bf16.msra.mxu0 0
    %428 = vmatprep.mubr.bf16.mxu0 0
    %429 = vmatmul.mubr.bf16.gmra.mxu0 %v297
    %v430 = vpop.f32.mrf.mxu0
    %v431 = vadd.f32 %v124, %v430
    %v432 = vpop.f32.mrf.mxu0
    %v433 = vpop.f32.mrf.mxu0
    %v434 = vadd.f32 %v124, %v433
    %v435 = vpop.f32.mrf.mxu0
    %436 = vmatprep.mubr.bf16.mxu0 0
    %437 = vmatmul.mubr.bf16.gmra.mxu0 %v300
    %v438 = vpop.f32.mrf.mxu0
    %v439 = vadd.f32 %v124, %v438
    %v440 = vpop.f32.mrf.mxu0
    %v441 = vpop.f32.mrf.mxu0
    %v442 = vadd.f32 %v124, %v441
    %v443 = vpop.f32.mrf.mxu0
    %444 = vmatprep.mubr.bf16.mxu0 0
    %445 = vmatmul.mubr.bf16.gmra.mxu0 %v303
    %v446 = vpop.f32.mrf.mxu0
    %v447 = vadd.f32 %v124, %v446
    %v448 = vpop.f32.mrf.mxu0
    %v449 = vpop.f32.mrf.mxu0
    %v450 = vadd.f32 %v124, %v449
    %v451 = vpop.f32.mrf.mxu0
    %452 = vmatprep.mubr.bf16.mxu0 0
    %453 = vmatmul.mubr.bf16.gmra.mxu0 %v306
    %v454 = vpop.f32.mrf.mxu0
    %v455 = vadd.f32 %v124, %v454
    %v456 = vpop.f32.mrf.mxu0
    %v457 = vpop.f32.mrf.mxu0
    %v458 = vadd.f32 %v124, %v457
    %v459 = vpop.f32.mrf.mxu0
    %460 = vmatprep.mubr.bf16.mxu0 0
    %461 = vmatmul.mubr.bf16.gmra.mxu0 %v309
    %v462 = vpop.f32.mrf.mxu0
    %v463 = vadd.f32 %v124, %v462
    %v464 = vpop.f32.mrf.mxu0
    %v465 = vpop.f32.mrf.mxu0
    %v466 = vadd.f32 %v124, %v465
    %v467 = vpop.f32.mrf.mxu0
    %468 = vmatprep.mubr.bf16.mxu0 0
    %469 = vmatmul.mubr.bf16.gmra.mxu0 %v312
    %v470 = vpop.f32.mrf.mxu0
    %v471 = vadd.f32 %v124, %v470
    %v472 = vpop.f32.mrf.mxu0
    %v473 = vpop.f32.mrf.mxu0
    %v474 = vadd.f32 %v124, %v473
    %v475 = vpop.f32.mrf.mxu0
    %476 = vmatprep.mubr.bf16.mxu0 0
    %477 = vmatmul.mubr.bf16.gmra.mxu0 %v315
    %v478 = vpop.f32.mrf.mxu0
    %v479 = vadd.f32 %v124, %v478
    %v480 = vpop.f32.mrf.mxu0
    %v481 = vpop.f32.mrf.mxu0
    %v482 = vadd.f32 %v124, %v481
    %v483 = vpop.f32.mrf.mxu0
    %484 = vmatprep.mubr.bf16.mxu0 0
    %485 = vmatmul.mubr.bf16.gmra.mxu0 %v318
    %v486 = vpop.f32.mrf.mxu0
    %v487 = vadd.f32 %v124, %v486
    %v488 = vpop.f32.mrf.mxu0
    %v489 = vpop.f32.mrf.mxu0
    %v490 = vadd.f32 %v124, %v489
    %v491 = vpop.f32.mrf.mxu0
    %492 = vmatprep.mubr.bf16.mxu0 0
    %493 = vmatmul.mubr.bf16.gmra.mxu0 %v321
    %v494 = vpop.f32.mrf.mxu0
    %v495 = vadd.f32 %v124, %v494
    %v496 = vpop.f32.mrf.mxu0
    %v497 = vpop.f32.mrf.mxu0
    %v498 = vadd.f32 %v124, %v497
    %v499 = vpop.f32.mrf.mxu0
    %500 = vmatprep.mubr.bf16.mxu0 0
    %501 = vmatmul.mubr.bf16.gmra.mxu0 %v324
    %v502 = vpop.f32.mrf.mxu0
    %v503 = vadd.f32 %v124, %v502
    %v504 = vpop.f32.mrf.mxu0
    %v505 = vpop.f32.mrf.mxu0
    %v506 = vadd.f32 %v124, %v505
    %v507 = vpop.f32.mrf.mxu0
    %508 = vmatprep.mubr.bf16.mxu0 0
    %509 = vmatmul.mubr.bf16.gmra.mxu0 %v327
    %v510 = vpop.f32.mrf.mxu0
    %v511 = vadd.f32 %v124, %v510
    %v512 = vpop.f32.mrf.mxu0
    %v513 = vpop.f32.mrf.mxu0
    %v514 = vadd.f32 %v124, %v513
    %v515 = vpop.f32.mrf.mxu0
    %516 = vmatprep.mubr.bf16.mxu0 0
    %517 = vmatmul.mubr.bf16.gmra.mxu0 %v330
    %v518 = vpop.f32.mrf.mxu0
    %v519 = vadd.f32 %v124, %v518
    %v520 = vpop.f32.mrf.mxu0
    %v521 = vpop.f32.mrf.mxu0
    %v522 = vadd.f32 %v124, %v521
    %v523 = vpop.f32.mrf.mxu0
    %524 = vmatprep.mubr.bf16.mxu0 0
    %525 = vmatmul.mubr.bf16.gmra.mxu0 %v333
    %v526 = vpop.f32.mrf.mxu0
    %v527 = vadd.f32 %v124, %v526
    %v528 = vpop.f32.mrf.mxu0
    %v529 = vpop.f32.mrf.mxu0
    %v530 = vadd.f32 %v124, %v529
    %v531 = vpop.f32.mrf.mxu0
    %532 = vmatprep.mubr.bf16.mxu0 0
    %533 = vmatmul.mubr.bf16.gmra.mxu0 %v336
    %v534 = vpop.f32.mrf.mxu0
    %v535 = vadd.f32 %v124, %v534
    %v536 = vpop.f32.mrf.mxu0
    %v537 = vpop.f32.mrf.mxu0
    %v538 = vadd.f32 %v124, %v537
    %v539 = vpop.f32.mrf.mxu0
    %540 = vmatprep.mubr.bf16.mxu0 0
    %541 = vmatmul.mubr.bf16.gmra.mxu0 %v339
    %v542 = vpop.f32.mrf.mxu0
    %v543 = vadd.f32 %v124, %v542
    %v544 = vpop.f32.mrf.mxu0
    %v545 = vpop.f32.mrf.mxu0
    %v546 = vadd.f32 %v124, %v545
    %v547 = vpop.f32.mrf.mxu0
    %548 = vmatprep.mubr.bf16.mxu0 0
    %549 = vmatmul.mubr.bf16.gmra.mxu0 %v342
    %v550 = vpop.f32.mrf.mxu0
    %v551 = vadd.f32 %v124, %v550
    %v552 = vpop.f32.mrf.mxu0
    %v553 = vpop.f32.mrf.mxu0
    %v554 = vadd.f32 %v124, %v553
    %v555 = vpop.f32.mrf.mxu0
    %556 = vmatprep.mubr.bf16.mxu0 0
    %557 = vmatmul.mubr.bf16.gmra.mxu0 %v345
    %v558 = vpop.f32.mrf.mxu0
    %v559 = vadd.f32 %v124, %v558
    %v560 = vpop.f32.mrf.mxu0
    %v561 = vpop.f32.mrf.mxu0
    %v562 = vadd.f32 %v124, %v561
    %v563 = vpop.f32.mrf.mxu0
    %564 = vmatprep.mubr.bf16.mxu0 0
    %565 = vmatmul.mubr.bf16.gmra.mxu0 %v348
    %v566 = vpop.f32.mrf.mxu0
    %v567 = vadd.f32 %v124, %v566
    %v568 = vpop.f32.mrf.mxu0
    %v569 = vpop.f32.mrf.mxu0
    %v570 = vadd.f32 %v124, %v569
    %v571 = vpop.f32.mrf.mxu0
    %572 = vmatprep.mubr.bf16.mxu0 0
    %573 = vmatmul.mubr.bf16.gmra.mxu0 %v351
    %v574 = vpop.f32.mrf.mxu0
    %v575 = vadd.f32 %v124, %v574
    %v576 = vpop.f32.mrf.mxu0
    %v577 = vpop.f32.mrf.mxu0
    %v578 = vadd.f32 %v124, %v577
    %v579 = vpop.f32.mrf.mxu0
    %580 = vmatprep.mubr.bf16.mxu0 0
    %581 = vmatmul.mubr.bf16.gmra.mxu0 %v354
    %v582 = vpop.f32.mrf.mxu0
    %v583 = vadd.f32 %v124, %v582
    %v584 = vpop.f32.mrf.mxu0
    %v585 = vpop.f32.mrf.mxu0
    %v586 = vadd.f32 %v124, %v585
    %v587 = vpop.f32.mrf.mxu0
    %588 = vmatprep.mubr.bf16.mxu0 0
    %589 = vmatmul.mubr.bf16.gmra.mxu0 %v357
    %v590 = vpop.f32.mrf.mxu0
    %v591 = vadd.f32 %v124, %v590
    %v592 = vpop.f32.mrf.mxu0
    %v593 = vpop.f32.mrf.mxu0
    %v594 = vadd.f32 %v124, %v593
    %v595 = vpop.f32.mrf.mxu0
    %596 = vmatprep.mubr.bf16.mxu0 0
    %597 = vmatmul.mubr.bf16.gmra.mxu0 %v360
    %v598 = vpop.f32.mrf.mxu0
    %v599 = vadd.f32 %v124, %v598
    %v600 = vpop.f32.mrf.mxu0
    %v601 = vpop.f32.mrf.mxu0
    %v602 = vadd.f32 %v124, %v601
    %v603 = vpop.f32.mrf.mxu0
    %604 = vmatprep.mubr.bf16.mxu0 0
    %605 = vmatmul.mubr.bf16.gmra.mxu0 %v363
    %v606 = vpop.f32.mrf.mxu0
    %v607 = vadd.f32 %v124, %v606
    %v608 = vpop.f32.mrf.mxu0
    %v609 = vpop.f32.mrf.mxu0
    %v610 = vadd.f32 %v124, %v609
    %v611 = vpop.f32.mrf.mxu0
    %612 = vmatprep.mubr.bf16.mxu0 0
    %613 = vmatmul.mubr.bf16.gmra.mxu0 %v366
    %v614 = vpop.f32.mrf.mxu0
    %v615 = vadd.f32 %v124, %v614
    %v616 = vpop.f32.mrf.mxu0
    %v617 = vpop.f32.mrf.mxu0
    %v618 = vadd.f32 %v124, %v617
    %v619 = vpop.f32.mrf.mxu0
    %620 = vmatprep.mubr.bf16.mxu0 0
    %621 = vmatmul.mubr.bf16.gmra.mxu0 %v369
    %v622 = vpop.f32.mrf.mxu0
    %v623 = vadd.f32 %v124, %v622
    %v624 = vpop.f32.mrf.mxu0
    %v625 = vpop.f32.mrf.mxu0
    %v626 = vadd.f32 %v124, %v625
    %v627 = vpop.f32.mrf.mxu0
    %628 = vmatprep.mubr.bf16.mxu0 0
    %629 = vmatmul.mubr.bf16.gmra.mxu0 %v372
    %v630 = vpop.f32.mrf.mxu0
    %v631 = vadd.f32 %v124, %v630
    %v632 = vpop.f32.mrf.mxu0
    %v633 = vpop.f32.mrf.mxu0
    %v634 = vadd.f32 %v124, %v633
    %v635 = vpop.f32.mrf.mxu0
    %636 = vmatprep.mubr.bf16.mxu0 0
    %637 = vmatmul.mubr.bf16.gmra.mxu0 %v375
    %v638 = vpop.f32.mrf.mxu0
    %v639 = vadd.f32 %v124, %v638
    %v640 = vpop.f32.mrf.mxu0
    %v641 = vpop.f32.mrf.mxu0
    %v642 = vadd.f32 %v124, %v641
    %v643 = vpop.f32.mrf.mxu0
    %644 = vmatprep.mubr.bf16.mxu0 0
    %645 = vmatmul.mubr.bf16.gmra.mxu0 %v378
    %v646 = vpop.f32.mrf.mxu0
    %v647 = vadd.f32 %v124, %v646
    %v648 = vpop.f32.mrf.mxu0
    %v649 = vpop.f32.mrf.mxu0
    %v650 = vadd.f32 %v124, %v649
    %v651 = vpop.f32.mrf.mxu0
    %652 = vmatprep.mubr.bf16.mxu0 0
    %653 = vmatmul.mubr.bf16.gmra.mxu0 %v381
    %v654 = vpop.f32.mrf.mxu0
    %v655 = vadd.f32 %v124, %v654
    %v656 = vpop.f32.mrf.mxu0
    %v657 = vpop.f32.mrf.mxu0
    %v658 = vadd.f32 %v124, %v657
    %v659 = vpop.f32.mrf.mxu0
    %660 = vmatprep.mubr.bf16.mxu0 0
    %661 = vmatmul.mubr.bf16.gmra.mxu0 %v384
    %v662 = vpop.f32.mrf.mxu0
    %v663 = vadd.f32 %v124, %v662
    %v664 = vpop.f32.mrf.mxu0
    %v665 = vpop.f32.mrf.mxu0
    %v666 = vadd.f32 %v124, %v665
    %v667 = vpop.f32.mrf.mxu0
    %668 = vmatprep.mubr.bf16.mxu0 0
    %669 = vmatmul.mubr.bf16.gmra.mxu0 %v387
    %v670 = vpop.f32.mrf.mxu0
    %v671 = vadd.f32 %v124, %v670
    %v672 = vpop.f32.mrf.mxu0
    %v673 = vpop.f32.mrf.mxu0
    %v674 = vadd.f32 %v124, %v673
    %v675 = vpop.f32.mrf.mxu0
    %676 = vmatprep.mubr.bf16.mxu0 0
    %677 = vmatmul.mubr.bf16.gmra.mxu0 %v390
    %v678 = vpop.f32.mrf.mxu0
    %v679 = vadd.f32 %v124, %v678
    %v680 = vpop.f32.mrf.mxu0
    %v681 = vpop.f32.mrf.mxu0
    %v682 = vadd.f32 %v124, %v681
    %v683 = vpop.f32.mrf.mxu0
    %684 = vdwg.mxu0
    %v685 = vmax.f32 %v431, 0.0
    %v686 = vmax.f32 %v434, 0.0
    %v687 = vmax.f32 %v439, 0.0
    %v688 = vmax.f32 %v442, 0.0
    %v689 = vmax.f32 %v447, 0.0
    %v690 = vmax.f32 %v450, 0.0
    %v691 = vmax.f32 %v455, 0.0
    %v692 = vmax.f32 %v458, 0.0
    %v693 = vmax.f32 %v463, 0.0
    %v694 = vmax.f32 %v466, 0.0
    %v695 = vmax.f32 %v471, 0.0
    %v696 = vmax.f32 %v474, 0.0
    %v697 = vmax.f32 %v479, 0.0
    %v698 = vmax.f32 %v482, 0.0
    %v699 = vmax.f32 %v487, 0.0
    %v700 = vmax.f32 %v490, 0.0
    %v701 = vmax.f32 %v495, 0.0
    %v702 = vmax.f32 %v498, 0.0
    %v703 = vmax.f32 %v503, 0.0
    %v704 = vmax.f32 %v506, 0.0
    %v705 = vmax.f32 %v511, 0.0
    %v706 = vmax.f32 %v514, 0.0
    %v707 = vmax.f32 %v519, 0.0
    %v708 = vmax.f32 %v522, 0.0
    %v709 = vmax.f32 %v527, 0.0
    %v710 = vmax.f32 %v530, 0.0
    %v711 = vmax.f32 %v535, 0.0
    %v712 = vmax.f32 %v538, 0.0
    %v713 = vmax.f32 %v543, 0.0
    %v714 = vmax.f32 %v546, 0.0
    %v715 = vmax.f32 %v551, 0.0
    %v716 = vmax.f32 %v554, 0.0
    %v717 = vmax.f32 %v559, 0.0
    %v718 = vmax.f32 %v562, 0.0
    %v719 = vmax.f32 %v567, 0.0
    %v720 = vmax.f32 %v570, 0.0
    %v721 = vmax.f32 %v575, 0.0
    %v722 = vmax.f32 %v578, 0.0
    %v723 = vmax.f32 %v583, 0.0
    %v724 = vmax.f32 %v586, 0.0
    %v725 = vmax.f32 %v591, 0.0
    %v726 = vmax.f32 %v594, 0.0
    %v727 = vmax.f32 %v599, 0.0
    %v728 = vmax.f32 %v602, 0.0
    %v729 = vmax.f32 %v607, 0.0
    %v730 = vmax.f32 %v610, 0.0
    %v731 = vmax.f32 %v615, 0.0
    %v732 = vmax.f32 %v618, 0.0
    %v733 = vmax.f32 %v623, 0.0
    %v734 = vmax.f32 %v626, 0.0
    %v735 = vmax.f32 %v631, 0.0
    %v736 = vmax.f32 %v634, 0.0
    %v737 = vmax.f32 %v639, 0.0
    %v738 = vmax.f32 %v642, 0.0
    %v739 = vmax.f32 %v647, 0.0
    %v740 = vmax.f32 %v650, 0.0
    %v741 = vmax.f32 %v655, 0.0
    %v742 = vmax.f32 %v658, 0.0
    %v743 = vmax.f32 %v663, 0.0
    %v744 = vmax.f32 %v666, 0.0
    %v745 = vmax.f32 %v671, 0.0
    %v746 = vmax.f32 %v674, 0.0
    %v747 = vmax.f32 %v679, 0.0
    %v748 = vmax.f32 %v682, 0.0
    %v749 = vpack.c.bf16 %v686, %v685
    %v750 = vpack.c.bf16 %v688, %v687
    %v751 = vpack.c.bf16 %v690, %v689
    %v752 = vpack.c.bf16 %v692, %v691
    %v753 = vpack.c.bf16 %v694, %v693
    %v754 = vpack.c.bf16 %v696, %v695
    %v755 = vpack.c.bf16 %v698, %v697
    %v756 = vpack.c.bf16 %v700, %v699
    %v757 = vpack.c.bf16 %v702, %v701
    %v758 = vpack.c.bf16 %v704, %v703
    %v759 = vpack.c.bf16 %v706, %v705
    %v760 = vpack.c.bf16 %v708, %v707
    %v761 = vpack.c.bf16 %v710, %v709
    %v762 = vpack.c.bf16 %v712, %v711
    %v763 = vpack.c.bf16 %v714, %v713
    %v764 = vpack.c.bf16 %v716, %v715
    %v765 = vpack.c.bf16 %v718, %v717
    %v766 = vpack.c.bf16 %v720, %v719
    %v767 = vpack.c.bf16 %v722, %v721
    %v768 = vpack.c.bf16 %v724, %v723
    %v769 = vpack.c.bf16 %v726, %v725
    %v770 = vpack.c.bf16 %v728, %v727
    %v771 = vpack.c.bf16 %v730, %v729
    %v772 = vpack.c.bf16 %v732, %v731
    %v773 = vpack.c.bf16 %v734, %v733
    %v774 = vpack.c.bf16 %v736, %v735
    %v775 = vpack.c.bf16 %v738, %v737
    %v776 = vpack.c.bf16 %v740, %v739
    %v777 = vpack.c.bf16 %v742, %v741
    %v778 = vpack.c.bf16 %v744, %v743
    %v779 = vpack.c.bf16 %v746, %v745
    %v780 = vpack.c.bf16 %v748, %v747
    %v781 = vld [vmem:[%s3] sm:$0xf]
    %v782 = vld [vmem:[%s3 + $0x4] sm:$0xf]
    %v783 = vld [vmem:[%s3 + $0x8] sm:$0xf]
    %v784 = vld [vmem:[%s3 + $0xc] sm:$0xf]
    %v785 = vld [vmem:[%s4] sm:$0x1]
    %v787 = vlaneseq
    %v788 = vshrl.u32 %v787, 7
    %v789 = vsub.s32 0, %v788
    %v790 = vrot.slane %v785, %v789
    %v796 = vunpack.c.l.b16 %v781
    %v797 = vunpack.c.l.b16 %v782
    %v798 = vunpack.c.l.b16 %v783
    %v799 = vunpack.c.l.b16 %v784
    %v800 = vpack.c.b16 %v797, %v796
    %v801 = vpack.c.b16 %v799, %v798
    %vm804 = vcmask 261120
    %v806 = vsel %vm804, %v749, 0
    %v809 = vsel %vm804, %v750, 0
    %v812 = vsel %vm804, %v751, 0
    %v815 = vsel %vm804, %v752, 0
    %v818 = vsel %vm804, %v753, 0
    %v821 = vsel %vm804, %v754, 0
    %v824 = vsel %vm804, %v755, 0
    %v827 = vsel %vm804, %v756, 0
    %v830 = vsel %vm804, %v757, 0
    %v833 = vsel %vm804, %v758, 0
    %v836 = vsel %vm804, %v759, 0
    %v839 = vsel %vm804, %v760, 0
    %v842 = vsel %vm804, %v761, 0
    %v845 = vsel %vm804, %v762, 0
    %v848 = vsel %vm804, %v763, 0
    %v851 = vsel %vm804, %v764, 0
    %v854 = vsel %vm804, %v765, 0
    %v857 = vsel %vm804, %v766, 0
    %v860 = vsel %vm804, %v767, 0
    %v863 = vsel %vm804, %v768, 0
    %v866 = vsel %vm804, %v769, 0
    %v869 = vsel %vm804, %v770, 0
    %v872 = vsel %vm804, %v771, 0
    %v875 = vsel %vm804, %v772, 0
    %v878 = vsel %vm804, %v773, 0
    %v881 = vsel %vm804, %v774, 0
    %v884 = vsel %vm804, %v775, 0
    %v887 = vsel %vm804, %v776, 0
    %v890 = vsel %vm804, %v777, 0
    %v893 = vsel %vm804, %v778, 0
    %v896 = vsel %vm804, %v779, 0
    %v899 = vsel %vm804, %v780, 0
    %901 = vmatprep.subr.bf16.mxu0 0
    %902 = vmatpush1.bf16.msra.mxu0 0
    %903 = vmatprep.subr.bf16.mxu0 0
    %904 = vmatpush1.bf16.msra.mxu0 0
    %905 = vmatprep.subr.bf16.mxu0 0
    %906 = vmatpush1.bf16.msra.mxu0 0
    %907 = vmatprep.subr.bf16.mxu0 0
    %908 = vmatpush1.bf16.msra.mxu0 0
    %909 = vmatprep.subr.bf16.mxu0 0
    %910 = vmatpush1.bf16.msra.mxu0 0
    %911 = vmatprep.subr.bf16.mxu0 0
    %912 = vmatpush1.bf16.msra.mxu0 0
    %913 = vmatprep.subr.bf16.mxu0 0
    %914 = vmatpush1.bf16.msra.mxu0 %v801
    %915 = vmatprep.subr.bf16.mxu0 0
    %916 = vmatpush1.bf16.msra.mxu0 %v800
    %917 = vmatprep.subr.bf16.mxu0 0
    %918 = vmatpush2.bf16.msra.mxu0 0
    %919 = vmatprep.subr.bf16.mxu0 0
    %920 = vmatpush2.bf16.msra.mxu0 0
    %921 = vmatprep.subr.bf16.mxu0 0
    %922 = vmatpush2.bf16.msra.mxu0 0
    %923 = vmatprep.subr.bf16.mxu0 0
    %924 = vmatpush2.bf16.msra.mxu0 0
    %925 = vmatprep.subr.bf16.mxu0 0
    %926 = vmatpush2.bf16.msra.mxu0 0
    %927 = vmatprep.subr.bf16.mxu0 0
    %928 = vmatpush2.bf16.msra.mxu0 0
    %929 = vmatprep.subr.bf16.mxu0 0
    %930 = vmatpush2.bf16.msra.mxu0 0
    %931 = vmatprep.subr.bf16.mxu0 0
    %932 = vmatpush2.bf16.msra.mxu0 0
    %933 = vmatprep.mubr.bf16.mxu0 0
    %934 = vmatmul.mubr.bf16.gmra.mxu0 %v806
    %v935 = vpop.f32.mrf.mxu0
    %v936 = vadd.f32 %v790, %v935
    %v937 = vpop.f32.mrf.mxu0
    %v938 = vpop.f32.mrf.mxu0
    %v939 = vadd.f32 %v790, %v938
    %v940 = vpop.f32.mrf.mxu0
    %941 = vmatprep.mubr.bf16.mxu0 0
    %942 = vmatmul.mubr.bf16.gmra.mxu0 %v809
    %v943 = vpop.f32.mrf.mxu0
    %v944 = vadd.f32 %v790, %v943
    %v945 = vpop.f32.mrf.mxu0
    %v946 = vpop.f32.mrf.mxu0
    %v947 = vadd.f32 %v790, %v946
    %v948 = vpop.f32.mrf.mxu0
    %949 = vmatprep.mubr.bf16.mxu0 0
    %950 = vmatmul.mubr.bf16.gmra.mxu0 %v812
    %v951 = vpop.f32.mrf.mxu0
    %v952 = vadd.f32 %v790, %v951
    %v953 = vpop.f32.mrf.mxu0
    %v954 = vpop.f32.mrf.mxu0
    %v955 = vadd.f32 %v790, %v954
    %v956 = vpop.f32.mrf.mxu0
    %957 = vmatprep.mubr.bf16.mxu0 0
    %958 = vmatmul.mubr.bf16.gmra.mxu0 %v815
    %v959 = vpop.f32.mrf.mxu0
    %v960 = vadd.f32 %v790, %v959
    %v961 = vpop.f32.mrf.mxu0
    %v962 = vpop.f32.mrf.mxu0
    %v963 = vadd.f32 %v790, %v962
    %v964 = vpop.f32.mrf.mxu0
    %965 = vmatprep.mubr.bf16.mxu0 0
    %966 = vmatmul.mubr.bf16.gmra.mxu0 %v818
    %v967 = vpop.f32.mrf.mxu0
    %v968 = vadd.f32 %v790, %v967
    %v969 = vpop.f32.mrf.mxu0
    %v970 = vpop.f32.mrf.mxu0
    %v971 = vadd.f32 %v790, %v970
    %v972 = vpop.f32.mrf.mxu0
    %973 = vmatprep.mubr.bf16.mxu0 0
    %974 = vmatmul.mubr.bf16.gmra.mxu0 %v821
    %v975 = vpop.f32.mrf.mxu0
    %v976 = vadd.f32 %v790, %v975
    %v977 = vpop.f32.mrf.mxu0
    %v978 = vpop.f32.mrf.mxu0
    %v979 = vadd.f32 %v790, %v978
    %v980 = vpop.f32.mrf.mxu0
    %981 = vmatprep.mubr.bf16.mxu0 0
    %982 = vmatmul.mubr.bf16.gmra.mxu0 %v824
    %v983 = vpop.f32.mrf.mxu0
    %v984 = vadd.f32 %v790, %v983
    %v985 = vpop.f32.mrf.mxu0
    %v986 = vpop.f32.mrf.mxu0
    %v987 = vadd.f32 %v790, %v986
    %v988 = vpop.f32.mrf.mxu0
    %989 = vmatprep.mubr.bf16.mxu0 0
    %990 = vmatmul.mubr.bf16.gmra.mxu0 %v827
    %v991 = vpop.f32.mrf.mxu0
    %v992 = vadd.f32 %v790, %v991
    %v993 = vpop.f32.mrf.mxu0
    %v994 = vpop.f32.mrf.mxu0
    %v995 = vadd.f32 %v790, %v994
    %v996 = vpop.f32.mrf.mxu0
    %997 = vmatprep.mubr.bf16.mxu0 0
    %998 = vmatmul.mubr.bf16.gmra.mxu0 %v830
    %v999 = vpop.f32.mrf.mxu0
    %v1000 = vadd.f32 %v790, %v999
    %v1001 = vpop.f32.mrf.mxu0
    %v1002 = vpop.f32.mrf.mxu0
    %v1003 = vadd.f32 %v790, %v1002
    %v1004 = vpop.f32.mrf.mxu0
    %1005 = vmatprep.mubr.bf16.mxu0 0
    %1006 = vmatmul.mubr.bf16.gmra.mxu0 %v833
    %v1007 = vpop.f32.mrf.mxu0
    %v1008 = vadd.f32 %v790, %v1007
    %v1009 = vpop.f32.mrf.mxu0
    %v1010 = vpop.f32.mrf.mxu0
    %v1011 = vadd.f32 %v790, %v1010
    %v1012 = vpop.f32.mrf.mxu0
    %1013 = vmatprep.mubr.bf16.mxu0 0
    %1014 = vmatmul.mubr.bf16.gmra.mxu0 %v836
    %v1015 = vpop.f32.mrf.mxu0
    %v1016 = vadd.f32 %v790, %v1015
    %v1017 = vpop.f32.mrf.mxu0
    %v1018 = vpop.f32.mrf.mxu0
    %v1019 = vadd.f32 %v790, %v1018
    %v1020 = vpop.f32.mrf.mxu0
    %1021 = vmatprep.mubr.bf16.mxu0 0
    %1022 = vmatmul.mubr.bf16.gmra.mxu0 %v839
    %v1023 = vpop.f32.mrf.mxu0
    %v1024 = vadd.f32 %v790, %v1023
    %v1025 = vpop.f32.mrf.mxu0
    %v1026 = vpop.f32.mrf.mxu0
    %v1027 = vadd.f32 %v790, %v1026
    %v1028 = vpop.f32.mrf.mxu0
    %1029 = vmatprep.mubr.bf16.mxu0 0
    %1030 = vmatmul.mubr.bf16.gmra.mxu0 %v842
    %v1031 = vpop.f32.mrf.mxu0
    %v1032 = vadd.f32 %v790, %v1031
    %v1033 = vpop.f32.mrf.mxu0
    %v1034 = vpop.f32.mrf.mxu0
    %v1035 = vadd.f32 %v790, %v1034
    %v1036 = vpop.f32.mrf.mxu0
    %1037 = vmatprep.mubr.bf16.mxu0 0
    %1038 = vmatmul.mubr.bf16.gmra.mxu0 %v845
    %v1039 = vpop.f32.mrf.mxu0
    %v1040 = vadd.f32 %v790, %v1039
    %v1041 = vpop.f32.mrf.mxu0
    %v1042 = vpop.f32.mrf.mxu0
    %v1043 = vadd.f32 %v790, %v1042
    %v1044 = vpop.f32.mrf.mxu0
    %1045 = vmatprep.mubr.bf16.mxu0 0
    %1046 = vmatmul.mubr.bf16.gmra.mxu0 %v848
    %v1047 = vpop.f32.mrf.mxu0
    %v1048 = vadd.f32 %v790, %v1047
    %v1049 = vpop.f32.mrf.mxu0
    %v1050 = vpop.f32.mrf.mxu0
    %v1051 = vadd.f32 %v790, %v1050
    %v1052 = vpop.f32.mrf.mxu0
    %1053 = vmatprep.mubr.bf16.mxu0 0
    %1054 = vmatmul.mubr.bf16.gmra.mxu0 %v851
    %v1055 = vpop.f32.mrf.mxu0
    %v1056 = vadd.f32 %v790, %v1055
    %v1057 = vpop.f32.mrf.mxu0
    %v1058 = vpop.f32.mrf.mxu0
    %v1059 = vadd.f32 %v790, %v1058
    %v1060 = vpop.f32.mrf.mxu0
    %1061 = vmatprep.mubr.bf16.mxu0 0
    %1062 = vmatmul.mubr.bf16.gmra.mxu0 %v854
    %v1063 = vpop.f32.mrf.mxu0
    %v1064 = vadd.f32 %v790, %v1063
    %v1065 = vpop.f32.mrf.mxu0
    %v1066 = vpop.f32.mrf.mxu0
    %v1067 = vadd.f32 %v790, %v1066
    %v1068 = vpop.f32.mrf.mxu0
    %1069 = vmatprep.mubr.bf16.mxu0 0
    %1070 = vmatmul.mubr.bf16.gmra.mxu0 %v857
    %v1071 = vpop.f32.mrf.mxu0
    %v1072 = vadd.f32 %v790, %v1071
    %v1073 = vpop.f32.mrf.mxu0
    %v1074 = vpop.f32.mrf.mxu0
    %v1075 = vadd.f32 %v790, %v1074
    %v1076 = vpop.f32.mrf.mxu0
    %1077 = vmatprep.mubr.bf16.mxu0 0
    %1078 = vmatmul.mubr.bf16.gmra.mxu0 %v860
    %v1079 = vpop.f32.mrf.mxu0
    %v1080 = vadd.f32 %v790, %v1079
    %v1081 = vpop.f32.mrf.mxu0
    %v1082 = vpop.f32.mrf.mxu0
    %v1083 = vadd.f32 %v790, %v1082
    %v1084 = vpop.f32.mrf.mxu0
    %1085 = vmatprep.mubr.bf16.mxu0 0
    %1086 = vmatmul.mubr.bf16.gmra.mxu0 %v863
    %v1087 = vpop.f32.mrf.mxu0
    %v1088 = vadd.f32 %v790, %v1087
    %v1089 = vpop.f32.mrf.mxu0
    %v1090 = vpop.f32.mrf.mxu0
    %v1091 = vadd.f32 %v790, %v1090
    %v1092 = vpop.f32.mrf.mxu0
    %1093 = vmatprep.mubr.bf16.mxu0 0
    %1094 = vmatmul.mubr.bf16.gmra.mxu0 %v866
    %v1095 = vpop.f32.mrf.mxu0
    %v1096 = vadd.f32 %v790, %v1095
    %v1097 = vpop.f32.mrf.mxu0
    %v1098 = vpop.f32.mrf.mxu0
    %v1099 = vadd.f32 %v790, %v1098
    %v1100 = vpop.f32.mrf.mxu0
    %1101 = vmatprep.mubr.bf16.mxu0 0
    %1102 = vmatmul.mubr.bf16.gmra.mxu0 %v869
    %v1103 = vpop.f32.mrf.mxu0
    %v1104 = vadd.f32 %v790, %v1103
    %v1105 = vpop.f32.mrf.mxu0
    %v1106 = vpop.f32.mrf.mxu0
    %v1107 = vadd.f32 %v790, %v1106
    %v1108 = vpop.f32.mrf.mxu0
    %1109 = vmatprep.mubr.bf16.mxu0 0
    %1110 = vmatmul.mubr.bf16.gmra.mxu0 %v872
    %v1111 = vpop.f32.mrf.mxu0
    %v1112 = vadd.f32 %v790, %v1111
    %v1113 = vpop.f32.mrf.mxu0
    %v1114 = vpop.f32.mrf.mxu0
    %v1115 = vadd.f32 %v790, %v1114
    %v1116 = vpop.f32.mrf.mxu0
    %1117 = vmatprep.mubr.bf16.mxu0 0
    %1118 = vmatmul.mubr.bf16.gmra.mxu0 %v875
    %v1119 = vpop.f32.mrf.mxu0
    %v1120 = vadd.f32 %v790, %v1119
    %v1121 = vpop.f32.mrf.mxu0
    %v1122 = vpop.f32.mrf.mxu0
    %v1123 = vadd.f32 %v790, %v1122
    %v1124 = vpop.f32.mrf.mxu0
    %1125 = vmatprep.mubr.bf16.mxu0 0
    %1126 = vmatmul.mubr.bf16.gmra.mxu0 %v878
    %v1127 = vpop.f32.mrf.mxu0
    %v1128 = vadd.f32 %v790, %v1127
    %v1129 = vpop.f32.mrf.mxu0
    %v1130 = vpop.f32.mrf.mxu0
    %v1131 = vadd.f32 %v790, %v1130
    %v1132 = vpop.f32.mrf.mxu0
    %1133 = vmatprep.mubr.bf16.mxu0 0
    %1134 = vmatmul.mubr.bf16.gmra.mxu0 %v881
    %v1135 = vpop.f32.mrf.mxu0
    %v1136 = vadd.f32 %v790, %v1135
    %v1137 = vpop.f32.mrf.mxu0
    %v1138 = vpop.f32.mrf.mxu0
    %v1139 = vadd.f32 %v790, %v1138
    %v1140 = vpop.f32.mrf.mxu0
    %1141 = vmatprep.mubr.bf16.mxu0 0
    %1142 = vmatmul.mubr.bf16.gmra.mxu0 %v884
    %v1143 = vpop.f32.mrf.mxu0
    %v1144 = vadd.f32 %v790, %v1143
    %v1145 = vpop.f32.mrf.mxu0
    %v1146 = vpop.f32.mrf.mxu0
    %v1147 = vadd.f32 %v790, %v1146
    %v1148 = vpop.f32.mrf.mxu0
    %1149 = vmatprep.mubr.bf16.mxu0 0
    %1150 = vmatmul.mubr.bf16.gmra.mxu0 %v887
    %v1151 = vpop.f32.mrf.mxu0
    %v1152 = vadd.f32 %v790, %v1151
    %v1153 = vpop.f32.mrf.mxu0
    %v1154 = vpop.f32.mrf.mxu0
    %v1155 = vadd.f32 %v790, %v1154
    %v1156 = vpop.f32.mrf.mxu0
    %1157 = vmatprep.mubr.bf16.mxu0 0
    %1158 = vmatmul.mubr.bf16.gmra.mxu0 %v890
    %v1159 = vpop.f32.mrf.mxu0
    %v1160 = vadd.f32 %v790, %v1159
    %v1161 = vpop.f32.mrf.mxu0
    %v1162 = vpop.f32.mrf.mxu0
    %v1163 = vadd.f32 %v790, %v1162
    %v1164 = vpop.f32.mrf.mxu0
    %1165 = vmatprep.mubr.bf16.mxu0 0
    %1166 = vmatmul.mubr.bf16.gmra.mxu0 %v893
    %v1167 = vpop.f32.mrf.mxu0
    %v1168 = vadd.f32 %v790, %v1167
    %v1169 = vpop.f32.mrf.mxu0
    %v1170 = vpop.f32.mrf.mxu0
    %v1171 = vadd.f32 %v790, %v1170
    %v1172 = vpop.f32.mrf.mxu0
    %1173 = vmatprep.mubr.bf16.mxu0 0
    %1174 = vmatmul.mubr.bf16.gmra.mxu0 %v896
    %v1175 = vpop.f32.mrf.mxu0
    %v1176 = vadd.f32 %v790, %v1175
    %v1177 = vpop.f32.mrf.mxu0
    %v1178 = vpop.f32.mrf.mxu0
    %v1179 = vadd.f32 %v790, %v1178
    %v1180 = vpop.f32.mrf.mxu0
    %1181 = vmatprep.mubr.bf16.mxu0 0
    %1182 = vmatmul.mubr.bf16.gmra.mxu0 %v899
    %v1183 = vpop.f32.mrf.mxu0
    %v1184 = vadd.f32 %v790, %v1183
    %v1185 = vpop.f32.mrf.mxu0
    %v1186 = vpop.f32.mrf.mxu0
    %v1187 = vadd.f32 %v790, %v1186
    %v1188 = vpop.f32.mrf.mxu0
    %1189 = vdwg.mxu0
    %v1190 = vmax.f32 %v936, 0.0
    %v1191 = vmax.f32 %v939, 0.0
    %v1192 = vmax.f32 %v944, 0.0
    %v1193 = vmax.f32 %v947, 0.0
    %v1194 = vmax.f32 %v952, 0.0
    %v1195 = vmax.f32 %v955, 0.0
    %v1196 = vmax.f32 %v960, 0.0
    %v1197 = vmax.f32 %v963, 0.0
    %v1198 = vmax.f32 %v968, 0.0
    %v1199 = vmax.f32 %v971, 0.0
    %v1200 = vmax.f32 %v976, 0.0
    %v1201 = vmax.f32 %v979, 0.0
    %v1202 = vmax.f32 %v984, 0.0
    %v1203 = vmax.f32 %v987, 0.0
    %v1204 = vmax.f32 %v992, 0.0
    %v1205 = vmax.f32 %v995, 0.0
    %v1206 = vmax.f32 %v1000, 0.0
    %v1207 = vmax.f32 %v1003, 0.0
    %v1208 = vmax.f32 %v1008, 0.0
    %v1209 = vmax.f32 %v1011, 0.0
    %v1210 = vmax.f32 %v1016, 0.0
    %v1211 = vmax.f32 %v1019, 0.0
    %v1212 = vmax.f32 %v1024, 0.0
    %v1213 = vmax.f32 %v1027, 0.0
    %v1214 = vmax.f32 %v1032, 0.0
    %v1215 = vmax.f32 %v1035, 0.0
    %v1216 = vmax.f32 %v1040, 0.0
    %v1217 = vmax.f32 %v1043, 0.0
    %v1218 = vmax.f32 %v1048, 0.0
    %v1219 = vmax.f32 %v1051, 0.0
    %v1220 = vmax.f32 %v1056, 0.0
    %v1221 = vmax.f32 %v1059, 0.0
    %v1222 = vmax.f32 %v1064, 0.0
    %v1223 = vmax.f32 %v1067, 0.0
    %v1224 = vmax.f32 %v1072, 0.0
    %v1225 = vmax.f32 %v1075, 0.0
    %v1226 = vmax.f32 %v1080, 0.0
    %v1227 = vmax.f32 %v1083, 0.0
    %v1228 = vmax.f32 %v1088, 0.0
    %v1229 = vmax.f32 %v1091, 0.0
    %v1230 = vmax.f32 %v1096, 0.0
    %v1231 = vmax.f32 %v1099, 0.0
    %v1232 = vmax.f32 %v1104, 0.0
    %v1233 = vmax.f32 %v1107, 0.0
    %v1234 = vmax.f32 %v1112, 0.0
    %v1235 = vmax.f32 %v1115, 0.0
    %v1236 = vmax.f32 %v1120, 0.0
    %v1237 = vmax.f32 %v1123, 0.0
    %v1238 = vmax.f32 %v1128, 0.0
    %v1239 = vmax.f32 %v1131, 0.0
    %v1240 = vmax.f32 %v1136, 0.0
    %v1241 = vmax.f32 %v1139, 0.0
    %v1242 = vmax.f32 %v1144, 0.0
    %v1243 = vmax.f32 %v1147, 0.0
    %v1244 = vmax.f32 %v1152, 0.0
    %v1245 = vmax.f32 %v1155, 0.0
    %v1246 = vmax.f32 %v1160, 0.0
    %v1247 = vmax.f32 %v1163, 0.0
    %v1248 = vmax.f32 %v1168, 0.0
    %v1249 = vmax.f32 %v1171, 0.0
    %v1250 = vmax.f32 %v1176, 0.0
    %v1251 = vmax.f32 %v1179, 0.0
    %v1252 = vmax.f32 %v1184, 0.0
    %v1253 = vmax.f32 %v1187, 0.0
    %v1254 = vld [vmem:[%s7] sm:$0x1]
    %v1256 = vlaneseq
    %v1257 = vshrl.u32 %v1256, 7
    %v1258 = vsub.s32 0, %v1257
    %v1259 = vrot.slane %v1254, %v1258
    %v1261 = vmul.f32 %v685, %v1259
    %v1262 = vmul.f32 %v686, %v1259
    %v1263 = vmul.f32 %v687, %v1259
    %v1264 = vmul.f32 %v688, %v1259
    %v1265 = vmul.f32 %v689, %v1259
    %v1266 = vmul.f32 %v690, %v1259
    %v1267 = vmul.f32 %v691, %v1259
    %v1268 = vmul.f32 %v692, %v1259
    %v1269 = vmul.f32 %v693, %v1259
    %v1270 = vmul.f32 %v694, %v1259
    %v1271 = vmul.f32 %v695, %v1259
    %v1272 = vmul.f32 %v696, %v1259
    %v1273 = vmul.f32 %v697, %v1259
    %v1274 = vmul.f32 %v698, %v1259
    %v1275 = vmul.f32 %v699, %v1259
    %v1276 = vmul.f32 %v700, %v1259
    %v1277 = vmul.f32 %v701, %v1259
    %v1278 = vmul.f32 %v702, %v1259
    %v1279 = vmul.f32 %v703, %v1259
    %v1280 = vmul.f32 %v704, %v1259
    %v1281 = vmul.f32 %v705, %v1259
    %v1282 = vmul.f32 %v706, %v1259
    %v1283 = vmul.f32 %v707, %v1259
    %v1284 = vmul.f32 %v708, %v1259
    %v1285 = vmul.f32 %v709, %v1259
    %v1286 = vmul.f32 %v710, %v1259
    %v1287 = vmul.f32 %v711, %v1259
    %v1288 = vmul.f32 %v712, %v1259
    %v1289 = vmul.f32 %v713, %v1259
    %v1290 = vmul.f32 %v714, %v1259
    %v1291 = vmul.f32 %v715, %v1259
    %v1292 = vmul.f32 %v716, %v1259
    %v1293 = vmul.f32 %v717, %v1259
    %v1294 = vmul.f32 %v718, %v1259
    %v1295 = vmul.f32 %v719, %v1259
    %v1296 = vmul.f32 %v720, %v1259
    %v1297 = vmul.f32 %v721, %v1259
    %v1298 = vmul.f32 %v722, %v1259
    %v1299 = vmul.f32 %v723, %v1259
    %v1300 = vmul.f32 %v724, %v1259
    %v1301 = vmul.f32 %v725, %v1259
    %v1302 = vmul.f32 %v726, %v1259
    %v1303 = vmul.f32 %v727, %v1259
    %v1304 = vmul.f32 %v728, %v1259
    %v1305 = vmul.f32 %v729, %v1259
    %v1306 = vmul.f32 %v730, %v1259
    %v1307 = vmul.f32 %v731, %v1259
    %v1308 = vmul.f32 %v732, %v1259
    %v1309 = vmul.f32 %v733, %v1259
    %v1310 = vmul.f32 %v734, %v1259
    %v1311 = vmul.f32 %v735, %v1259
    %v1312 = vmul.f32 %v736, %v1259
    %v1313 = vmul.f32 %v737, %v1259
    %v1314 = vmul.f32 %v738, %v1259
    %v1315 = vmul.f32 %v739, %v1259
    %v1316 = vmul.f32 %v740, %v1259
    %v1317 = vmul.f32 %v741, %v1259
    %v1318 = vmul.f32 %v742, %v1259
    %v1319 = vmul.f32 %v743, %v1259
    %v1320 = vmul.f32 %v744, %v1259
    %v1321 = vmul.f32 %v745, %v1259
    %v1322 = vmul.f32 %v746, %v1259
    %v1323 = vmul.f32 %v747, %v1259
    %v1324 = vmul.f32 %v748, %v1259
    %v1325 = vld [vmem:[%s8] sm:$0x1]
    %v1327 = vlaneseq
    %v1328 = vshrl.u32 %v1327, 7
    %v1329 = vsub.s32 0, %v1328
    %v1330 = vrot.slane %v1325, %v1329
    %v1332 = vadd.f32 %v1261, %v1330
    %v1333 = vadd.f32 %v1262, %v1330
    %v1334 = vadd.f32 %v1263, %v1330
    %v1335 = vadd.f32 %v1264, %v1330
    %v1336 = vadd.f32 %v1265, %v1330
    %v1337 = vadd.f32 %v1266, %v1330
    %v1338 = vadd.f32 %v1267, %v1330
    %v1339 = vadd.f32 %v1268, %v1330
    %v1340 = vadd.f32 %v1269, %v1330
    %v1341 = vadd.f32 %v1270, %v1330
    %v1342 = vadd.f32 %v1271, %v1330
    %v1343 = vadd.f32 %v1272, %v1330
    %v1344 = vadd.f32 %v1273, %v1330
    %v1345 = vadd.f32 %v1274, %v1330
    %v1346 = vadd.f32 %v1275, %v1330
    %v1347 = vadd.f32 %v1276, %v1330
    %v1348 = vadd.f32 %v1277, %v1330
    %v1349 = vadd.f32 %v1278, %v1330
    %v1350 = vadd.f32 %v1279, %v1330
    %v1351 = vadd.f32 %v1280, %v1330
    %v1352 = vadd.f32 %v1281, %v1330
    %v1353 = vadd.f32 %v1282, %v1330
    %v1354 = vadd.f32 %v1283, %v1330
    %v1355 = vadd.f32 %v1284, %v1330
    %v1356 = vadd.f32 %v1285, %v1330
    %v1357 = vadd.f32 %v1286, %v1330
    %v1358 = vadd.f32 %v1287, %v1330
    %v1359 = vadd.f32 %v1288, %v1330
    %v1360 = vadd.f32 %v1289, %v1330
    %v1361 = vadd.f32 %v1290, %v1330
    %v1362 = vadd.f32 %v1291, %v1330
    %v1363 = vadd.f32 %v1292, %v1330
    %v1364 = vadd.f32 %v1293, %v1330
    %v1365 = vadd.f32 %v1294, %v1330
    %v1366 = vadd.f32 %v1295, %v1330
    %v1367 = vadd.f32 %v1296, %v1330
    %v1368 = vadd.f32 %v1297, %v1330
    %v1369 = vadd.f32 %v1298, %v1330
    %v1370 = vadd.f32 %v1299, %v1330
    %v1371 = vadd.f32 %v1300, %v1330
    %v1372 = vadd.f32 %v1301, %v1330
    %v1373 = vadd.f32 %v1302, %v1330
    %v1374 = vadd.f32 %v1303, %v1330
    %v1375 = vadd.f32 %v1304, %v1330
    %v1376 = vadd.f32 %v1305, %v1330
    %v1377 = vadd.f32 %v1306, %v1330
    %v1378 = vadd.f32 %v1307, %v1330
    %v1379 = vadd.f32 %v1308, %v1330
    %v1380 = vadd.f32 %v1309, %v1330
    %v1381 = vadd.f32 %v1310, %v1330
    %v1382 = vadd.f32 %v1311, %v1330
    %v1383 = vadd.f32 %v1312, %v1330
    %v1384 = vadd.f32 %v1313, %v1330
    %v1385 = vadd.f32 %v1314, %v1330
    %v1386 = vadd.f32 %v1315, %v1330
    %v1387 = vadd.f32 %v1316, %v1330
    %v1388 = vadd.f32 %v1317, %v1330
    %v1389 = vadd.f32 %v1318, %v1330
    %v1390 = vadd.f32 %v1319, %v1330
    %v1391 = vadd.f32 %v1320, %v1330
    %v1392 = vadd.f32 %v1321, %v1330
    %v1393 = vadd.f32 %v1322, %v1330
    %v1394 = vadd.f32 %v1323, %v1330
    %v1395 = vadd.f32 %v1324, %v1330
    %v1396 = vpack.c.bf16 %v1191, %v1190
    %v1397 = vpack.c.bf16 %v1193, %v1192
    %v1398 = vpack.c.bf16 %v1195, %v1194
    %v1399 = vpack.c.bf16 %v1197, %v1196
    %v1400 = vpack.c.bf16 %v1199, %v1198
    %v1401 = vpack.c.bf16 %v1201, %v1200
    %v1402 = vpack.c.bf16 %v1203, %v1202
    %v1403 = vpack.c.bf16 %v1205, %v1204
    %v1404 = vpack.c.bf16 %v1207, %v1206
    %v1405 = vpack.c.bf16 %v1209, %v1208
    %v1406 = vpack.c.bf16 %v1211, %v1210
    %v1407 = vpack.c.bf16 %v1213, %v1212
    %v1408 = vpack.c.bf16 %v1215, %v1214
    %v1409 = vpack.c.bf16 %v1217, %v1216
    %v1410 = vpack.c.bf16 %v1219, %v1218
    %v1411 = vpack.c.bf16 %v1221, %v1220
    %v1412 = vpack.c.bf16 %v1223, %v1222
    %v1413 = vpack.c.bf16 %v1225, %v1224
    %v1414 = vpack.c.bf16 %v1227, %v1226
    %v1415 = vpack.c.bf16 %v1229, %v1228
    %v1416 = vpack.c.bf16 %v1231, %v1230
    %v1417 = vpack.c.bf16 %v1233, %v1232
    %v1418 = vpack.c.bf16 %v1235, %v1234
    %v1419 = vpack.c.bf16 %v1237, %v1236
    %v1420 = vpack.c.bf16 %v1239, %v1238
    %v1421 = vpack.c.bf16 %v1241, %v1240
    %v1422 = vpack.c.bf16 %v1243, %v1242
    %v1423 = vpack.c.bf16 %v1245, %v1244
    %v1424 = vpack.c.bf16 %v1247, %v1246
    %v1425 = vpack.c.bf16 %v1249, %v1248
    %v1426 = vpack.c.bf16 %v1251, %v1250
    %v1427 = vpack.c.bf16 %v1253, %v1252
    %v1428 = vld [vmem:[%s5] sm:$0xf]
    %v1429 = vld [vmem:[%s5 + $0x4] sm:$0xf]
    %v1430 = vld [vmem:[%s5 + $0x8] sm:$0xf]
    %v1431 = vld [vmem:[%s5 + $0xc] sm:$0xf]
    %v1432 = vld [vmem:[%s6] sm:$0x1]
    %v1434 = vlaneseq
    %v1435 = vshrl.u32 %v1434, 7
    %v1436 = vsub.s32 0, %v1435
    %v1437 = vrot.slane %v1432, %v1436
    %v1443 = vunpack.c.l.b16 %v1428
    %v1444 = vunpack.c.l.b16 %v1429
    %v1445 = vunpack.c.l.b16 %v1430
    %v1446 = vunpack.c.l.b16 %v1431
    %v1447 = vpack.c.b16 %v1444, %v1443
    %v1448 = vpack.c.b16 %v1446, %v1445
    %v1452 = vsel %vm804, %v1396, 0
    %v1455 = vsel %vm804, %v1397, 0
    %v1458 = vsel %vm804, %v1398, 0
    %v1461 = vsel %vm804, %v1399, 0
    %v1464 = vsel %vm804, %v1400, 0
    %v1467 = vsel %vm804, %v1401, 0
    %v1470 = vsel %vm804, %v1402, 0
    %v1473 = vsel %vm804, %v1403, 0
    %v1476 = vsel %vm804, %v1404, 0
    %v1479 = vsel %vm804, %v1405, 0
    %v1482 = vsel %vm804, %v1406, 0
    %v1485 = vsel %vm804, %v1407, 0
    %v1488 = vsel %vm804, %v1408, 0
    %v1491 = vsel %vm804, %v1409, 0
    %v1494 = vsel %vm804, %v1410, 0
    %v1497 = vsel %vm804, %v1411, 0
    %v1500 = vsel %vm804, %v1412, 0
    %v1503 = vsel %vm804, %v1413, 0
    %v1506 = vsel %vm804, %v1414, 0
    %v1509 = vsel %vm804, %v1415, 0
    %v1512 = vsel %vm804, %v1416, 0
    %v1515 = vsel %vm804, %v1417, 0
    %v1518 = vsel %vm804, %v1418, 0
    %v1521 = vsel %vm804, %v1419, 0
    %v1524 = vsel %vm804, %v1420, 0
    %v1527 = vsel %vm804, %v1421, 0
    %v1530 = vsel %vm804, %v1422, 0
    %v1533 = vsel %vm804, %v1423, 0
    %v1536 = vsel %vm804, %v1424, 0
    %v1539 = vsel %vm804, %v1425, 0
    %v1542 = vsel %vm804, %v1426, 0
    %v1545 = vsel %vm804, %v1427, 0
    %1547 = vmatprep.subr.bf16.mxu0 0
    %1548 = vmatpush1.bf16.msra.mxu0 0
    %1549 = vmatprep.subr.bf16.mxu0 0
    %1550 = vmatpush1.bf16.msra.mxu0 0
    %1551 = vmatprep.subr.bf16.mxu0 0
    %1552 = vmatpush1.bf16.msra.mxu0 0
    %1553 = vmatprep.subr.bf16.mxu0 0
    %1554 = vmatpush1.bf16.msra.mxu0 0
    %1555 = vmatprep.subr.bf16.mxu0 0
    %1556 = vmatpush1.bf16.msra.mxu0 0
    %1557 = vmatprep.subr.bf16.mxu0 0
    %1558 = vmatpush1.bf16.msra.mxu0 0
    %1559 = vmatprep.subr.bf16.mxu0 0
    %1560 = vmatpush1.bf16.msra.mxu0 %v1448
    %1561 = vmatprep.subr.bf16.mxu0 0
    %1562 = vmatpush1.bf16.msra.mxu0 %v1447
    %1563 = vmatprep.subr.bf16.mxu0 0
    %1564 = vmatpush2.bf16.msra.mxu0 0
    %1565 = vmatprep.subr.bf16.mxu0 0
    %1566 = vmatpush2.bf16.msra.mxu0 0
    %1567 = vmatprep.subr.bf16.mxu0 0
    %1568 = vmatpush2.bf16.msra.mxu0 0
    %1569 = vmatprep.subr.bf16.mxu0 0
    %1570 = vmatpush2.bf16.msra.mxu0 0
    %1571 = vmatprep.subr.bf16.mxu0 0
    %1572 = vmatpush2.bf16.msra.mxu0 0
    %1573 = vmatprep.subr.bf16.mxu0 0
    %1574 = vmatpush2.bf16.msra.mxu0 0
    %1575 = vmatprep.subr.bf16.mxu0 0
    %1576 = vmatpush2.bf16.msra.mxu0 0
    %1577 = vmatprep.subr.bf16.mxu0 0
    %1578 = vmatpush2.bf16.msra.mxu0 0
    %1579 = vmatprep.mubr.bf16.mxu0 0
    %1580 = vmatmul.mubr.bf16.gmra.mxu0 %v1452
    %v1581 = vpop.f32.mrf.mxu0
    %v1582 = vadd.f32 %v1437, %v1581
    %v1583 = vpop.f32.mrf.mxu0
    %v1584 = vpop.f32.mrf.mxu0
    %v1585 = vadd.f32 %v1437, %v1584
    %v1586 = vpop.f32.mrf.mxu0
    %1587 = vmatprep.mubr.bf16.mxu0 0
    %1588 = vmatmul.mubr.bf16.gmra.mxu0 %v1455
    %v1589 = vpop.f32.mrf.mxu0
    %v1590 = vadd.f32 %v1437, %v1589
    %v1591 = vpop.f32.mrf.mxu0
    %v1592 = vpop.f32.mrf.mxu0
    %v1593 = vadd.f32 %v1437, %v1592
    %v1594 = vpop.f32.mrf.mxu0
    %1595 = vmatprep.mubr.bf16.mxu0 0
    %1596 = vmatmul.mubr.bf16.gmra.mxu0 %v1458
    %v1597 = vpop.f32.mrf.mxu0
    %v1598 = vadd.f32 %v1437, %v1597
    %v1599 = vpop.f32.mrf.mxu0
    %v1600 = vpop.f32.mrf.mxu0
    %v1601 = vadd.f32 %v1437, %v1600
    %v1602 = vpop.f32.mrf.mxu0
    %1603 = vmatprep.mubr.bf16.mxu0 0
    %1604 = vmatmul.mubr.bf16.gmra.mxu0 %v1461
    %v1605 = vpop.f32.mrf.mxu0
    %v1606 = vadd.f32 %v1437, %v1605
    %v1607 = vpop.f32.mrf.mxu0
    %v1608 = vpop.f32.mrf.mxu0
    %v1609 = vadd.f32 %v1437, %v1608
    %v1610 = vpop.f32.mrf.mxu0
    %1611 = vmatprep.mubr.bf16.mxu0 0
    %1612 = vmatmul.mubr.bf16.gmra.mxu0 %v1464
    %v1613 = vpop.f32.mrf.mxu0
    %v1614 = vadd.f32 %v1437, %v1613
    %v1615 = vpop.f32.mrf.mxu0
    %v1616 = vpop.f32.mrf.mxu0
    %v1617 = vadd.f32 %v1437, %v1616
    %v1618 = vpop.f32.mrf.mxu0
    %1619 = vmatprep.mubr.bf16.mxu0 0
    %1620 = vmatmul.mubr.bf16.gmra.mxu0 %v1467
    %v1621 = vpop.f32.mrf.mxu0
    %v1622 = vadd.f32 %v1437, %v1621
    %v1623 = vpop.f32.mrf.mxu0
    %v1624 = vpop.f32.mrf.mxu0
    %v1625 = vadd.f32 %v1437, %v1624
    %v1626 = vpop.f32.mrf.mxu0
    %1627 = vmatprep.mubr.bf16.mxu0 0
    %1628 = vmatmul.mubr.bf16.gmra.mxu0 %v1470
    %v1629 = vpop.f32.mrf.mxu0
    %v1630 = vadd.f32 %v1437, %v1629
    %v1631 = vpop.f32.mrf.mxu0
    %v1632 = vpop.f32.mrf.mxu0
    %v1633 = vadd.f32 %v1437, %v1632
    %v1634 = vpop.f32.mrf.mxu0
    %1635 = vmatprep.mubr.bf16.mxu0 0
    %1636 = vmatmul.mubr.bf16.gmra.mxu0 %v1473
    %v1637 = vpop.f32.mrf.mxu0
    %v1638 = vadd.f32 %v1437, %v1637
    %v1639 = vpop.f32.mrf.mxu0
    %v1640 = vpop.f32.mrf.mxu0
    %v1641 = vadd.f32 %v1437, %v1640
    %v1642 = vpop.f32.mrf.mxu0
    %1643 = vmatprep.mubr.bf16.mxu0 0
    %1644 = vmatmul.mubr.bf16.gmra.mxu0 %v1476
    %v1645 = vpop.f32.mrf.mxu0
    %v1646 = vadd.f32 %v1437, %v1645
    %v1647 = vpop.f32.mrf.mxu0
    %v1648 = vpop.f32.mrf.mxu0
    %v1649 = vadd.f32 %v1437, %v1648
    %v1650 = vpop.f32.mrf.mxu0
    %1651 = vmatprep.mubr.bf16.mxu0 0
    %1652 = vmatmul.mubr.bf16.gmra.mxu0 %v1479
    %v1653 = vpop.f32.mrf.mxu0
    %v1654 = vadd.f32 %v1437, %v1653
    %v1655 = vpop.f32.mrf.mxu0
    %v1656 = vpop.f32.mrf.mxu0
    %v1657 = vadd.f32 %v1437, %v1656
    %v1658 = vpop.f32.mrf.mxu0
    %1659 = vmatprep.mubr.bf16.mxu0 0
    %1660 = vmatmul.mubr.bf16.gmra.mxu0 %v1482
    %v1661 = vpop.f32.mrf.mxu0
    %v1662 = vadd.f32 %v1437, %v1661
    %v1663 = vpop.f32.mrf.mxu0
    %v1664 = vpop.f32.mrf.mxu0
    %v1665 = vadd.f32 %v1437, %v1664
    %v1666 = vpop.f32.mrf.mxu0
    %1667 = vmatprep.mubr.bf16.mxu0 0
    %1668 = vmatmul.mubr.bf16.gmra.mxu0 %v1485
    %v1669 = vpop.f32.mrf.mxu0
    %v1670 = vadd.f32 %v1437, %v1669
    %v1671 = vpop.f32.mrf.mxu0
    %v1672 = vpop.f32.mrf.mxu0
    %v1673 = vadd.f32 %v1437, %v1672
    %v1674 = vpop.f32.mrf.mxu0
    %1675 = vmatprep.mubr.bf16.mxu0 0
    %1676 = vmatmul.mubr.bf16.gmra.mxu0 %v1488
    %v1677 = vpop.f32.mrf.mxu0
    %v1678 = vadd.f32 %v1437, %v1677
    %v1679 = vpop.f32.mrf.mxu0
    %v1680 = vpop.f32.mrf.mxu0
    %v1681 = vadd.f32 %v1437, %v1680
    %v1682 = vpop.f32.mrf.mxu0
    %1683 = vmatprep.mubr.bf16.mxu0 0
    %1684 = vmatmul.mubr.bf16.gmra.mxu0 %v1491
    %v1685 = vpop.f32.mrf.mxu0
    %v1686 = vadd.f32 %v1437, %v1685
    %v1687 = vpop.f32.mrf.mxu0
    %v1688 = vpop.f32.mrf.mxu0
    %v1689 = vadd.f32 %v1437, %v1688
    %v1690 = vpop.f32.mrf.mxu0
    %1691 = vmatprep.mubr.bf16.mxu0 0
    %1692 = vmatmul.mubr.bf16.gmra.mxu0 %v1494
    %v1693 = vpop.f32.mrf.mxu0
    %v1694 = vadd.f32 %v1437, %v1693
    %v1695 = vpop.f32.mrf.mxu0
    %v1696 = vpop.f32.mrf.mxu0
    %v1697 = vadd.f32 %v1437, %v1696
    %v1698 = vpop.f32.mrf.mxu0
    %1699 = vmatprep.mubr.bf16.mxu0 0
    %1700 = vmatmul.mubr.bf16.gmra.mxu0 %v1497
    %v1701 = vpop.f32.mrf.mxu0
    %v1702 = vadd.f32 %v1437, %v1701
    %v1703 = vpop.f32.mrf.mxu0
    %v1704 = vpop.f32.mrf.mxu0
    %v1705 = vadd.f32 %v1437, %v1704
    %v1706 = vpop.f32.mrf.mxu0
    %1707 = vmatprep.mubr.bf16.mxu0 0
    %1708 = vmatmul.mubr.bf16.gmra.mxu0 %v1500
    %v1709 = vpop.f32.mrf.mxu0
    %v1710 = vadd.f32 %v1437, %v1709
    %v1711 = vpop.f32.mrf.mxu0
    %v1712 = vpop.f32.mrf.mxu0
    %v1713 = vadd.f32 %v1437, %v1712
    %v1714 = vpop.f32.mrf.mxu0
    %1715 = vmatprep.mubr.bf16.mxu0 0
    %1716 = vmatmul.mubr.bf16.gmra.mxu0 %v1503
    %v1717 = vpop.f32.mrf.mxu0
    %v1718 = vadd.f32 %v1437, %v1717
    %v1719 = vpop.f32.mrf.mxu0
    %v1720 = vpop.f32.mrf.mxu0
    %v1721 = vadd.f32 %v1437, %v1720
    %v1722 = vpop.f32.mrf.mxu0
    %1723 = vmatprep.mubr.bf16.mxu0 0
    %1724 = vmatmul.mubr.bf16.gmra.mxu0 %v1506
    %v1725 = vpop.f32.mrf.mxu0
    %v1726 = vadd.f32 %v1437, %v1725
    %v1727 = vpop.f32.mrf.mxu0
    %v1728 = vpop.f32.mrf.mxu0
    %v1729 = vadd.f32 %v1437, %v1728
    %v1730 = vpop.f32.mrf.mxu0
    %1731 = vmatprep.mubr.bf16.mxu0 0
    %1732 = vmatmul.mubr.bf16.gmra.mxu0 %v1509
    %v1733 = vpop.f32.mrf.mxu0
    %v1734 = vadd.f32 %v1437, %v1733
    %v1735 = vpop.f32.mrf.mxu0
    %v1736 = vpop.f32.mrf.mxu0
    %v1737 = vadd.f32 %v1437, %v1736
    %v1738 = vpop.f32.mrf.mxu0
    %1739 = vmatprep.mubr.bf16.mxu0 0
    %1740 = vmatmul.mubr.bf16.gmra.mxu0 %v1512
    %v1741 = vpop.f32.mrf.mxu0
    %v1742 = vadd.f32 %v1437, %v1741
    %v1743 = vpop.f32.mrf.mxu0
    %v1744 = vpop.f32.mrf.mxu0
    %v1745 = vadd.f32 %v1437, %v1744
    %v1746 = vpop.f32.mrf.mxu0
    %1747 = vmatprep.mubr.bf16.mxu0 0
    %1748 = vmatmul.mubr.bf16.gmra.mxu0 %v1515
    %v1749 = vpop.f32.mrf.mxu0
    %v1750 = vadd.f32 %v1437, %v1749
    %v1751 = vpop.f32.mrf.mxu0
    %v1752 = vpop.f32.mrf.mxu0
    %v1753 = vadd.f32 %v1437, %v1752
    %v1754 = vpop.f32.mrf.mxu0
    %1755 = vmatprep.mubr.bf16.mxu0 0
    %1756 = vmatmul.mubr.bf16.gmra.mxu0 %v1518
    %v1757 = vpop.f32.mrf.mxu0
    %v1758 = vadd.f32 %v1437, %v1757
    %v1759 = vpop.f32.mrf.mxu0
    %v1760 = vpop.f32.mrf.mxu0
    %v1761 = vadd.f32 %v1437, %v1760
    %v1762 = vpop.f32.mrf.mxu0
    %1763 = vmatprep.mubr.bf16.mxu0 0
    %1764 = vmatmul.mubr.bf16.gmra.mxu0 %v1521
    %v1765 = vpop.f32.mrf.mxu0
    %v1766 = vadd.f32 %v1437, %v1765
    %v1767 = vpop.f32.mrf.mxu0
    %v1768 = vpop.f32.mrf.mxu0
    %v1769 = vadd.f32 %v1437, %v1768
    %v1770 = vpop.f32.mrf.mxu0
    %1771 = vmatprep.mubr.bf16.mxu0 0
    %1772 = vmatmul.mubr.bf16.gmra.mxu0 %v1524
    %v1773 = vpop.f32.mrf.mxu0
    %v1774 = vadd.f32 %v1437, %v1773
    %v1775 = vpop.f32.mrf.mxu0
    %v1776 = vpop.f32.mrf.mxu0
    %v1777 = vadd.f32 %v1437, %v1776
    %v1778 = vpop.f32.mrf.mxu0
    %1779 = vmatprep.mubr.bf16.mxu0 0
    %1780 = vmatmul.mubr.bf16.gmra.mxu0 %v1527
    %v1781 = vpop.f32.mrf.mxu0
    %v1782 = vadd.f32 %v1437, %v1781
    %v1783 = vpop.f32.mrf.mxu0
    %v1784 = vpop.f32.mrf.mxu0
    %v1785 = vadd.f32 %v1437, %v1784
    %v1786 = vpop.f32.mrf.mxu0
    %1787 = vmatprep.mubr.bf16.mxu0 0
    %1788 = vmatmul.mubr.bf16.gmra.mxu0 %v1530
    %v1789 = vpop.f32.mrf.mxu0
    %v1790 = vadd.f32 %v1437, %v1789
    %v1791 = vpop.f32.mrf.mxu0
    %v1792 = vpop.f32.mrf.mxu0
    %v1793 = vadd.f32 %v1437, %v1792
    %v1794 = vpop.f32.mrf.mxu0
    %1795 = vmatprep.mubr.bf16.mxu0 0
    %1796 = vmatmul.mubr.bf16.gmra.mxu0 %v1533
    %v1797 = vpop.f32.mrf.mxu0
    %v1798 = vadd.f32 %v1437, %v1797
    %v1799 = vpop.f32.mrf.mxu0
    %v1800 = vpop.f32.mrf.mxu0
    %v1801 = vadd.f32 %v1437, %v1800
    %v1802 = vpop.f32.mrf.mxu0
    %1803 = vmatprep.mubr.bf16.mxu0 0
    %1804 = vmatmul.mubr.bf16.gmra.mxu0 %v1536
    %v1805 = vpop.f32.mrf.mxu0
    %v1806 = vadd.f32 %v1437, %v1805
    %v1807 = vpop.f32.mrf.mxu0
    %v1808 = vpop.f32.mrf.mxu0
    %v1809 = vadd.f32 %v1437, %v1808
    %v1810 = vpop.f32.mrf.mxu0
    %1811 = vmatprep.mubr.bf16.mxu0 0
    %1812 = vmatmul.mubr.bf16.gmra.mxu0 %v1539
    %v1813 = vpop.f32.mrf.mxu0
    %v1814 = vadd.f32 %v1437, %v1813
    %v1815 = vpop.f32.mrf.mxu0
    %v1816 = vpop.f32.mrf.mxu0
    %v1817 = vadd.f32 %v1437, %v1816
    %v1818 = vpop.f32.mrf.mxu0
    %1819 = vmatprep.mubr.bf16.mxu0 0
    %1820 = vmatmul.mubr.bf16.gmra.mxu0 %v1542
    %v1821 = vpop.f32.mrf.mxu0
    %v1822 = vadd.f32 %v1437, %v1821
    %v1823 = vpop.f32.mrf.mxu0
    %v1824 = vpop.f32.mrf.mxu0
    %v1825 = vadd.f32 %v1437, %v1824
    %v1826 = vpop.f32.mrf.mxu0
    %1827 = vmatprep.mubr.bf16.mxu0 0
    %1828 = vmatmul.mubr.bf16.gmra.mxu0 %v1545
    %v1829 = vpop.f32.mrf.mxu0
    %v1830 = vadd.f32 %v1437, %v1829
    %v1831 = vpop.f32.mrf.mxu0
    %v1832 = vpop.f32.mrf.mxu0
    %v1833 = vadd.f32 %v1437, %v1832
    %v1834 = vpop.f32.mrf.mxu0
    %1835 = vdwg.mxu0
    %v1836 = vadd.f32 %v1582, %v1332
    %v1837 = vadd.f32 %v1585, %v1333
    %v1838 = vadd.f32 %v1590, %v1334
    %v1839 = vadd.f32 %v1593, %v1335
    %v1840 = vadd.f32 %v1598, %v1336
    %v1841 = vadd.f32 %v1601, %v1337
    %v1842 = vadd.f32 %v1606, %v1338
    %v1843 = vadd.f32 %v1609, %v1339
    %v1844 = vadd.f32 %v1614, %v1340
    %v1845 = vadd.f32 %v1617, %v1341
    %v1846 = vadd.f32 %v1622, %v1342
    %v1847 = vadd.f32 %v1625, %v1343
    %v1848 = vadd.f32 %v1630, %v1344
    %v1849 = vadd.f32 %v1633, %v1345
    %v1850 = vadd.f32 %v1638, %v1346
    %v1851 = vadd.f32 %v1641, %v1347
    %v1852 = vadd.f32 %v1646, %v1348
    %v1853 = vadd.f32 %v1649, %v1349
    %v1854 = vadd.f32 %v1654, %v1350
    %v1855 = vadd.f32 %v1657, %v1351
    %v1856 = vadd.f32 %v1662, %v1352
    %v1857 = vadd.f32 %v1665, %v1353
    %v1858 = vadd.f32 %v1670, %v1354
    %v1859 = vadd.f32 %v1673, %v1355
    %v1860 = vadd.f32 %v1678, %v1356
    %v1861 = vadd.f32 %v1681, %v1357
    %v1862 = vadd.f32 %v1686, %v1358
    %v1863 = vadd.f32 %v1689, %v1359
    %v1864 = vadd.f32 %v1694, %v1360
    %v1865 = vadd.f32 %v1697, %v1361
    %v1866 = vadd.f32 %v1702, %v1362
    %v1867 = vadd.f32 %v1705, %v1363
    %v1868 = vadd.f32 %v1710, %v1364
    %v1869 = vadd.f32 %v1713, %v1365
    %v1870 = vadd.f32 %v1718, %v1366
    %v1871 = vadd.f32 %v1721, %v1367
    %v1872 = vadd.f32 %v1726, %v1368
    %v1873 = vadd.f32 %v1729, %v1369
    %v1874 = vadd.f32 %v1734, %v1370
    %v1875 = vadd.f32 %v1737, %v1371
    %v1876 = vadd.f32 %v1742, %v1372
    %v1877 = vadd.f32 %v1745, %v1373
    %v1878 = vadd.f32 %v1750, %v1374
    %v1879 = vadd.f32 %v1753, %v1375
    %v1880 = vadd.f32 %v1758, %v1376
    %v1881 = vadd.f32 %v1761, %v1377
    %v1882 = vadd.f32 %v1766, %v1378
    %v1883 = vadd.f32 %v1769, %v1379
    %v1884 = vadd.f32 %v1774, %v1380
    %v1885 = vadd.f32 %v1777, %v1381
    %v1886 = vadd.f32 %v1782, %v1382
    %v1887 = vadd.f32 %v1785, %v1383
    %v1888 = vadd.f32 %v1790, %v1384
    %v1889 = vadd.f32 %v1793, %v1385
    %v1890 = vadd.f32 %v1798, %v1386
    %v1891 = vadd.f32 %v1801, %v1387
    %v1892 = vadd.f32 %v1806, %v1388
    %v1893 = vadd.f32 %v1809, %v1389
    %v1894 = vadd.f32 %v1814, %v1390
    %v1895 = vadd.f32 %v1817, %v1391
    %v1896 = vadd.f32 %v1822, %v1392
    %v1897 = vadd.f32 %v1825, %v1393
    %v1898 = vadd.f32 %v1830, %v1394
    %v1899 = vadd.f32 %v1833, %v1395
    %v1900 = vmax.f32 %v1836, 0.0
    %v1901 = vmax.f32 %v1837, 0.0
    %v1902 = vmax.f32 %v1838, 0.0
    %v1903 = vmax.f32 %v1839, 0.0
    %v1904 = vmax.f32 %v1840, 0.0
    %v1905 = vmax.f32 %v1841, 0.0
    %v1906 = vmax.f32 %v1842, 0.0
    %v1907 = vmax.f32 %v1843, 0.0
    %v1908 = vmax.f32 %v1844, 0.0
    %v1909 = vmax.f32 %v1845, 0.0
    %v1910 = vmax.f32 %v1846, 0.0
    %v1911 = vmax.f32 %v1847, 0.0
    %v1912 = vmax.f32 %v1848, 0.0
    %v1913 = vmax.f32 %v1849, 0.0
    %v1914 = vmax.f32 %v1850, 0.0
    %v1915 = vmax.f32 %v1851, 0.0
    %v1916 = vmax.f32 %v1852, 0.0
    %v1917 = vmax.f32 %v1853, 0.0
    %v1918 = vmax.f32 %v1854, 0.0
    %v1919 = vmax.f32 %v1855, 0.0
    %v1920 = vmax.f32 %v1856, 0.0
    %v1921 = vmax.f32 %v1857, 0.0
    %v1922 = vmax.f32 %v1858, 0.0
    %v1923 = vmax.f32 %v1859, 0.0
    %v1924 = vmax.f32 %v1860, 0.0
    %v1925 = vmax.f32 %v1861, 0.0
    %v1926 = vmax.f32 %v1862, 0.0
    %v1927 = vmax.f32 %v1863, 0.0
    %v1928 = vmax.f32 %v1864, 0.0
    %v1929 = vmax.f32 %v1865, 0.0
    %v1930 = vmax.f32 %v1866, 0.0
    %v1931 = vmax.f32 %v1867, 0.0
    %v1932 = vmax.f32 %v1868, 0.0
    %v1933 = vmax.f32 %v1869, 0.0
    %v1934 = vmax.f32 %v1870, 0.0
    %v1935 = vmax.f32 %v1871, 0.0
    %v1936 = vmax.f32 %v1872, 0.0
    %v1937 = vmax.f32 %v1873, 0.0
    %v1938 = vmax.f32 %v1874, 0.0
    %v1939 = vmax.f32 %v1875, 0.0
    %v1940 = vmax.f32 %v1876, 0.0
    %v1941 = vmax.f32 %v1877, 0.0
    %v1942 = vmax.f32 %v1878, 0.0
    %v1943 = vmax.f32 %v1879, 0.0
    %v1944 = vmax.f32 %v1880, 0.0
    %v1945 = vmax.f32 %v1881, 0.0
    %v1946 = vmax.f32 %v1882, 0.0
    %v1947 = vmax.f32 %v1883, 0.0
    %v1948 = vmax.f32 %v1884, 0.0
    %v1949 = vmax.f32 %v1885, 0.0
    %v1950 = vmax.f32 %v1886, 0.0
    %v1951 = vmax.f32 %v1887, 0.0
    %v1952 = vmax.f32 %v1888, 0.0
    %v1953 = vmax.f32 %v1889, 0.0
    %v1954 = vmax.f32 %v1890, 0.0
    %v1955 = vmax.f32 %v1891, 0.0
    %v1956 = vmax.f32 %v1892, 0.0
    %v1957 = vmax.f32 %v1893, 0.0
    %v1958 = vmax.f32 %v1894, 0.0
    %v1959 = vmax.f32 %v1895, 0.0
    %v1960 = vmax.f32 %v1896, 0.0
    %v1961 = vmax.f32 %v1897, 0.0
    %v1962 = vmax.f32 %v1898, 0.0
    %v1963 = vmax.f32 %v1899, 0.0
    %v1964 = vpack.c.bf16 %v1901, %v1900
    %v1965 = vpack.c.bf16 %v1903, %v1902
    %v1966 = vpack.c.bf16 %v1905, %v1904
    %v1967 = vpack.c.bf16 %v1907, %v1906
    %v1968 = vpack.c.bf16 %v1909, %v1908
    %v1969 = vpack.c.bf16 %v1911, %v1910
    %v1970 = vpack.c.bf16 %v1913, %v1912
    %v1971 = vpack.c.bf16 %v1915, %v1914
    %v1972 = vpack.c.bf16 %v1917, %v1916
    %v1973 = vpack.c.bf16 %v1919, %v1918
    %v1974 = vpack.c.bf16 %v1921, %v1920
    %v1975 = vpack.c.bf16 %v1923, %v1922
    %v1976 = vpack.c.bf16 %v1925, %v1924
    %v1977 = vpack.c.bf16 %v1927, %v1926
    %v1978 = vpack.c.bf16 %v1929, %v1928
    %v1979 = vpack.c.bf16 %v1931, %v1930
    %v1980 = vpack.c.bf16 %v1933, %v1932
    %v1981 = vpack.c.bf16 %v1935, %v1934
    %v1982 = vpack.c.bf16 %v1937, %v1936
    %v1983 = vpack.c.bf16 %v1939, %v1938
    %v1984 = vpack.c.bf16 %v1941, %v1940
    %v1985 = vpack.c.bf16 %v1943, %v1942
    %v1986 = vpack.c.bf16 %v1945, %v1944
    %v1987 = vpack.c.bf16 %v1947, %v1946
    %v1988 = vpack.c.bf16 %v1949, %v1948
    %v1989 = vpack.c.bf16 %v1951, %v1950
    %v1990 = vpack.c.bf16 %v1953, %v1952
    %v1991 = vpack.c.bf16 %v1955, %v1954
    %v1992 = vpack.c.bf16 %v1957, %v1956
    %v1993 = vpack.c.bf16 %v1959, %v1958
    %v1994 = vpack.c.bf16 %v1961, %v1960
    %v1995 = vpack.c.bf16 %v1963, %v1962
    %v1996 = vld [vmem:[%s9] sm:$0xf]
    %v1997 = vld [vmem:[%s9 + $0x4] sm:$0xf]
    %v1998 = vld [vmem:[%s9 + $0x8] sm:$0xf]
    %v1999 = vld [vmem:[%s9 + $0xc] sm:$0xf]
    %v2000 = vld [vmem:[%s10] sm:$0x1]
    %v2002 = vlaneseq
    %v2003 = vshrl.u32 %v2002, 7
    %v2004 = vsub.s32 0, %v2003
    %v2005 = vrot.slane %v2000, %v2004
    %v2011 = vunpack.c.l.b16 %v1996
    %v2012 = vunpack.c.l.b16 %v1997
    %v2013 = vunpack.c.l.b16 %v1998
    %v2014 = vunpack.c.l.b16 %v1999
    %v2015 = vpack.c.b16 %v2012, %v2011
    %v2016 = vpack.c.b16 %v2014, %v2013
    %v2020 = vsel %vm804, %v1964, 0
    %v2023 = vsel %vm804, %v1965, 0
    %v2026 = vsel %vm804, %v1966, 0
    %v2029 = vsel %vm804, %v1967, 0
    %v2032 = vsel %vm804, %v1968, 0
    %v2035 = vsel %vm804, %v1969, 0
    %v2038 = vsel %vm804, %v1970, 0
    %v2041 = vsel %vm804, %v1971, 0
    %v2044 = vsel %vm804, %v1972, 0
    %v2047 = vsel %vm804, %v1973, 0
    %v2050 = vsel %vm804, %v1974, 0
    %v2053 = vsel %vm804, %v1975, 0
    %v2056 = vsel %vm804, %v1976, 0
    %v2059 = vsel %vm804, %v1977, 0
    %v2062 = vsel %vm804, %v1978, 0
    %v2065 = vsel %vm804, %v1979, 0
    %v2068 = vsel %vm804, %v1980, 0
    %v2071 = vsel %vm804, %v1981, 0
    %v2074 = vsel %vm804, %v1982, 0
    %v2077 = vsel %vm804, %v1983, 0
    %v2080 = vsel %vm804, %v1984, 0
    %v2083 = vsel %vm804, %v1985, 0
    %v2086 = vsel %vm804, %v1986, 0
    %v2089 = vsel %vm804, %v1987, 0
    %v2092 = vsel %vm804, %v1988, 0
    %v2095 = vsel %vm804, %v1989, 0
    %v2098 = vsel %vm804, %v1990, 0
    %v2101 = vsel %vm804, %v1991, 0
    %v2104 = vsel %vm804, %v1992, 0
    %v2107 = vsel %vm804, %v1993, 0
    %v2110 = vsel %vm804, %v1994, 0
    %v2113 = vsel %vm804, %v1995, 0
    %2115 = vmatprep.subr.bf16.mxu0 0
    %2116 = vmatpush1.bf16.msra.mxu0 0
    %2117 = vmatprep.subr.bf16.mxu0 0
    %2118 = vmatpush1.bf16.msra.mxu0 0
    %2119 = vmatprep.subr.bf16.mxu0 0
    %2120 = vmatpush1.bf16.msra.mxu0 0
    %2121 = vmatprep.subr.bf16.mxu0 0
    %2122 = vmatpush1.bf16.msra.mxu0 0
    %2123 = vmatprep.subr.bf16.mxu0 0
    %2124 = vmatpush1.bf16.msra.mxu0 0
    %2125 = vmatprep.subr.bf16.mxu0 0
    %2126 = vmatpush1.bf16.msra.mxu0 0
    %2127 = vmatprep.subr.bf16.mxu0 0
    %2128 = vmatpush1.bf16.msra.mxu0 %v2016
    %2129 = vmatprep.subr.bf16.mxu0 0
    %2130 = vmatpush1.bf16.msra.mxu0 %v2015
    %2131 = vmatprep.subr.bf16.mxu0 0
    %2132 = vmatpush2.bf16.msra.mxu0 0
    %2133 = vmatprep.subr.bf16.mxu0 0
    %2134 = vmatpush2.bf16.msra.mxu0 0
    %2135 = vmatprep.subr.bf16.mxu0 0
    %2136 = vmatpush2.bf16.msra.mxu0 0
    %2137 = vmatprep.subr.bf16.mxu0 0
    %2138 = vmatpush2.bf16.msra.mxu0 0
    %2139 = vmatprep.subr.bf16.mxu0 0
    %2140 = vmatpush2.bf16.msra.mxu0 0
    %2141 = vmatprep.subr.bf16.mxu0 0
    %2142 = vmatpush2.bf16.msra.mxu0 0
    %2143 = vmatprep.subr.bf16.mxu0 0
    %2144 = vmatpush2.bf16.msra.mxu0 0
    %2145 = vmatprep.subr.bf16.mxu0 0
    %2146 = vmatpush2.bf16.msra.mxu0 0
    %2147 = vmatprep.mubr.bf16.mxu0 0
    %2148 = vmatmul.mubr.bf16.gmra.mxu0 %v2020
    %v2149 = vpop.f32.mrf.mxu0
    %v2150 = vadd.f32 %v2005, %v2149
    %v2151 = vpop.f32.mrf.mxu0
    %v2152 = vpop.f32.mrf.mxu0
    %v2153 = vadd.f32 %v2005, %v2152
    %v2154 = vpop.f32.mrf.mxu0
    %2155 = vmatprep.mubr.bf16.mxu0 0
    %2156 = vmatmul.mubr.bf16.gmra.mxu0 %v2023
    %v2157 = vpop.f32.mrf.mxu0
    %v2158 = vadd.f32 %v2005, %v2157
    %v2159 = vpop.f32.mrf.mxu0
    %v2160 = vpop.f32.mrf.mxu0
    %v2161 = vadd.f32 %v2005, %v2160
    %v2162 = vpop.f32.mrf.mxu0
    %2163 = vmatprep.mubr.bf16.mxu0 0
    %2164 = vmatmul.mubr.bf16.gmra.mxu0 %v2026
    %v2165 = vpop.f32.mrf.mxu0
    %v2166 = vadd.f32 %v2005, %v2165
    %v2167 = vpop.f32.mrf.mxu0
    %v2168 = vpop.f32.mrf.mxu0
    %v2169 = vadd.f32 %v2005, %v2168
    %v2170 = vpop.f32.mrf.mxu0
    %2171 = vmatprep.mubr.bf16.mxu0 0
    %2172 = vmatmul.mubr.bf16.gmra.mxu0 %v2029
    %v2173 = vpop.f32.mrf.mxu0
    %v2174 = vadd.f32 %v2005, %v2173
    %v2175 = vpop.f32.mrf.mxu0
    %v2176 = vpop.f32.mrf.mxu0
    %v2177 = vadd.f32 %v2005, %v2176
    %v2178 = vpop.f32.mrf.mxu0
    %2179 = vmatprep.mubr.bf16.mxu0 0
    %2180 = vmatmul.mubr.bf16.gmra.mxu0 %v2032
    %v2181 = vpop.f32.mrf.mxu0
    %v2182 = vadd.f32 %v2005, %v2181
    %v2183 = vpop.f32.mrf.mxu0
    %v2184 = vpop.f32.mrf.mxu0
    %v2185 = vadd.f32 %v2005, %v2184
    %v2186 = vpop.f32.mrf.mxu0
    %2187 = vmatprep.mubr.bf16.mxu0 0
    %2188 = vmatmul.mubr.bf16.gmra.mxu0 %v2035
    %v2189 = vpop.f32.mrf.mxu0
    %v2190 = vadd.f32 %v2005, %v2189
    %v2191 = vpop.f32.mrf.mxu0
    %v2192 = vpop.f32.mrf.mxu0
    %v2193 = vadd.f32 %v2005, %v2192
    %v2194 = vpop.f32.mrf.mxu0
    %2195 = vmatprep.mubr.bf16.mxu0 0
    %2196 = vmatmul.mubr.bf16.gmra.mxu0 %v2038
    %v2197 = vpop.f32.mrf.mxu0
    %v2198 = vadd.f32 %v2005, %v2197
    %v2199 = vpop.f32.mrf.mxu0
    %v2200 = vpop.f32.mrf.mxu0
    %v2201 = vadd.f32 %v2005, %v2200
    %v2202 = vpop.f32.mrf.mxu0
    %2203 = vmatprep.mubr.bf16.mxu0 0
    %2204 = vmatmul.mubr.bf16.gmra.mxu0 %v2041
    %v2205 = vpop.f32.mrf.mxu0
    %v2206 = vadd.f32 %v2005, %v2205
    %v2207 = vpop.f32.mrf.mxu0
    %v2208 = vpop.f32.mrf.mxu0
    %v2209 = vadd.f32 %v2005, %v2208
    %v2210 = vpop.f32.mrf.mxu0
    %2211 = vmatprep.mubr.bf16.mxu0 0
    %2212 = vmatmul.mubr.bf16.gmra.mxu0 %v2044
    %v2213 = vpop.f32.mrf.mxu0
    %v2214 = vadd.f32 %v2005, %v2213
    %v2215 = vpop.f32.mrf.mxu0
    %v2216 = vpop.f32.mrf.mxu0
    %v2217 = vadd.f32 %v2005, %v2216
    %v2218 = vpop.f32.mrf.mxu0
    %2219 = vmatprep.mubr.bf16.mxu0 0
    %2220 = vmatmul.mubr.bf16.gmra.mxu0 %v2047
    %v2221 = vpop.f32.mrf.mxu0
    %v2222 = vadd.f32 %v2005, %v2221
    %v2223 = vpop.f32.mrf.mxu0
    %v2224 = vpop.f32.mrf.mxu0
    %v2225 = vadd.f32 %v2005, %v2224
    %v2226 = vpop.f32.mrf.mxu0
    %2227 = vmatprep.mubr.bf16.mxu0 0
    %2228 = vmatmul.mubr.bf16.gmra.mxu0 %v2050
    %v2229 = vpop.f32.mrf.mxu0
    %v2230 = vadd.f32 %v2005, %v2229
    %v2231 = vpop.f32.mrf.mxu0
    %v2232 = vpop.f32.mrf.mxu0
    %v2233 = vadd.f32 %v2005, %v2232
    %v2234 = vpop.f32.mrf.mxu0
    %2235 = vmatprep.mubr.bf16.mxu0 0
    %2236 = vmatmul.mubr.bf16.gmra.mxu0 %v2053
    %v2237 = vpop.f32.mrf.mxu0
    %v2238 = vadd.f32 %v2005, %v2237
    %v2239 = vpop.f32.mrf.mxu0
    %v2240 = vpop.f32.mrf.mxu0
    %v2241 = vadd.f32 %v2005, %v2240
    %v2242 = vpop.f32.mrf.mxu0
    %2243 = vmatprep.mubr.bf16.mxu0 0
    %2244 = vmatmul.mubr.bf16.gmra.mxu0 %v2056
    %v2245 = vpop.f32.mrf.mxu0
    %v2246 = vadd.f32 %v2005, %v2245
    %v2247 = vpop.f32.mrf.mxu0
    %v2248 = vpop.f32.mrf.mxu0
    %v2249 = vadd.f32 %v2005, %v2248
    %v2250 = vpop.f32.mrf.mxu0
    %2251 = vmatprep.mubr.bf16.mxu0 0
    %2252 = vmatmul.mubr.bf16.gmra.mxu0 %v2059
    %v2253 = vpop.f32.mrf.mxu0
    %v2254 = vadd.f32 %v2005, %v2253
    %v2255 = vpop.f32.mrf.mxu0
    %v2256 = vpop.f32.mrf.mxu0
    %v2257 = vadd.f32 %v2005, %v2256
    %v2258 = vpop.f32.mrf.mxu0
    %2259 = vmatprep.mubr.bf16.mxu0 0
    %2260 = vmatmul.mubr.bf16.gmra.mxu0 %v2062
    %v2261 = vpop.f32.mrf.mxu0
    %v2262 = vadd.f32 %v2005, %v2261
    %v2263 = vpop.f32.mrf.mxu0
    %v2264 = vpop.f32.mrf.mxu0
    %v2265 = vadd.f32 %v2005, %v2264
    %v2266 = vpop.f32.mrf.mxu0
    %2267 = vmatprep.mubr.bf16.mxu0 0
    %2268 = vmatmul.mubr.bf16.gmra.mxu0 %v2065
    %v2269 = vpop.f32.mrf.mxu0
    %v2270 = vadd.f32 %v2005, %v2269
    %v2271 = vpop.f32.mrf.mxu0
    %v2272 = vpop.f32.mrf.mxu0
    %v2273 = vadd.f32 %v2005, %v2272
    %v2274 = vpop.f32.mrf.mxu0
    %2275 = vmatprep.mubr.bf16.mxu0 0
    %2276 = vmatmul.mubr.bf16.gmra.mxu0 %v2068
    %v2277 = vpop.f32.mrf.mxu0
    %v2278 = vadd.f32 %v2005, %v2277
    %v2279 = vpop.f32.mrf.mxu0
    %v2280 = vpop.f32.mrf.mxu0
    %v2281 = vadd.f32 %v2005, %v2280
    %v2282 = vpop.f32.mrf.mxu0
    %2283 = vmatprep.mubr.bf16.mxu0 0
    %2284 = vmatmul.mubr.bf16.gmra.mxu0 %v2071
    %v2285 = vpop.f32.mrf.mxu0
    %v2286 = vadd.f32 %v2005, %v2285
    %v2287 = vpop.f32.mrf.mxu0
    %v2288 = vpop.f32.mrf.mxu0
    %v2289 = vadd.f32 %v2005, %v2288
    %v2290 = vpop.f32.mrf.mxu0
    %2291 = vmatprep.mubr.bf16.mxu0 0
    %2292 = vmatmul.mubr.bf16.gmra.mxu0 %v2074
    %v2293 = vpop.f32.mrf.mxu0
    %v2294 = vadd.f32 %v2005, %v2293
    %v2295 = vpop.f32.mrf.mxu0
    %v2296 = vpop.f32.mrf.mxu0
    %v2297 = vadd.f32 %v2005, %v2296
    %v2298 = vpop.f32.mrf.mxu0
    %2299 = vmatprep.mubr.bf16.mxu0 0
    %2300 = vmatmul.mubr.bf16.gmra.mxu0 %v2077
    %v2301 = vpop.f32.mrf.mxu0
    %v2302 = vadd.f32 %v2005, %v2301
    %v2303 = vpop.f32.mrf.mxu0
    %v2304 = vpop.f32.mrf.mxu0
    %v2305 = vadd.f32 %v2005, %v2304
    %v2306 = vpop.f32.mrf.mxu0
    %2307 = vmatprep.mubr.bf16.mxu0 0
    %2308 = vmatmul.mubr.bf16.gmra.mxu0 %v2080
    %v2309 = vpop.f32.mrf.mxu0
    %v2310 = vadd.f32 %v2005, %v2309
    %v2311 = vpop.f32.mrf.mxu0
    %v2312 = vpop.f32.mrf.mxu0
    %v2313 = vadd.f32 %v2005, %v2312
    %v2314 = vpop.f32.mrf.mxu0
    %2315 = vmatprep.mubr.bf16.mxu0 0
    %2316 = vmatmul.mubr.bf16.gmra.mxu0 %v2083
    %v2317 = vpop.f32.mrf.mxu0
    %v2318 = vadd.f32 %v2005, %v2317
    %v2319 = vpop.f32.mrf.mxu0
    %v2320 = vpop.f32.mrf.mxu0
    %v2321 = vadd.f32 %v2005, %v2320
    %v2322 = vpop.f32.mrf.mxu0
    %2323 = vmatprep.mubr.bf16.mxu0 0
    %2324 = vmatmul.mubr.bf16.gmra.mxu0 %v2086
    %v2325 = vpop.f32.mrf.mxu0
    %v2326 = vadd.f32 %v2005, %v2325
    %v2327 = vpop.f32.mrf.mxu0
    %v2328 = vpop.f32.mrf.mxu0
    %v2329 = vadd.f32 %v2005, %v2328
    %v2330 = vpop.f32.mrf.mxu0
    %2331 = vmatprep.mubr.bf16.mxu0 0
    %2332 = vmatmul.mubr.bf16.gmra.mxu0 %v2089
    %v2333 = vpop.f32.mrf.mxu0
    %v2334 = vadd.f32 %v2005, %v2333
    %v2335 = vpop.f32.mrf.mxu0
    %v2336 = vpop.f32.mrf.mxu0
    %v2337 = vadd.f32 %v2005, %v2336
    %v2338 = vpop.f32.mrf.mxu0
    %2339 = vmatprep.mubr.bf16.mxu0 0
    %2340 = vmatmul.mubr.bf16.gmra.mxu0 %v2092
    %v2341 = vpop.f32.mrf.mxu0
    %v2342 = vadd.f32 %v2005, %v2341
    %v2343 = vpop.f32.mrf.mxu0
    %v2344 = vpop.f32.mrf.mxu0
    %v2345 = vadd.f32 %v2005, %v2344
    %v2346 = vpop.f32.mrf.mxu0
    %2347 = vmatprep.mubr.bf16.mxu0 0
    %2348 = vmatmul.mubr.bf16.gmra.mxu0 %v2095
    %v2349 = vpop.f32.mrf.mxu0
    %v2350 = vadd.f32 %v2005, %v2349
    %v2351 = vpop.f32.mrf.mxu0
    %v2352 = vpop.f32.mrf.mxu0
    %v2353 = vadd.f32 %v2005, %v2352
    %v2354 = vpop.f32.mrf.mxu0
    %2355 = vmatprep.mubr.bf16.mxu0 0
    %2356 = vmatmul.mubr.bf16.gmra.mxu0 %v2098
    %v2357 = vpop.f32.mrf.mxu0
    %v2358 = vadd.f32 %v2005, %v2357
    %v2359 = vpop.f32.mrf.mxu0
    %v2360 = vpop.f32.mrf.mxu0
    %v2361 = vadd.f32 %v2005, %v2360
    %v2362 = vpop.f32.mrf.mxu0
    %2363 = vmatprep.mubr.bf16.mxu0 0
    %2364 = vmatmul.mubr.bf16.gmra.mxu0 %v2101
    %v2365 = vpop.f32.mrf.mxu0
    %v2366 = vadd.f32 %v2005, %v2365
    %v2367 = vpop.f32.mrf.mxu0
    %v2368 = vpop.f32.mrf.mxu0
    %v2369 = vadd.f32 %v2005, %v2368
    %v2370 = vpop.f32.mrf.mxu0
    %2371 = vmatprep.mubr.bf16.mxu0 0
    %2372 = vmatmul.mubr.bf16.gmra.mxu0 %v2104
    %v2373 = vpop.f32.mrf.mxu0
    %v2374 = vadd.f32 %v2005, %v2373
    %v2375 = vpop.f32.mrf.mxu0
    %v2376 = vpop.f32.mrf.mxu0
    %v2377 = vadd.f32 %v2005, %v2376
    %v2378 = vpop.f32.mrf.mxu0
    %2379 = vmatprep.mubr.bf16.mxu0 0
    %2380 = vmatmul.mubr.bf16.gmra.mxu0 %v2107
    %v2381 = vpop.f32.mrf.mxu0
    %v2382 = vadd.f32 %v2005, %v2381
    %v2383 = vpop.f32.mrf.mxu0
    %v2384 = vpop.f32.mrf.mxu0
    %v2385 = vadd.f32 %v2005, %v2384
    %v2386 = vpop.f32.mrf.mxu0
    %2387 = vmatprep.mubr.bf16.mxu0 0
    %2388 = vmatmul.mubr.bf16.gmra.mxu0 %v2110
    %v2389 = vpop.f32.mrf.mxu0
    %v2390 = vadd.f32 %v2005, %v2389
    %v2391 = vpop.f32.mrf.mxu0
    %v2392 = vpop.f32.mrf.mxu0
    %v2393 = vadd.f32 %v2005, %v2392
    %v2394 = vpop.f32.mrf.mxu0
    %2395 = vmatprep.mubr.bf16.mxu0 0
    %2396 = vmatmul.mubr.bf16.gmra.mxu0 %v2113
    %v2397 = vpop.f32.mrf.mxu0
    %v2398 = vadd.f32 %v2005, %v2397
    %v2399 = vpop.f32.mrf.mxu0
    %v2400 = vpop.f32.mrf.mxu0
    %v2401 = vadd.f32 %v2005, %v2400
    %v2402 = vpop.f32.mrf.mxu0
    %2403 = vdwg.mxu0
    %v2404 = vmax.f32 %v2150, 0.0
    %v2405 = vmax.f32 %v2153, 0.0
    %v2406 = vmax.f32 %v2158, 0.0
    %v2407 = vmax.f32 %v2161, 0.0
    %v2408 = vmax.f32 %v2166, 0.0
    %v2409 = vmax.f32 %v2169, 0.0
    %v2410 = vmax.f32 %v2174, 0.0
    %v2411 = vmax.f32 %v2177, 0.0
    %v2412 = vmax.f32 %v2182, 0.0
    %v2413 = vmax.f32 %v2185, 0.0
    %v2414 = vmax.f32 %v2190, 0.0
    %v2415 = vmax.f32 %v2193, 0.0
    %v2416 = vmax.f32 %v2198, 0.0
    %v2417 = vmax.f32 %v2201, 0.0
    %v2418 = vmax.f32 %v2206, 0.0
    %v2419 = vmax.f32 %v2209, 0.0
    %v2420 = vmax.f32 %v2214, 0.0
    %v2421 = vmax.f32 %v2217, 0.0
    %v2422 = vmax.f32 %v2222, 0.0
    %v2423 = vmax.f32 %v2225, 0.0
    %v2424 = vmax.f32 %v2230, 0.0
    %v2425 = vmax.f32 %v2233, 0.0
    %v2426 = vmax.f32 %v2238, 0.0
    %v2427 = vmax.f32 %v2241, 0.0
    %v2428 = vmax.f32 %v2246, 0.0
    %v2429 = vmax.f32 %v2249, 0.0
    %v2430 = vmax.f32 %v2254, 0.0
    %v2431 = vmax.f32 %v2257, 0.0
    %v2432 = vmax.f32 %v2262, 0.0
    %v2433 = vmax.f32 %v2265, 0.0
    %v2434 = vmax.f32 %v2270, 0.0
    %v2435 = vmax.f32 %v2273, 0.0
    %v2436 = vmax.f32 %v2278, 0.0
    %v2437 = vmax.f32 %v2281, 0.0
    %v2438 = vmax.f32 %v2286, 0.0
    %v2439 = vmax.f32 %v2289, 0.0
    %v2440 = vmax.f32 %v2294, 0.0
    %v2441 = vmax.f32 %v2297, 0.0
    %v2442 = vmax.f32 %v2302, 0.0
    %v2443 = vmax.f32 %v2305, 0.0
    %v2444 = vmax.f32 %v2310, 0.0
    %v2445 = vmax.f32 %v2313, 0.0
    %v2446 = vmax.f32 %v2318, 0.0
    %v2447 = vmax.f32 %v2321, 0.0
    %v2448 = vmax.f32 %v2326, 0.0
    %v2449 = vmax.f32 %v2329, 0.0
    %v2450 = vmax.f32 %v2334, 0.0
    %v2451 = vmax.f32 %v2337, 0.0
    %v2452 = vmax.f32 %v2342, 0.0
    %v2453 = vmax.f32 %v2345, 0.0
    %v2454 = vmax.f32 %v2350, 0.0
    %v2455 = vmax.f32 %v2353, 0.0
    %v2456 = vmax.f32 %v2358, 0.0
    %v2457 = vmax.f32 %v2361, 0.0
    %v2458 = vmax.f32 %v2366, 0.0
    %v2459 = vmax.f32 %v2369, 0.0
    %v2460 = vmax.f32 %v2374, 0.0
    %v2461 = vmax.f32 %v2377, 0.0
    %v2462 = vmax.f32 %v2382, 0.0
    %v2463 = vmax.f32 %v2385, 0.0
    %v2464 = vmax.f32 %v2390, 0.0
    %v2465 = vmax.f32 %v2393, 0.0
    %v2466 = vmax.f32 %v2398, 0.0
    %v2467 = vmax.f32 %v2401, 0.0
    %v2468 = vpack.c.bf16 %v2405, %v2404
    %v2469 = vpack.c.bf16 %v2407, %v2406
    %v2470 = vpack.c.bf16 %v2409, %v2408
    %v2471 = vpack.c.bf16 %v2411, %v2410
    %v2472 = vpack.c.bf16 %v2413, %v2412
    %v2473 = vpack.c.bf16 %v2415, %v2414
    %v2474 = vpack.c.bf16 %v2417, %v2416
    %v2475 = vpack.c.bf16 %v2419, %v2418
    %v2476 = vpack.c.bf16 %v2421, %v2420
    %v2477 = vpack.c.bf16 %v2423, %v2422
    %v2478 = vpack.c.bf16 %v2425, %v2424
    %v2479 = vpack.c.bf16 %v2427, %v2426
    %v2480 = vpack.c.bf16 %v2429, %v2428
    %v2481 = vpack.c.bf16 %v2431, %v2430
    %v2482 = vpack.c.bf16 %v2433, %v2432
    %v2483 = vpack.c.bf16 %v2435, %v2434
    %v2484 = vpack.c.bf16 %v2437, %v2436
    %v2485 = vpack.c.bf16 %v2439, %v2438
    %v2486 = vpack.c.bf16 %v2441, %v2440
    %v2487 = vpack.c.bf16 %v2443, %v2442
    %v2488 = vpack.c.bf16 %v2445, %v2444
    %v2489 = vpack.c.bf16 %v2447, %v2446
    %v2490 = vpack.c.bf16 %v2449, %v2448
    %v2491 = vpack.c.bf16 %v2451, %v2450
    %v2492 = vpack.c.bf16 %v2453, %v2452
    %v2493 = vpack.c.bf16 %v2455, %v2454
    %v2494 = vpack.c.bf16 %v2457, %v2456
    %v2495 = vpack.c.bf16 %v2459, %v2458
    %v2496 = vpack.c.bf16 %v2461, %v2460
    %v2497 = vpack.c.bf16 %v2463, %v2462
    %v2498 = vpack.c.bf16 %v2465, %v2464
    %v2499 = vpack.c.bf16 %v2467, %v2466
    %v2500 = vld [vmem:[%s11] sm:$0xf]
    %v2501 = vld [vmem:[%s11 + $0x4] sm:$0xf]
    %v2502 = vld [vmem:[%s11 + $0x8] sm:$0xf]
    %v2503 = vld [vmem:[%s11 + $0xc] sm:$0xf]
    %v2504 = vld [vmem:[%s11 + $0x10] sm:$0xf]
    %v2505 = vld [vmem:[%s11 + $0x14] sm:$0xf]
    %v2506 = vld [vmem:[%s12] sm:$0x1]
    %v2508 = vlaneseq
    %v2509 = vshrl.u32 %v2508, 7
    %v2510 = vsub.s32 0, %v2509
    %v2511 = vrot.slane %v2506, %v2510
    %v2519 = vunpack.c.l.b16 %v2500
    %v2520 = vunpack.c.l.b16 %v2501
    %v2521 = vunpack.c.l.b16 %v2502
    %v2522 = vunpack.c.l.b16 %v2503
    %v2523 = vunpack.c.l.b16 %v2504
    %v2524 = vunpack.c.l.b16 %v2505
    %v2525 = vpack.c.b16 %v2520, %v2519
    %v2526 = vpack.c.b16 %v2522, %v2521
    %v2527 = vpack.c.b16 %v2524, %v2523
    %vm2531 = vcmask 392192
    %v2533 = vsel %vm2531, %v2468, 0
    %v2536 = vsel %vm2531, %v2469, 0
    %v2539 = vsel %vm2531, %v2470, 0
    %v2542 = vsel %vm2531, %v2471, 0
    %v2545 = vsel %vm2531, %v2472, 0
    %v2548 = vsel %vm2531, %v2473, 0
    %v2551 = vsel %vm2531, %v2474, 0
    %v2554 = vsel %vm2531, %v2475, 0
    %v2557 = vsel %vm2531, %v2476, 0
    %v2560 = vsel %vm2531, %v2477, 0
    %v2563 = vsel %vm2531, %v2478, 0
    %v2566 = vsel %vm2531, %v2479, 0
    %v2569 = vsel %vm2531, %v2480, 0
    %v2572 = vsel %vm2531, %v2481, 0
    %v2575 = vsel %vm2531, %v2482, 0
    %v2578 = vsel %vm2531, %v2483, 0
    %v2581 = vsel %vm2531, %v2484, 0
    %v2584 = vsel %vm2531, %v2485, 0
    %v2587 = vsel %vm2531, %v2486, 0
    %v2590 = vsel %vm2531, %v2487, 0
    %v2593 = vsel %vm2531, %v2488, 0
    %v2596 = vsel %vm2531, %v2489, 0
    %v2599 = vsel %vm2531, %v2490, 0
    %v2602 = vsel %vm2531, %v2491, 0
    %v2605 = vsel %vm2531, %v2492, 0
    %v2608 = vsel %vm2531, %v2493, 0
    %v2611 = vsel %vm2531, %v2494, 0
    %v2614 = vsel %vm2531, %v2495, 0
    %v2617 = vsel %vm2531, %v2496, 0
    %v2620 = vsel %vm2531, %v2497, 0
    %v2623 = vsel %vm2531, %v2498, 0
    %v2626 = vsel %vm2531, %v2499, 0
    %2628 = vmatprep.subr.bf16.mxu0 0
    %2629 = vmatpush1.bf16.msra.mxu0 0
    %2630 = vmatprep.subr.bf16.mxu0 0
    %2631 = vmatpush1.bf16.msra.mxu0 0
    %2632 = vmatprep.subr.bf16.mxu0 0
    %2633 = vmatpush1.bf16.msra.mxu0 0
    %2634 = vmatprep.subr.bf16.mxu0 0
    %2635 = vmatpush1.bf16.msra.mxu0 0
    %2636 = vmatprep.subr.bf16.mxu0 0
    %2637 = vmatpush1.bf16.msra.mxu0 0
    %2638 = vmatprep.subr.bf16.mxu0 0
    %2639 = vmatpush1.bf16.msra.mxu0 %v2527
    %2640 = vmatprep.subr.bf16.mxu0 0
    %2641 = vmatpush1.bf16.msra.mxu0 %v2526
    %2642 = vmatprep.subr.bf16.mxu0 0
    %2643 = vmatpush1.bf16.msra.mxu0 %v2525
    %2644 = vmatprep.subr.bf16.mxu0 0
    %2645 = vmatpush2.bf16.msra.mxu0 0
    %2646 = vmatprep.subr.bf16.mxu0 0
    %2647 = vmatpush2.bf16.msra.mxu0 0
    %2648 = vmatprep.subr.bf16.mxu0 0
    %2649 = vmatpush2.bf16.msra.mxu0 0
    %2650 = vmatprep.subr.bf16.mxu0 0
    %2651 = vmatpush2.bf16.msra.mxu0 0
    %2652 = vmatprep.subr.bf16.mxu0 0
    %2653 = vmatpush2.bf16.msra.mxu0 0
    %2654 = vmatprep.subr.bf16.mxu0 0
    %2655 = vmatpush2.bf16.msra.mxu0 0
    %2656 = vmatprep.subr.bf16.mxu0 0
    %2657 = vmatpush2.bf16.msra.mxu0 0
    %2658 = vmatprep.subr.bf16.mxu0 0
    %2659 = vmatpush2.bf16.msra.mxu0 0
    %2660 = vmatprep.mubr.bf16.mxu0 0
    %2661 = vmatmul.mubr.bf16.gmra.mxu0 %v2533
    %v2662 = vpop.f32.mrf.mxu0
    %v2663 = vadd.f32 %v2511, %v2662
    %v2664 = vpop.f32.mrf.mxu0
    %v2665 = vpop.f32.mrf.mxu0
    %v2666 = vadd.f32 %v2511, %v2665
    %v2667 = vpop.f32.mrf.mxu0
    %2668 = vmatprep.mubr.bf16.mxu0 0
    %2669 = vmatmul.mubr.bf16.gmra.mxu0 %v2536
    %v2670 = vpop.f32.mrf.mxu0
    %v2671 = vadd.f32 %v2511, %v2670
    %v2672 = vpop.f32.mrf.mxu0
    %v2673 = vpop.f32.mrf.mxu0
    %v2674 = vadd.f32 %v2511, %v2673
    %v2675 = vpop.f32.mrf.mxu0
    %2676 = vmatprep.mubr.bf16.mxu0 0
    %2677 = vmatmul.mubr.bf16.gmra.mxu0 %v2539
    %v2678 = vpop.f32.mrf.mxu0
    %v2679 = vadd.f32 %v2511, %v2678
    %v2680 = vpop.f32.mrf.mxu0
    %v2681 = vpop.f32.mrf.mxu0
    %v2682 = vadd.f32 %v2511, %v2681
    %v2683 = vpop.f32.mrf.mxu0
    %2684 = vmatprep.mubr.bf16.mxu0 0
    %2685 = vmatmul.mubr.bf16.gmra.mxu0 %v2542
    %v2686 = vpop.f32.mrf.mxu0
    %v2687 = vadd.f32 %v2511, %v2686
    %v2688 = vpop.f32.mrf.mxu0
    %v2689 = vpop.f32.mrf.mxu0
    %v2690 = vadd.f32 %v2511, %v2689
    %v2691 = vpop.f32.mrf.mxu0
    %2692 = vmatprep.mubr.bf16.mxu0 0
    %2693 = vmatmul.mubr.bf16.gmra.mxu0 %v2545
    %v2694 = vpop.f32.mrf.mxu0
    %v2695 = vadd.f32 %v2511, %v2694
    %v2696 = vpop.f32.mrf.mxu0
    %v2697 = vpop.f32.mrf.mxu0
    %v2698 = vadd.f32 %v2511, %v2697
    %v2699 = vpop.f32.mrf.mxu0
    %2700 = vmatprep.mubr.bf16.mxu0 0
    %2701 = vmatmul.mubr.bf16.gmra.mxu0 %v2548
    %v2702 = vpop.f32.mrf.mxu0
    %v2703 = vadd.f32 %v2511, %v2702
    %v2704 = vpop.f32.mrf.mxu0
    %v2705 = vpop.f32.mrf.mxu0
    %v2706 = vadd.f32 %v2511, %v2705
    %v2707 = vpop.f32.mrf.mxu0
    %2708 = vmatprep.mubr.bf16.mxu0 0
    %2709 = vmatmul.mubr.bf16.gmra.mxu0 %v2551
    %v2710 = vpop.f32.mrf.mxu0
    %v2711 = vadd.f32 %v2511, %v2710
    %v2712 = vpop.f32.mrf.mxu0
    %v2713 = vpop.f32.mrf.mxu0
    %v2714 = vadd.f32 %v2511, %v2713
    %v2715 = vpop.f32.mrf.mxu0
    %2716 = vmatprep.mubr.bf16.mxu0 0
    %2717 = vmatmul.mubr.bf16.gmra.mxu0 %v2554
    %v2718 = vpop.f32.mrf.mxu0
    %v2719 = vadd.f32 %v2511, %v2718
    %v2720 = vpop.f32.mrf.mxu0
    %v2721 = vpop.f32.mrf.mxu0
    %v2722 = vadd.f32 %v2511, %v2721
    %v2723 = vpop.f32.mrf.mxu0
    %2724 = vmatprep.mubr.bf16.mxu0 0
    %2725 = vmatmul.mubr.bf16.gmra.mxu0 %v2557
    %v2726 = vpop.f32.mrf.mxu0
    %v2727 = vadd.f32 %v2511, %v2726
    %v2728 = vpop.f32.mrf.mxu0
    %v2729 = vpop.f32.mrf.mxu0
    %v2730 = vadd.f32 %v2511, %v2729
    %v2731 = vpop.f32.mrf.mxu0
    %2732 = vmatprep.mubr.bf16.mxu0 0
    %2733 = vmatmul.mubr.bf16.gmra.mxu0 %v2560
    %v2734 = vpop.f32.mrf.mxu0
    %v2735 = vadd.f32 %v2511, %v2734
    %v2736 = vpop.f32.mrf.mxu0
    %v2737 = vpop.f32.mrf.mxu0
    %v2738 = vadd.f32 %v2511, %v2737
    %v2739 = vpop.f32.mrf.mxu0
    %2740 = vmatprep.mubr.bf16.mxu0 0
    %2741 = vmatmul.mubr.bf16.gmra.mxu0 %v2563
    %v2742 = vpop.f32.mrf.mxu0
    %v2743 = vadd.f32 %v2511, %v2742
    %v2744 = vpop.f32.mrf.mxu0
    %v2745 = vpop.f32.mrf.mxu0
    %v2746 = vadd.f32 %v2511, %v2745
    %v2747 = vpop.f32.mrf.mxu0
    %2748 = vmatprep.mubr.bf16.mxu0 0
    %2749 = vmatmul.mubr.bf16.gmra.mxu0 %v2566
    %v2750 = vpop.f32.mrf.mxu0
    %v2751 = vadd.f32 %v2511, %v2750
    %v2752 = vpop.f32.mrf.mxu0
    %v2753 = vpop.f32.mrf.mxu0
    %v2754 = vadd.f32 %v2511, %v2753
    %v2755 = vpop.f32.mrf.mxu0
    %2756 = vmatprep.mubr.bf16.mxu0 0
    %2757 = vmatmul.mubr.bf16.gmra.mxu0 %v2569
    %v2758 = vpop.f32.mrf.mxu0
    %v2759 = vadd.f32 %v2511, %v2758
    %v2760 = vpop.f32.mrf.mxu0
    %v2761 = vpop.f32.mrf.mxu0
    %v2762 = vadd.f32 %v2511, %v2761
    %v2763 = vpop.f32.mrf.mxu0
    %2764 = vmatprep.mubr.bf16.mxu0 0
    %2765 = vmatmul.mubr.bf16.gmra.mxu0 %v2572
    %v2766 = vpop.f32.mrf.mxu0
    %v2767 = vadd.f32 %v2511, %v2766
    %v2768 = vpop.f32.mrf.mxu0
    %v2769 = vpop.f32.mrf.mxu0
    %v2770 = vadd.f32 %v2511, %v2769
    %v2771 = vpop.f32.mrf.mxu0
    %2772 = vmatprep.mubr.bf16.mxu0 0
    %2773 = vmatmul.mubr.bf16.gmra.mxu0 %v2575
    %v2774 = vpop.f32.mrf.mxu0
    %v2775 = vadd.f32 %v2511, %v2774
    %v2776 = vpop.f32.mrf.mxu0
    %v2777 = vpop.f32.mrf.mxu0
    %v2778 = vadd.f32 %v2511, %v2777
    %v2779 = vpop.f32.mrf.mxu0
    %2780 = vmatprep.mubr.bf16.mxu0 0
    %2781 = vmatmul.mubr.bf16.gmra.mxu0 %v2578
    %v2782 = vpop.f32.mrf.mxu0
    %v2783 = vadd.f32 %v2511, %v2782
    %v2784 = vpop.f32.mrf.mxu0
    %v2785 = vpop.f32.mrf.mxu0
    %v2786 = vadd.f32 %v2511, %v2785
    %v2787 = vpop.f32.mrf.mxu0
    %2788 = vmatprep.mubr.bf16.mxu0 0
    %2789 = vmatmul.mubr.bf16.gmra.mxu0 %v2581
    %v2790 = vpop.f32.mrf.mxu0
    %v2791 = vadd.f32 %v2511, %v2790
    %v2792 = vpop.f32.mrf.mxu0
    %v2793 = vpop.f32.mrf.mxu0
    %v2794 = vadd.f32 %v2511, %v2793
    %v2795 = vpop.f32.mrf.mxu0
    %2796 = vmatprep.mubr.bf16.mxu0 0
    %2797 = vmatmul.mubr.bf16.gmra.mxu0 %v2584
    %v2798 = vpop.f32.mrf.mxu0
    %v2799 = vadd.f32 %v2511, %v2798
    %v2800 = vpop.f32.mrf.mxu0
    %v2801 = vpop.f32.mrf.mxu0
    %v2802 = vadd.f32 %v2511, %v2801
    %v2803 = vpop.f32.mrf.mxu0
    %2804 = vmatprep.mubr.bf16.mxu0 0
    %2805 = vmatmul.mubr.bf16.gmra.mxu0 %v2587
    %v2806 = vpop.f32.mrf.mxu0
    %v2807 = vadd.f32 %v2511, %v2806
    %v2808 = vpop.f32.mrf.mxu0
    %v2809 = vpop.f32.mrf.mxu0
    %v2810 = vadd.f32 %v2511, %v2809
    %v2811 = vpop.f32.mrf.mxu0
    %2812 = vmatprep.mubr.bf16.mxu0 0
    %2813 = vmatmul.mubr.bf16.gmra.mxu0 %v2590
    %v2814 = vpop.f32.mrf.mxu0
    %v2815 = vadd.f32 %v2511, %v2814
    %v2816 = vpop.f32.mrf.mxu0
    %v2817 = vpop.f32.mrf.mxu0
    %v2818 = vadd.f32 %v2511, %v2817
    %v2819 = vpop.f32.mrf.mxu0
    %2820 = vmatprep.mubr.bf16.mxu0 0
    %2821 = vmatmul.mubr.bf16.gmra.mxu0 %v2593
    %v2822 = vpop.f32.mrf.mxu0
    %v2823 = vadd.f32 %v2511, %v2822
    %v2824 = vpop.f32.mrf.mxu0
    %v2825 = vpop.f32.mrf.mxu0
    %v2826 = vadd.f32 %v2511, %v2825
    %v2827 = vpop.f32.mrf.mxu0
    %2828 = vmatprep.mubr.bf16.mxu0 0
    %2829 = vmatmul.mubr.bf16.gmra.mxu0 %v2596
    %v2830 = vpop.f32.mrf.mxu0
    %v2831 = vadd.f32 %v2511, %v2830
    %v2832 = vpop.f32.mrf.mxu0
    %v2833 = vpop.f32.mrf.mxu0
    %v2834 = vadd.f32 %v2511, %v2833
    %v2835 = vpop.f32.mrf.mxu0
    %2836 = vmatprep.mubr.bf16.mxu0 0
    %2837 = vmatmul.mubr.bf16.gmra.mxu0 %v2599
    %v2838 = vpop.f32.mrf.mxu0
    %v2839 = vadd.f32 %v2511, %v2838
    %v2840 = vpop.f32.mrf.mxu0
    %v2841 = vpop.f32.mrf.mxu0
    %v2842 = vadd.f32 %v2511, %v2841
    %v2843 = vpop.f32.mrf.mxu0
    %2844 = vmatprep.mubr.bf16.mxu0 0
    %2845 = vmatmul.mubr.bf16.gmra.mxu0 %v2602
    %v2846 = vpop.f32.mrf.mxu0
    %v2847 = vadd.f32 %v2511, %v2846
    %v2848 = vpop.f32.mrf.mxu0
    %v2849 = vpop.f32.mrf.mxu0
    %v2850 = vadd.f32 %v2511, %v2849
    %v2851 = vpop.f32.mrf.mxu0
    %2852 = vmatprep.mubr.bf16.mxu0 0
    %2853 = vmatmul.mubr.bf16.gmra.mxu0 %v2605
    %v2854 = vpop.f32.mrf.mxu0
    %v2855 = vadd.f32 %v2511, %v2854
    %v2856 = vpop.f32.mrf.mxu0
    %v2857 = vpop.f32.mrf.mxu0
    %v2858 = vadd.f32 %v2511, %v2857
    %v2859 = vpop.f32.mrf.mxu0
    %2860 = vmatprep.mubr.bf16.mxu0 0
    %2861 = vmatmul.mubr.bf16.gmra.mxu0 %v2608
    %v2862 = vpop.f32.mrf.mxu0
    %v2863 = vadd.f32 %v2511, %v2862
    %v2864 = vpop.f32.mrf.mxu0
    %v2865 = vpop.f32.mrf.mxu0
    %v2866 = vadd.f32 %v2511, %v2865
    %v2867 = vpop.f32.mrf.mxu0
    %2868 = vmatprep.mubr.bf16.mxu0 0
    %2869 = vmatmul.mubr.bf16.gmra.mxu0 %v2611
    %v2870 = vpop.f32.mrf.mxu0
    %v2871 = vadd.f32 %v2511, %v2870
    %v2872 = vpop.f32.mrf.mxu0
    %v2873 = vpop.f32.mrf.mxu0
    %v2874 = vadd.f32 %v2511, %v2873
    %v2875 = vpop.f32.mrf.mxu0
    %2876 = vmatprep.mubr.bf16.mxu0 0
    %2877 = vmatmul.mubr.bf16.gmra.mxu0 %v2614
    %v2878 = vpop.f32.mrf.mxu0
    %v2879 = vadd.f32 %v2511, %v2878
    %v2880 = vpop.f32.mrf.mxu0
    %v2881 = vpop.f32.mrf.mxu0
    %v2882 = vadd.f32 %v2511, %v2881
    %v2883 = vpop.f32.mrf.mxu0
    %2884 = vmatprep.mubr.bf16.mxu0 0
    %2885 = vmatmul.mubr.bf16.gmra.mxu0 %v2617
    %v2886 = vpop.f32.mrf.mxu0
    %v2887 = vadd.f32 %v2511, %v2886
    %v2888 = vpop.f32.mrf.mxu0
    %v2889 = vpop.f32.mrf.mxu0
    %v2890 = vadd.f32 %v2511, %v2889
    %v2891 = vpop.f32.mrf.mxu0
    %2892 = vmatprep.mubr.bf16.mxu0 0
    %2893 = vmatmul.mubr.bf16.gmra.mxu0 %v2620
    %v2894 = vpop.f32.mrf.mxu0
    %v2895 = vadd.f32 %v2511, %v2894
    %v2896 = vpop.f32.mrf.mxu0
    %v2897 = vpop.f32.mrf.mxu0
    %v2898 = vadd.f32 %v2511, %v2897
    %v2899 = vpop.f32.mrf.mxu0
    %2900 = vmatprep.mubr.bf16.mxu0 0
    %2901 = vmatmul.mubr.bf16.gmra.mxu0 %v2623
    %v2902 = vpop.f32.mrf.mxu0
    %v2903 = vadd.f32 %v2511, %v2902
    %v2904 = vpop.f32.mrf.mxu0
    %v2905 = vpop.f32.mrf.mxu0
    %v2906 = vadd.f32 %v2511, %v2905
    %v2907 = vpop.f32.mrf.mxu0
    %2908 = vmatprep.mubr.bf16.mxu0 0
    %2909 = vmatmul.mubr.bf16.gmra.mxu0 %v2626
    %v2910 = vpop.f32.mrf.mxu0
    %v2911 = vadd.f32 %v2511, %v2910
    %v2912 = vpop.f32.mrf.mxu0
    %v2913 = vpop.f32.mrf.mxu0
    %v2914 = vadd.f32 %v2511, %v2913
    %v2915 = vpop.f32.mrf.mxu0
    %2916 = vdwg.mxu0
    %2981 = vrot.lane.b32.xlu0 %v2150, 80
    %v2982 = vpop.permute.xlu0 %2981
    %2983 = vrot.lane.b32.xlu0 %v2153, 80
    %v2984 = vpop.permute.xlu0 %2983
    %2985 = vrot.lane.b32.xlu0 %v2158, 80
    %v2986 = vpop.permute.xlu0 %2985
    %2987 = vrot.lane.b32.xlu0 %v2161, 80
    %v2988 = vpop.permute.xlu0 %2987
    %2989 = vrot.lane.b32.xlu0 %v2166, 80
    %v2990 = vpop.permute.xlu0 %2989
    %2991 = vrot.lane.b32.xlu0 %v2169, 80
    %v2992 = vpop.permute.xlu0 %2991
    %2993 = vrot.lane.b32.xlu0 %v2174, 80
    %v2994 = vpop.permute.xlu0 %2993
    %2995 = vrot.lane.b32.xlu0 %v2177, 80
    %v2996 = vpop.permute.xlu0 %2995
    %2997 = vrot.lane.b32.xlu0 %v2182, 80
    %v2998 = vpop.permute.xlu0 %2997
    %2999 = vrot.lane.b32.xlu0 %v2185, 80
    %v3000 = vpop.permute.xlu0 %2999
    %3001 = vrot.lane.b32.xlu0 %v2190, 80
    %v3002 = vpop.permute.xlu0 %3001
    %3003 = vrot.lane.b32.xlu0 %v2193, 80
    %v3004 = vpop.permute.xlu0 %3003
    %3005 = vrot.lane.b32.xlu0 %v2198, 80
    %v3006 = vpop.permute.xlu0 %3005
    %3007 = vrot.lane.b32.xlu0 %v2201, 80
    %v3008 = vpop.permute.xlu0 %3007
    %3009 = vrot.lane.b32.xlu0 %v2206, 80
    %v3010 = vpop.permute.xlu0 %3009
    %3011 = vrot.lane.b32.xlu0 %v2209, 80
    %v3012 = vpop.permute.xlu0 %3011
    %3013 = vrot.lane.b32.xlu0 %v2214, 80
    %v3014 = vpop.permute.xlu0 %3013
    %3015 = vrot.lane.b32.xlu0 %v2217, 80
    %v3016 = vpop.permute.xlu0 %3015
    %3017 = vrot.lane.b32.xlu0 %v2222, 80
    %v3018 = vpop.permute.xlu0 %3017
    %3019 = vrot.lane.b32.xlu0 %v2225, 80
    %v3020 = vpop.permute.xlu0 %3019
    %3021 = vrot.lane.b32.xlu0 %v2230, 80
    %v3022 = vpop.permute.xlu0 %3021
    %3023 = vrot.lane.b32.xlu0 %v2233, 80
    %v3024 = vpop.permute.xlu0 %3023
    %3025 = vrot.lane.b32.xlu0 %v2238, 80
    %v3026 = vpop.permute.xlu0 %3025
    %3027 = vrot.lane.b32.xlu0 %v2241, 80
    %v3028 = vpop.permute.xlu0 %3027
    %3029 = vrot.lane.b32.xlu0 %v2246, 80
    %v3030 = vpop.permute.xlu0 %3029
    %3031 = vrot.lane.b32.xlu0 %v2249, 80
    %v3032 = vpop.permute.xlu0 %3031
    %3033 = vrot.lane.b32.xlu0 %v2254, 80
    %v3034 = vpop.permute.xlu0 %3033
    %3035 = vrot.lane.b32.xlu0 %v2257, 80
    %v3036 = vpop.permute.xlu0 %3035
    %3037 = vrot.lane.b32.xlu0 %v2262, 80
    %v3038 = vpop.permute.xlu0 %3037
    %3039 = vrot.lane.b32.xlu0 %v2265, 80
    %v3040 = vpop.permute.xlu0 %3039
    %3041 = vrot.lane.b32.xlu0 %v2270, 80
    %v3042 = vpop.permute.xlu0 %3041
    %3043 = vrot.lane.b32.xlu0 %v2273, 80
    %v3044 = vpop.permute.xlu0 %3043
    %3045 = vrot.lane.b32.xlu0 %v2278, 80
    %v3046 = vpop.permute.xlu0 %3045
    %3047 = vrot.lane.b32.xlu0 %v2281, 80
    %v3048 = vpop.permute.xlu0 %3047
    %3049 = vrot.lane.b32.xlu0 %v2286, 80
    %v3050 = vpop.permute.xlu0 %3049
    %3051 = vrot.lane.b32.xlu0 %v2289, 80
    %v3052 = vpop.permute.xlu0 %3051
    %3053 = vrot.lane.b32.xlu0 %v2294, 80
    %v3054 = vpop.permute.xlu0 %3053
    %3055 = vrot.lane.b32.xlu0 %v2297, 80
    %v3056 = vpop.permute.xlu0 %3055
    %3057 = vrot.lane.b32.xlu0 %v2302, 80
    %v3058 = vpop.permute.xlu0 %3057
    %3059 = vrot.lane.b32.xlu0 %v2305, 80
    %v3060 = vpop.permute.xlu0 %3059
    %3061 = vrot.lane.b32.xlu0 %v2310, 80
    %v3062 = vpop.permute.xlu0 %3061
    %3063 = vrot.lane.b32.xlu0 %v2313, 80
    %v3064 = vpop.permute.xlu0 %3063
    %3065 = vrot.lane.b32.xlu0 %v2318, 80
    %v3066 = vpop.permute.xlu0 %3065
    %3067 = vrot.lane.b32.xlu0 %v2321, 80
    %v3068 = vpop.permute.xlu0 %3067
    %3069 = vrot.lane.b32.xlu0 %v2326, 80
    %v3070 = vpop.permute.xlu0 %3069
    %3071 = vrot.lane.b32.xlu0 %v2329, 80
    %v3072 = vpop.permute.xlu0 %3071
    %3073 = vrot.lane.b32.xlu0 %v2334, 80
    %v3074 = vpop.permute.xlu0 %3073
    %3075 = vrot.lane.b32.xlu0 %v2337, 80
    %v3076 = vpop.permute.xlu0 %3075
    %3077 = vrot.lane.b32.xlu0 %v2342, 80
    %v3078 = vpop.permute.xlu0 %3077
    %3079 = vrot.lane.b32.xlu0 %v2345, 80
    %v3080 = vpop.permute.xlu0 %3079
    %3081 = vrot.lane.b32.xlu0 %v2350, 80
    %v3082 = vpop.permute.xlu0 %3081
    %3083 = vrot.lane.b32.xlu0 %v2353, 80
    %v3084 = vpop.permute.xlu0 %3083
    %3085 = vrot.lane.b32.xlu0 %v2358, 80
    %v3086 = vpop.permute.xlu0 %3085
    %3087 = vrot.lane.b32.xlu0 %v2361, 80
    %v3088 = vpop.permute.xlu0 %3087
    %3089 = vrot.lane.b32.xlu0 %v2366, 80
    %v3090 = vpop.permute.xlu0 %3089
    %3091 = vrot.lane.b32.xlu0 %v2369, 80
    %v3092 = vpop.permute.xlu0 %3091
    %3093 = vrot.lane.b32.xlu0 %v2374, 80
    %v3094 = vpop.permute.xlu0 %3093
    %3095 = vrot.lane.b32.xlu0 %v2377, 80
    %v3096 = vpop.permute.xlu0 %3095
    %3097 = vrot.lane.b32.xlu0 %v2382, 80
    %v3098 = vpop.permute.xlu0 %3097
    %3099 = vrot.lane.b32.xlu0 %v2385, 80
    %v3100 = vpop.permute.xlu0 %3099
    %3101 = vrot.lane.b32.xlu0 %v2390, 80
    %v3102 = vpop.permute.xlu0 %3101
    %3103 = vrot.lane.b32.xlu0 %v2393, 80
    %v3104 = vpop.permute.xlu0 %3103
    %3105 = vrot.lane.b32.xlu0 %v2398, 80
    %v3106 = vpop.permute.xlu0 %3105
    %3107 = vrot.lane.b32.xlu0 %v2401, 80
    %v3108 = vpop.permute.xlu0 %3107
    %v3173 = vadd.f32 %v2663, %v2982
    %v3174 = vadd.f32 %v2666, %v2984
    %v3175 = vadd.f32 %v2671, %v2986
    %v3176 = vadd.f32 %v2674, %v2988
    %v3177 = vadd.f32 %v2679, %v2990
    %v3178 = vadd.f32 %v2682, %v2992
    %v3179 = vadd.f32 %v2687, %v2994
    %v3180 = vadd.f32 %v2690, %v2996
    %v3181 = vadd.f32 %v2695, %v2998
    %v3182 = vadd.f32 %v2698, %v3000
    %v3183 = vadd.f32 %v2703, %v3002
    %v3184 = vadd.f32 %v2706, %v3004
    %v3185 = vadd.f32 %v2711, %v3006
    %v3186 = vadd.f32 %v2714, %v3008
    %v3187 = vadd.f32 %v2719, %v3010
    %v3188 = vadd.f32 %v2722, %v3012
    %v3189 = vadd.f32 %v2727, %v3014
    %v3190 = vadd.f32 %v2730, %v3016
    %v3191 = vadd.f32 %v2735, %v3018
    %v3192 = vadd.f32 %v2738, %v3020
    %v3193 = vadd.f32 %v2743, %v3022
    %v3194 = vadd.f32 %v2746, %v3024
    %v3195 = vadd.f32 %v2751, %v3026
    %v3196 = vadd.f32 %v2754, %v3028
    %v3197 = vadd.f32 %v2759, %v3030
    %v3198 = vadd.f32 %v2762, %v3032
    %v3199 = vadd.f32 %v2767, %v3034
    %v3200 = vadd.f32 %v2770, %v3036
    %v3201 = vadd.f32 %v2775, %v3038
    %v3202 = vadd.f32 %v2778, %v3040
    %v3203 = vadd.f32 %v2783, %v3042
    %v3204 = vadd.f32 %v2786, %v3044
    %v3205 = vadd.f32 %v2791, %v3046
    %v3206 = vadd.f32 %v2794, %v3048
    %v3207 = vadd.f32 %v2799, %v3050
    %v3208 = vadd.f32 %v2802, %v3052
    %v3209 = vadd.f32 %v2807, %v3054
    %v3210 = vadd.f32 %v2810, %v3056
    %v3211 = vadd.f32 %v2815, %v3058
    %v3212 = vadd.f32 %v2818, %v3060
    %v3213 = vadd.f32 %v2823, %v3062
    %v3214 = vadd.f32 %v2826, %v3064
    %v3215 = vadd.f32 %v2831, %v3066
    %v3216 = vadd.f32 %v2834, %v3068
    %v3217 = vadd.f32 %v2839, %v3070
    %v3218 = vadd.f32 %v2842, %v3072
    %v3219 = vadd.f32 %v2847, %v3074
    %v3220 = vadd.f32 %v2850, %v3076
    %v3221 = vadd.f32 %v2855, %v3078
    %v3222 = vadd.f32 %v2858, %v3080
    %v3223 = vadd.f32 %v2863, %v3082
    %v3224 = vadd.f32 %v2866, %v3084
    %v3225 = vadd.f32 %v2871, %v3086
    %v3226 = vadd.f32 %v2874, %v3088
    %v3227 = vadd.f32 %v2879, %v3090
    %v3228 = vadd.f32 %v2882, %v3092
    %v3229 = vadd.f32 %v2887, %v3094
    %v3230 = vadd.f32 %v2890, %v3096
    %v3231 = vadd.f32 %v2895, %v3098
    %v3232 = vadd.f32 %v2898, %v3100
    %v3233 = vadd.f32 %v2903, %v3102
    %v3234 = vadd.f32 %v2906, %v3104
    %v3235 = vadd.f32 %v2911, %v3106
    %v3236 = vadd.f32 %v2914, %v3108
    %v3237 = vmax.f32 %v3173, 0.0
    %v3238 = vmax.f32 %v3174, 0.0
    %v3239 = vmax.f32 %v3175, 0.0
    %v3240 = vmax.f32 %v3176, 0.0
    %v3241 = vmax.f32 %v3177, 0.0
    %v3242 = vmax.f32 %v3178, 0.0
    %v3243 = vmax.f32 %v3179, 0.0
    %v3244 = vmax.f32 %v3180, 0.0
    %v3245 = vmax.f32 %v3181, 0.0
    %v3246 = vmax.f32 %v3182, 0.0
    %v3247 = vmax.f32 %v3183, 0.0
    %v3248 = vmax.f32 %v3184, 0.0
    %v3249 = vmax.f32 %v3185, 0.0
    %v3250 = vmax.f32 %v3186, 0.0
    %v3251 = vmax.f32 %v3187, 0.0
    %v3252 = vmax.f32 %v3188, 0.0
    %v3253 = vmax.f32 %v3189, 0.0
    %v3254 = vmax.f32 %v3190, 0.0
    %v3255 = vmax.f32 %v3191, 0.0
    %v3256 = vmax.f32 %v3192, 0.0
    %v3257 = vmax.f32 %v3193, 0.0
    %v3258 = vmax.f32 %v3194, 0.0
    %v3259 = vmax.f32 %v3195, 0.0
    %v3260 = vmax.f32 %v3196, 0.0
    %v3261 = vmax.f32 %v3197, 0.0
    %v3262 = vmax.f32 %v3198, 0.0
    %v3263 = vmax.f32 %v3199, 0.0
    %v3264 = vmax.f32 %v3200, 0.0
    %v3265 = vmax.f32 %v3201, 0.0
    %v3266 = vmax.f32 %v3202, 0.0
    %v3267 = vmax.f32 %v3203, 0.0
    %v3268 = vmax.f32 %v3204, 0.0
    %v3269 = vmax.f32 %v3205, 0.0
    %v3270 = vmax.f32 %v3206, 0.0
    %v3271 = vmax.f32 %v3207, 0.0
    %v3272 = vmax.f32 %v3208, 0.0
    %v3273 = vmax.f32 %v3209, 0.0
    %v3274 = vmax.f32 %v3210, 0.0
    %v3275 = vmax.f32 %v3211, 0.0
    %v3276 = vmax.f32 %v3212, 0.0
    %v3277 = vmax.f32 %v3213, 0.0
    %v3278 = vmax.f32 %v3214, 0.0
    %v3279 = vmax.f32 %v3215, 0.0
    %v3280 = vmax.f32 %v3216, 0.0
    %v3281 = vmax.f32 %v3217, 0.0
    %v3282 = vmax.f32 %v3218, 0.0
    %v3283 = vmax.f32 %v3219, 0.0
    %v3284 = vmax.f32 %v3220, 0.0
    %v3285 = vmax.f32 %v3221, 0.0
    %v3286 = vmax.f32 %v3222, 0.0
    %v3287 = vmax.f32 %v3223, 0.0
    %v3288 = vmax.f32 %v3224, 0.0
    %v3289 = vmax.f32 %v3225, 0.0
    %v3290 = vmax.f32 %v3226, 0.0
    %v3291 = vmax.f32 %v3227, 0.0
    %v3292 = vmax.f32 %v3228, 0.0
    %v3293 = vmax.f32 %v3229, 0.0
    %v3294 = vmax.f32 %v3230, 0.0
    %v3295 = vmax.f32 %v3231, 0.0
    %v3296 = vmax.f32 %v3232, 0.0
    %v3297 = vmax.f32 %v3233, 0.0
    %v3298 = vmax.f32 %v3234, 0.0
    %v3299 = vmax.f32 %v3235, 0.0
    %v3300 = vmax.f32 %v3236, 0.0
    %v3301 = vpack.c.bf16 %v3238, %v3237
    %v3302 = vpack.c.bf16 %v3240, %v3239
    %v3303 = vpack.c.bf16 %v3242, %v3241
    %v3304 = vpack.c.bf16 %v3244, %v3243
    %v3305 = vpack.c.bf16 %v3246, %v3245
    %v3306 = vpack.c.bf16 %v3248, %v3247
    %v3307 = vpack.c.bf16 %v3250, %v3249
    %v3308 = vpack.c.bf16 %v3252, %v3251
    %v3309 = vpack.c.bf16 %v3254, %v3253
    %v3310 = vpack.c.bf16 %v3256, %v3255
    %v3311 = vpack.c.bf16 %v3258, %v3257
    %v3312 = vpack.c.bf16 %v3260, %v3259
    %v3313 = vpack.c.bf16 %v3262, %v3261
    %v3314 = vpack.c.bf16 %v3264, %v3263
    %v3315 = vpack.c.bf16 %v3266, %v3265
    %v3316 = vpack.c.bf16 %v3268, %v3267
    %v3317 = vpack.c.bf16 %v3270, %v3269
    %v3318 = vpack.c.bf16 %v3272, %v3271
    %v3319 = vpack.c.bf16 %v3274, %v3273
    %v3320 = vpack.c.bf16 %v3276, %v3275
    %v3321 = vpack.c.bf16 %v3278, %v3277
    %v3322 = vpack.c.bf16 %v3280, %v3279
    %v3323 = vpack.c.bf16 %v3282, %v3281
    %v3324 = vpack.c.bf16 %v3284, %v3283
    %v3325 = vpack.c.bf16 %v3286, %v3285
    %v3326 = vpack.c.bf16 %v3288, %v3287
    %v3327 = vpack.c.bf16 %v3290, %v3289
    %v3328 = vpack.c.bf16 %v3292, %v3291
    %v3329 = vpack.c.bf16 %v3294, %v3293
    %v3330 = vpack.c.bf16 %v3296, %v3295
    %v3331 = vpack.c.bf16 %v3298, %v3297
    %v3332 = vpack.c.bf16 %v3300, %v3299
    %v3333 = vld [vmem:[%s13] sm:$0xf]
    %v3334 = vld [vmem:[%s13 + $0x4] sm:$0xf]
    %v3335 = vld [vmem:[%s13 + $0x8] sm:$0xf]
    %v3336 = vld [vmem:[%s13 + $0xc] sm:$0xf]
    %v3337 = vld [vmem:[%s13 + $0x10] sm:$0xf]
    %v3338 = vld [vmem:[%s13 + $0x14] sm:$0xf]
    %v3339 = vld [vmem:[%s14] sm:$0x1]
    %v3341 = vlaneseq
    %v3342 = vshrl.u32 %v3341, 7
    %v3343 = vsub.s32 0, %v3342
    %v3344 = vrot.slane %v3339, %v3343
    %v3352 = vunpack.c.l.b16 %v3333
    %v3353 = vunpack.c.l.b16 %v3334
    %v3354 = vunpack.c.l.b16 %v3335
    %v3355 = vunpack.c.l.b16 %v3336
    %v3356 = vunpack.c.l.b16 %v3337
    %v3357 = vunpack.c.l.b16 %v3338
    %v3358 = vpack.c.b16 %v3353, %v3352
    %v3359 = vpack.c.b16 %v3355, %v3354
    %v3360 = vpack.c.b16 %v3357, %v3356
    %v3365 = vsel %vm2531, %v3301, 0
    %v3368 = vsel %vm2531, %v3302, 0
    %v3371 = vsel %vm2531, %v3303, 0
    %v3374 = vsel %vm2531, %v3304, 0
    %v3377 = vsel %vm2531, %v3305, 0
    %v3380 = vsel %vm2531, %v3306, 0
    %v3383 = vsel %vm2531, %v3307, 0
    %v3386 = vsel %vm2531, %v3308, 0
    %v3389 = vsel %vm2531, %v3309, 0
    %v3392 = vsel %vm2531, %v3310, 0
    %v3395 = vsel %vm2531, %v3311, 0
    %v3398 = vsel %vm2531, %v3312, 0
    %v3401 = vsel %vm2531, %v3313, 0
    %v3404 = vsel %vm2531, %v3314, 0
    %v3407 = vsel %vm2531, %v3315, 0
    %v3410 = vsel %vm2531, %v3316, 0
    %v3413 = vsel %vm2531, %v3317, 0
    %v3416 = vsel %vm2531, %v3318, 0
    %v3419 = vsel %vm2531, %v3319, 0
    %v3422 = vsel %vm2531, %v3320, 0
    %v3425 = vsel %vm2531, %v3321, 0
    %v3428 = vsel %vm2531, %v3322, 0
    %v3431 = vsel %vm2531, %v3323, 0
    %v3434 = vsel %vm2531, %v3324, 0
    %v3437 = vsel %vm2531, %v3325, 0
    %v3440 = vsel %vm2531, %v3326, 0
    %v3443 = vsel %vm2531, %v3327, 0
    %v3446 = vsel %vm2531, %v3328, 0
    %v3449 = vsel %vm2531, %v3329, 0
    %v3452 = vsel %vm2531, %v3330, 0
    %v3455 = vsel %vm2531, %v3331, 0
    %v3458 = vsel %vm2531, %v3332, 0
    %3460 = vmatprep.subr.bf16.mxu0 0
    %3461 = vmatpush1.bf16.msra.mxu0 0
    %3462 = vmatprep.subr.bf16.mxu0 0
    %3463 = vmatpush1.bf16.msra.mxu0 0
    %3464 = vmatprep.subr.bf16.mxu0 0
    %3465 = vmatpush1.bf16.msra.mxu0 0
    %3466 = vmatprep.subr.bf16.mxu0 0
    %3467 = vmatpush1.bf16.msra.mxu0 0
    %3468 = vmatprep.subr.bf16.mxu0 0
    %3469 = vmatpush1.bf16.msra.mxu0 0
    %3470 = vmatprep.subr.bf16.mxu0 0
    %3471 = vmatpush1.bf16.msra.mxu0 %v3360
    %3472 = vmatprep.subr.bf16.mxu0 0
    %3473 = vmatpush1.bf16.msra.mxu0 %v3359
    %3474 = vmatprep.subr.bf16.mxu0 0
    %3475 = vmatpush1.bf16.msra.mxu0 %v3358
    %3476 = vmatprep.subr.bf16.mxu0 0
    %3477 = vmatpush2.bf16.msra.mxu0 0
    %3478 = vmatprep.subr.bf16.mxu0 0
    %3479 = vmatpush2.bf16.msra.mxu0 0
    %3480 = vmatprep.subr.bf16.mxu0 0
    %3481 = vmatpush2.bf16.msra.mxu0 0
    %3482 = vmatprep.subr.bf16.mxu0 0
    %3483 = vmatpush2.bf16.msra.mxu0 0
    %3484 = vmatprep.subr.bf16.mxu0 0
    %3485 = vmatpush2.bf16.msra.mxu0 0
    %3486 = vmatprep.subr.bf16.mxu0 0
    %3487 = vmatpush2.bf16.msra.mxu0 0
    %3488 = vmatprep.subr.bf16.mxu0 0
    %3489 = vmatpush2.bf16.msra.mxu0 0
    %3490 = vmatprep.subr.bf16.mxu0 0
    %3491 = vmatpush2.bf16.msra.mxu0 0
    %3492 = vmatprep.mubr.bf16.mxu0 0
    %3493 = vmatmul.mubr.bf16.gmra.mxu0 %v3365
    %v3494 = vpop.f32.mrf.mxu0
    %v3495 = vadd.f32 %v3344, %v3494
    %v3496 = vpop.f32.mrf.mxu0
    %v3497 = vpop.f32.mrf.mxu0
    %v3498 = vadd.f32 %v3344, %v3497
    %v3499 = vpop.f32.mrf.mxu0
    %3500 = vmatprep.mubr.bf16.mxu0 0
    %3501 = vmatmul.mubr.bf16.gmra.mxu0 %v3368
    %v3502 = vpop.f32.mrf.mxu0
    %v3503 = vadd.f32 %v3344, %v3502
    %v3504 = vpop.f32.mrf.mxu0
    %v3505 = vpop.f32.mrf.mxu0
    %v3506 = vadd.f32 %v3344, %v3505
    %v3507 = vpop.f32.mrf.mxu0
    %3508 = vmatprep.mubr.bf16.mxu0 0
    %3509 = vmatmul.mubr.bf16.gmra.mxu0 %v3371
    %v3510 = vpop.f32.mrf.mxu0
    %v3511 = vadd.f32 %v3344, %v3510
    %v3512 = vpop.f32.mrf.mxu0
    %v3513 = vpop.f32.mrf.mxu0
    %v3514 = vadd.f32 %v3344, %v3513
    %v3515 = vpop.f32.mrf.mxu0
    %3516 = vmatprep.mubr.bf16.mxu0 0
    %3517 = vmatmul.mubr.bf16.gmra.mxu0 %v3374
    %v3518 = vpop.f32.mrf.mxu0
    %v3519 = vadd.f32 %v3344, %v3518
    %v3520 = vpop.f32.mrf.mxu0
    %v3521 = vpop.f32.mrf.mxu0
    %v3522 = vadd.f32 %v3344, %v3521
    %v3523 = vpop.f32.mrf.mxu0
    %3524 = vmatprep.mubr.bf16.mxu0 0
    %3525 = vmatmul.mubr.bf16.gmra.mxu0 %v3377
    %v3526 = vpop.f32.mrf.mxu0
    %v3527 = vadd.f32 %v3344, %v3526
    %v3528 = vpop.f32.mrf.mxu0
    %v3529 = vpop.f32.mrf.mxu0
    %v3530 = vadd.f32 %v3344, %v3529
    %v3531 = vpop.f32.mrf.mxu0
    %3532 = vmatprep.mubr.bf16.mxu0 0
    %3533 = vmatmul.mubr.bf16.gmra.mxu0 %v3380
    %v3534 = vpop.f32.mrf.mxu0
    %v3535 = vadd.f32 %v3344, %v3534
    %v3536 = vpop.f32.mrf.mxu0
    %v3537 = vpop.f32.mrf.mxu0
    %v3538 = vadd.f32 %v3344, %v3537
    %v3539 = vpop.f32.mrf.mxu0
    %3540 = vmatprep.mubr.bf16.mxu0 0
    %3541 = vmatmul.mubr.bf16.gmra.mxu0 %v3383
    %v3542 = vpop.f32.mrf.mxu0
    %v3543 = vadd.f32 %v3344, %v3542
    %v3544 = vpop.f32.mrf.mxu0
    %v3545 = vpop.f32.mrf.mxu0
    %v3546 = vadd.f32 %v3344, %v3545
    %v3547 = vpop.f32.mrf.mxu0
    %3548 = vmatprep.mubr.bf16.mxu0 0
    %3549 = vmatmul.mubr.bf16.gmra.mxu0 %v3386
    %v3550 = vpop.f32.mrf.mxu0
    %v3551 = vadd.f32 %v3344, %v3550
    %v3552 = vpop.f32.mrf.mxu0
    %v3553 = vpop.f32.mrf.mxu0
    %v3554 = vadd.f32 %v3344, %v3553
    %v3555 = vpop.f32.mrf.mxu0
    %3556 = vmatprep.mubr.bf16.mxu0 0
    %3557 = vmatmul.mubr.bf16.gmra.mxu0 %v3389
    %v3558 = vpop.f32.mrf.mxu0
    %v3559 = vadd.f32 %v3344, %v3558
    %v3560 = vpop.f32.mrf.mxu0
    %v3561 = vpop.f32.mrf.mxu0
    %v3562 = vadd.f32 %v3344, %v3561
    %v3563 = vpop.f32.mrf.mxu0
    %3564 = vmatprep.mubr.bf16.mxu0 0
    %3565 = vmatmul.mubr.bf16.gmra.mxu0 %v3392
    %v3566 = vpop.f32.mrf.mxu0
    %v3567 = vadd.f32 %v3344, %v3566
    %v3568 = vpop.f32.mrf.mxu0
    %v3569 = vpop.f32.mrf.mxu0
    %v3570 = vadd.f32 %v3344, %v3569
    %v3571 = vpop.f32.mrf.mxu0
    %3572 = vmatprep.mubr.bf16.mxu0 0
    %3573 = vmatmul.mubr.bf16.gmra.mxu0 %v3395
    %v3574 = vpop.f32.mrf.mxu0
    %v3575 = vadd.f32 %v3344, %v3574
    %v3576 = vpop.f32.mrf.mxu0
    %v3577 = vpop.f32.mrf.mxu0
    %v3578 = vadd.f32 %v3344, %v3577
    %v3579 = vpop.f32.mrf.mxu0
    %3580 = vmatprep.mubr.bf16.mxu0 0
    %3581 = vmatmul.mubr.bf16.gmra.mxu0 %v3398
    %v3582 = vpop.f32.mrf.mxu0
    %v3583 = vadd.f32 %v3344, %v3582
    %v3584 = vpop.f32.mrf.mxu0
    %v3585 = vpop.f32.mrf.mxu0
    %v3586 = vadd.f32 %v3344, %v3585
    %v3587 = vpop.f32.mrf.mxu0
    %3588 = vmatprep.mubr.bf16.mxu0 0
    %3589 = vmatmul.mubr.bf16.gmra.mxu0 %v3401
    %v3590 = vpop.f32.mrf.mxu0
    %v3591 = vadd.f32 %v3344, %v3590
    %v3592 = vpop.f32.mrf.mxu0
    %v3593 = vpop.f32.mrf.mxu0
    %v3594 = vadd.f32 %v3344, %v3593
    %v3595 = vpop.f32.mrf.mxu0
    %3596 = vmatprep.mubr.bf16.mxu0 0
    %3597 = vmatmul.mubr.bf16.gmra.mxu0 %v3404
    %v3598 = vpop.f32.mrf.mxu0
    %v3599 = vadd.f32 %v3344, %v3598
    %v3600 = vpop.f32.mrf.mxu0
    %v3601 = vpop.f32.mrf.mxu0
    %v3602 = vadd.f32 %v3344, %v3601
    %v3603 = vpop.f32.mrf.mxu0
    %3604 = vmatprep.mubr.bf16.mxu0 0
    %3605 = vmatmul.mubr.bf16.gmra.mxu0 %v3407
    %v3606 = vpop.f32.mrf.mxu0
    %v3607 = vadd.f32 %v3344, %v3606
    %v3608 = vpop.f32.mrf.mxu0
    %v3609 = vpop.f32.mrf.mxu0
    %v3610 = vadd.f32 %v3344, %v3609
    %v3611 = vpop.f32.mrf.mxu0
    %3612 = vmatprep.mubr.bf16.mxu0 0
    %3613 = vmatmul.mubr.bf16.gmra.mxu0 %v3410
    %v3614 = vpop.f32.mrf.mxu0
    %v3615 = vadd.f32 %v3344, %v3614
    %v3616 = vpop.f32.mrf.mxu0
    %v3617 = vpop.f32.mrf.mxu0
    %v3618 = vadd.f32 %v3344, %v3617
    %v3619 = vpop.f32.mrf.mxu0
    %3620 = vmatprep.mubr.bf16.mxu0 0
    %3621 = vmatmul.mubr.bf16.gmra.mxu0 %v3413
    %v3622 = vpop.f32.mrf.mxu0
    %v3623 = vadd.f32 %v3344, %v3622
    %v3624 = vpop.f32.mrf.mxu0
    %v3625 = vpop.f32.mrf.mxu0
    %v3626 = vadd.f32 %v3344, %v3625
    %v3627 = vpop.f32.mrf.mxu0
    %3628 = vmatprep.mubr.bf16.mxu0 0
    %3629 = vmatmul.mubr.bf16.gmra.mxu0 %v3416
    %v3630 = vpop.f32.mrf.mxu0
    %v3631 = vadd.f32 %v3344, %v3630
    %v3632 = vpop.f32.mrf.mxu0
    %v3633 = vpop.f32.mrf.mxu0
    %v3634 = vadd.f32 %v3344, %v3633
    %v3635 = vpop.f32.mrf.mxu0
    %3636 = vmatprep.mubr.bf16.mxu0 0
    %3637 = vmatmul.mubr.bf16.gmra.mxu0 %v3419
    %v3638 = vpop.f32.mrf.mxu0
    %v3639 = vadd.f32 %v3344, %v3638
    %v3640 = vpop.f32.mrf.mxu0
    %v3641 = vpop.f32.mrf.mxu0
    %v3642 = vadd.f32 %v3344, %v3641
    %v3643 = vpop.f32.mrf.mxu0
    %3644 = vmatprep.mubr.bf16.mxu0 0
    %3645 = vmatmul.mubr.bf16.gmra.mxu0 %v3422
    %v3646 = vpop.f32.mrf.mxu0
    %v3647 = vadd.f32 %v3344, %v3646
    %v3648 = vpop.f32.mrf.mxu0
    %v3649 = vpop.f32.mrf.mxu0
    %v3650 = vadd.f32 %v3344, %v3649
    %v3651 = vpop.f32.mrf.mxu0
    %3652 = vmatprep.mubr.bf16.mxu0 0
    %3653 = vmatmul.mubr.bf16.gmra.mxu0 %v3425
    %v3654 = vpop.f32.mrf.mxu0
    %v3655 = vadd.f32 %v3344, %v3654
    %v3656 = vpop.f32.mrf.mxu0
    %v3657 = vpop.f32.mrf.mxu0
    %v3658 = vadd.f32 %v3344, %v3657
    %v3659 = vpop.f32.mrf.mxu0
    %3660 = vmatprep.mubr.bf16.mxu0 0
    %3661 = vmatmul.mubr.bf16.gmra.mxu0 %v3428
    %v3662 = vpop.f32.mrf.mxu0
    %v3663 = vadd.f32 %v3344, %v3662
    %v3664 = vpop.f32.mrf.mxu0
    %v3665 = vpop.f32.mrf.mxu0
    %v3666 = vadd.f32 %v3344, %v3665
    %v3667 = vpop.f32.mrf.mxu0
    %3668 = vmatprep.mubr.bf16.mxu0 0
    %3669 = vmatmul.mubr.bf16.gmra.mxu0 %v3431
    %v3670 = vpop.f32.mrf.mxu0
    %v3671 = vadd.f32 %v3344, %v3670
    %v3672 = vpop.f32.mrf.mxu0
    %v3673 = vpop.f32.mrf.mxu0
    %v3674 = vadd.f32 %v3344, %v3673
    %v3675 = vpop.f32.mrf.mxu0
    %3676 = vmatprep.mubr.bf16.mxu0 0
    %3677 = vmatmul.mubr.bf16.gmra.mxu0 %v3434
    %v3678 = vpop.f32.mrf.mxu0
    %v3679 = vadd.f32 %v3344, %v3678
    %v3680 = vpop.f32.mrf.mxu0
    %v3681 = vpop.f32.mrf.mxu0
    %v3682 = vadd.f32 %v3344, %v3681
    %v3683 = vpop.f32.mrf.mxu0
    %3684 = vmatprep.mubr.bf16.mxu0 0
    %3685 = vmatmul.mubr.bf16.gmra.mxu0 %v3437
    %v3686 = vpop.f32.mrf.mxu0
    %v3687 = vadd.f32 %v3344, %v3686
    %v3688 = vpop.f32.mrf.mxu0
    %v3689 = vpop.f32.mrf.mxu0
    %v3690 = vadd.f32 %v3344, %v3689
    %v3691 = vpop.f32.mrf.mxu0
    %3692 = vmatprep.mubr.bf16.mxu0 0
    %3693 = vmatmul.mubr.bf16.gmra.mxu0 %v3440
    %v3694 = vpop.f32.mrf.mxu0
    %v3695 = vadd.f32 %v3344, %v3694
    %v3696 = vpop.f32.mrf.mxu0
    %v3697 = vpop.f32.mrf.mxu0
    %v3698 = vadd.f32 %v3344, %v3697
    %v3699 = vpop.f32.mrf.mxu0
    %3700 = vmatprep.mubr.bf16.mxu0 0
    %3701 = vmatmul.mubr.bf16.gmra.mxu0 %v3443
    %v3702 = vpop.f32.mrf.mxu0
    %v3703 = vadd.f32 %v3344, %v3702
    %v3704 = vpop.f32.mrf.mxu0
    %v3705 = vpop.f32.mrf.mxu0
    %v3706 = vadd.f32 %v3344, %v3705
    %v3707 = vpop.f32.mrf.mxu0
    %3708 = vmatprep.mubr.bf16.mxu0 0
    %3709 = vmatmul.mubr.bf16.gmra.mxu0 %v3446
    %v3710 = vpop.f32.mrf.mxu0
    %v3711 = vadd.f32 %v3344, %v3710
    %v3712 = vpop.f32.mrf.mxu0
    %v3713 = vpop.f32.mrf.mxu0
    %v3714 = vadd.f32 %v3344, %v3713
    %v3715 = vpop.f32.mrf.mxu0
    %3716 = vmatprep.mubr.bf16.mxu0 0
    %3717 = vmatmul.mubr.bf16.gmra.mxu0 %v3449
    %v3718 = vpop.f32.mrf.mxu0
    %v3719 = vadd.f32 %v3344, %v3718
    %v3720 = vpop.f32.mrf.mxu0
    %v3721 = vpop.f32.mrf.mxu0
    %v3722 = vadd.f32 %v3344, %v3721
    %v3723 = vpop.f32.mrf.mxu0
    %3724 = vmatprep.mubr.bf16.mxu0 0
    %3725 = vmatmul.mubr.bf16.gmra.mxu0 %v3452
    %v3726 = vpop.f32.mrf.mxu0
    %v3727 = vadd.f32 %v3344, %v3726
    %v3728 = vpop.f32.mrf.mxu0
    %v3729 = vpop.f32.mrf.mxu0
    %v3730 = vadd.f32 %v3344, %v3729
    %v3731 = vpop.f32.mrf.mxu0
    %3732 = vmatprep.mubr.bf16.mxu0 0
    %3733 = vmatmul.mubr.bf16.gmra.mxu0 %v3455
    %v3734 = vpop.f32.mrf.mxu0
    %v3735 = vadd.f32 %v3344, %v3734
    %v3736 = vpop.f32.mrf.mxu0
    %v3737 = vpop.f32.mrf.mxu0
    %v3738 = vadd.f32 %v3344, %v3737
    %v3739 = vpop.f32.mrf.mxu0
    %3740 = vmatprep.mubr.bf16.mxu0 0
    %3741 = vmatmul.mubr.bf16.gmra.mxu0 %v3458
    %v3742 = vpop.f32.mrf.mxu0
    %v3743 = vadd.f32 %v3344, %v3742
    %v3744 = vpop.f32.mrf.mxu0
    %v3745 = vpop.f32.mrf.mxu0
    %v3746 = vadd.f32 %v3344, %v3745
    %v3747 = vpop.f32.mrf.mxu0
    %3748 = vdwg.mxu0
    %3749 = vst [vmem:[#allocation2] sm:$0xff] %v3495
    %3750 = vst [vmem:[#allocation2 + $0x8] sm:$0xff] %v3498
    %3751 = vst [vmem:[#allocation2 + $0x10] sm:$0xff] %v3503
    %3752 = vst [vmem:[#allocation2 + $0x18] sm:$0xff] %v3506
    %3753 = vst [vmem:[#allocation2 + $0x20] sm:$0xff] %v3511
    %3754 = vst [vmem:[#allocation2 + $0x28] sm:$0xff] %v3514
    %3755 = vst [vmem:[#allocation2 + $0x30] sm:$0xff] %v3519
    %3756 = vst [vmem:[#allocation2 + $0x38] sm:$0xff] %v3522
    %3757 = vst [vmem:[#allocation2 + $0x40] sm:$0xff] %v3527
    %3758 = vst [vmem:[#allocation2 + $0x48] sm:$0xff] %v3530
    %3759 = vst [vmem:[#allocation2 + $0x50] sm:$0xff] %v3535
    %3760 = vst [vmem:[#allocation2 + $0x58] sm:$0xff] %v3538
    %3761 = vst [vmem:[#allocation2 + $0x60] sm:$0xff] %v3543
    %3762 = vst [vmem:[#allocation2 + $0x68] sm:$0xff] %v3546
    %3763 = vst [vmem:[#allocation2 + $0x70] sm:$0xff] %v3551
    %3764 = vst [vmem:[#allocation2 + $0x78] sm:$0xff] %v3554
    %3765 = vst [vmem:[#allocation2 + $0x80] sm:$0xff] %v3559
    %3766 = vst [vmem:[#allocation2 + $0x88] sm:$0xff] %v3562
    %3767 = vst [vmem:[#allocation2 + $0x90] sm:$0xff] %v3567
    %3768 = vst [vmem:[#allocation2 + $0x98] sm:$0xff] %v3570
    %3769 = vst [vmem:[#allocation2 + $0xa0] sm:$0xff] %v3575
    %3770 = vst [vmem:[#allocation2 + $0xa8] sm:$0xff] %v3578
    %3771 = vst [vmem:[#allocation2 + $0xb0] sm:$0xff] %v3583
    %3772 = vst [vmem:[#allocation2 + $0xb8] sm:$0xff] %v3586
    %3773 = vst [vmem:[#allocation2 + $0xc0] sm:$0xff] %v3591
    %3774 = vst [vmem:[#allocation2 + $0xc8] sm:$0xff] %v3594
    %3775 = vst [vmem:[#allocation2 + $0xd0] sm:$0xff] %v3599
    %3776 = vst [vmem:[#allocation2 + $0xd8] sm:$0xff] %v3602
    %3777 = vst [vmem:[#allocation2 + $0xe0] sm:$0xff] %v3607
    %3778 = vst [vmem:[#allocation2 + $0xe8] sm:$0xff] %v3610
    %3779 = vst [vmem:[#allocation2 + $0xf0] sm:$0xff] %v3615
    %3780 = vst [vmem:[#allocation2 + $0xf8] sm:$0xff] %v3618
    %3781 = vst [vmem:[#allocation2 + $0x100] sm:$0xff] %v3623
    %3782 = vst [vmem:[#allocation2 + $0x108] sm:$0xff] %v3626
    %3783 = vst [vmem:[#allocation2 + $0x110] sm:$0xff] %v3631
    %3784 = vst [vmem:[#allocation2 + $0x118] sm:$0xff] %v3634
    %3785 = vst [vmem:[#allocation2 + $0x120] sm:$0xff] %v3639
    %3786 = vst [vmem:[#allocation2 + $0x128] sm:$0xff] %v3642
    %3787 = vst [vmem:[#allocation2 + $0x130] sm:$0xff] %v3647
    %3788 = vst [vmem:[#allocation2 + $0x138] sm:$0xff] %v3650
    %3789 = vst [vmem:[#allocation2 + $0x140] sm:$0xff] %v3655
    %3790 = vst [vmem:[#allocation2 + $0x148] sm:$0xff] %v3658
    %3791 = vst [vmem:[#allocation2 + $0x150] sm:$0xff] %v3663
    %3792 = vst [vmem:[#allocation2 + $0x158] sm:$0xff] %v3666
    %3793 = vst [vmem:[#allocation2 + $0x160] sm:$0xff] %v3671
    %3794 = vst [vmem:[#allocation2 + $0x168] sm:$0xff] %v3674
    %3795 = vst [vmem:[#allocation2 + $0x170] sm:$0xff] %v3679
    %3796 = vst [vmem:[#allocation2 + $0x178] sm:$0xff] %v3682
    %3797 = vst [vmem:[#allocation2 + $0x180] sm:$0xff] %v3687
    %3798 = vst [vmem:[#allocation2 + $0x188] sm:$0xff] %v3690
    %3799 = vst [vmem:[#allocation2 + $0x190] sm:$0xff] %v3695
    %3800 = vst [vmem:[#allocation2 + $0x198] sm:$0xff] %v3698
    %3801 = vst [vmem:[#allocation2 + $0x1a0] sm:$0xff] %v3703
    %3802 = vst [vmem:[#allocation2 + $0x1a8] sm:$0xff] %v3706
    %3803 = vst [vmem:[#allocation2 + $0x1b0] sm:$0xff] %v3711
    %3804 = vst [vmem:[#allocation2 + $0x1b8] sm:$0xff] %v3714
    %3805 = vst [vmem:[#allocation2 + $0x1c0] sm:$0xff] %v3719
    %3806 = vst [vmem:[#allocation2 + $0x1c8] sm:$0xff] %v3722
    %3807 = vst [vmem:[#allocation2 + $0x1d0] sm:$0xff] %v3727
    %3808 = vst [vmem:[#allocation2 + $0x1d8] sm:$0xff] %v3730
    %3809 = vst [vmem:[#allocation2 + $0x1e0] sm:$0xff] %v3735
    %3810 = vst [vmem:[#allocation2 + $0x1e8] sm:$0xff] %v3738
    %3811 = vst [vmem:[#allocation2 + $0x1f0] sm:$0xff] %v3743
    %3812 = vst [vmem:[#allocation2 + $0x1f8] sm:$0xff] %v3746
    // Predicated region
    $region62: #{tpu_custom_call.1} parent=1 // pred_check
      _
    $region63: #{tpu_custom_call.1} parent=1 // pred_check_branch
      %3814 = sbr.rel (0) target = $region65
    $region64: #{tpu_custom_call.1} parent=1 // pred_region
      %s3816 = ssub.s32 8192, 8192
      %3817 = vsyncadd [#allocation3], %s3816
      %s3818 = sshll.u32 [#allocation2], 4
      %s3819 = int_to_ptr.vmem [resolvable:$true] %s3818
      %3824 = dma.vmem_to_hbm [thread:$0]  %s3819, 8192, %s15, [#allocation3], 128, 128, 8
    $region65: #{tpu_custom_call.1} parent=1 // pred_fallthru
      _
    // Predicated region
    $region66: #{tpu_custom_call.1} parent=1 // pred_check
      _
    $region67: #{tpu_custom_call.1} parent=1 // pred_check_branch
      %3826 = sbr.rel (0) target = $region69
    $region68: #{tpu_custom_call.1} parent=1 // pred_region
      %3827 = dma.done [#allocation3], 8192
    $region69: #{tpu_custom_call.1} parent=1 // pred_fallthru
      _
    %3828 = vsyncpa [#allocation3], 1

</llo_original>
